<compile_context>
chip_gen: v7x
topology: tpu7x:2x2x1
jax: 0.10.0
libtpu: 0.0.40
codegen_flags: <defaults>
</compile_context>

<pallas_src>
import math

import jax
import jax.numpy as jnp
from jax import lax
from jax.experimental import pallas as pl
from jax.experimental.pallas import tpu as pltpu

F_DIM = 32            # feature width (in_ft == out_ft; Block.forward broadcasting requires it)
B_PER_PROBLEM = 8     # batch of one original forward call
N_PROBLEMS = 64       # stacked independent problems  -> 512 rows -> grid of 2 x 256-row steps
TIMESTEPS = 50
_INV_SQRT2 = 1.0 / math.sqrt(2.0)


def _pick_row_block(rows: int) -> int:
    """>=256 rows per step fills the MXU M dimension on v6e/v7x (2 passes of v5e's 128x128)."""
    for tm in (256, 128, 64, 32, 16, 8):
        if rows % tm == 0:
            return tm
    return rows


def _diffusion_kernel(x_ref, noise_ref, tf_ref, sac_ref, somac_ref,
                      wss_ref, bss_ref, w12_ref, cvec_ref, loss_ref):
    F = x_ref.shape[1]

    x = x_ref[...]                       # [TM, F]
    noise = noise_ref[...]               # [TM, F]
    t_f = tf_ref[...]                    # [TM, 1]  t as float
    sac = sac_ref[...]                   # [TM, 1]  sqrt(alphas_cumprod)[t]
    somac = somac_ref[...]               # [TM, 1]  sqrt(1 - alphas_cumprod)[t]

    # constants packed once at init: rows = [b1 | b2 | g (sin-emb freqs) | phase]
    b1 = cvec_ref[0:1, :]
    b2 = cvec_ref[1:2, :]
    g = cvec_ref[2:3, :]
    phase = cvec_ref[3:4, :]

    # ---- q_sample: per-row scalars broadcast over the feature axis ----
    x_noisy = sac * x + somac * noise                                      # [TM, F]

    # ---- SinusoidalPosEmb folded into a single sin with per-column phase ----
    pos = jnp.sin(t_f * g + phase)                                         # [TM, F]

    # ---- time_mlp: Linear -> GELU(exact erf) -> Linear (W1/W2 sublane-stacked, 8-aligned) ----
    w1 = w12_ref[0:F, :]
    w2 = w12_ref[F:2 * F, :]
    h1 = jnp.dot(pos, w1, preferred_element_type=jnp.float32) + b1
    h1 = 0.5 * h1 * (1.0 + lax.erf(h1 * _INV_SQRT2))
    t_feat = jnp.dot(h1, w2, preferred_element_type=jnp.float32) + b2

    # ---- Block.time = SiLU -> Linear(F, 2F); BOTH Blocks fused into ONE [F,4F] GEMM ----
    ts = t_feat * jax.nn.sigmoid(t_feat)                                   # SiLU
    proj = jnp.dot(ts, wss_ref[...], preferred_element_type=jnp.float32) + bss_ref[...]  # [TM,128]

    # chunk(2, dim=1): scale first, shift second; "+1" already folded into scale biases.
    scale1_p1 = proj[:, 0 * F:1 * F]
    shift1    = proj[:, 1 * F:2 * F]
    scale2_p1 = proj[:, 2 * F:3 * F]
    shift2    = proj[:, 3 * F:4 * F]

    h = scale1_p1 * x_noisy + shift1      # Block 1: (scale + 1) * h + shift
    h = scale2_p1 * h + shift2            # Block 2

    # ---- F.l1_loss partial mean for this row block, broadcast to a lane-dense (8,128) tile ----
    block_mean = jnp.mean(jnp.abs(noise - h))
    loss_ref[...] = jnp.full(loss_ref.shape, block_mean, dtype=loss_ref.dtype)


# ----------------------------------------------------------------------------- parameters
def init_raw_params(key, f_dim):
    """Deterministic synthetic weights. Block.lin is unused by Block.forward => not created."""
    ks = jax.random.split(key, 4)
    s = 1.0 / math.sqrt(f_dim)

    def lin(k, din, dout):
        kw, kb = jax.random.split(k)
        w = jax.random.uniform(kw, (din, dout), jnp.float32, -s, s)   # pre-transposed [in, out]
        b = jax.random.uniform(kb, (1, dout), jnp.float32, -s, s)
        return w, b

    w1, b1 = lin(ks[0], f_dim, f_dim)            # time_mlp Linear 1
    w2, b2 = lin(ks[1], f_dim, f_dim)            # time_mlp Linear 2
    wt1, bt1 = lin(ks[2], f_dim, 2 * f_dim)      # Block 1 .time Linear(F, 2F): [scale | shift]
    wt2, bt2 = lin(ks[3], f_dim, 2 * f_dim)      # Block 2 .time Linear(F, 2F)
    return dict(w1=w1, b1=b1, w2=w2, b2=b2, wt1=wt1, bt1=bt1, wt2=wt2, bt2=bt2)


def _sin_emb_consts(f_dim):
    half = f_dim // 2
    emb_c = math.log(10000.0) / (half - 1)
    freqs = jnp.exp(jnp.arange(half, dtype=jnp.float32) * -emb_c)
    g = jnp.concatenate([freqs, freqs]).reshape(1, f_dim)
    phase = jnp.concatenate([jnp.zeros((half,), jnp.float32),
                             jnp.full((half,), jnp.pi / 2.0, jnp.float32)]).reshape(1, f_dim)
    return g, phase


def pack_params(raw, f_dim):
    """Pack weights once (outside the jitted forward).

    w_ss [F, 4F]=[32,128]: fused [scale1|shift1|scale2|shift2] Block weights (one lane tile).
    b_ss [1, 4F]         : matching biases, "+1" of "(scale+1)" folded into the scale columns.
    w12  [2F, F]=[64,32] : time_mlp W1 (rows 0:F) / W2 (rows F:2F) -- sublane-aligned slices.
    cvec [4, F]          : rows = [b1 | b2 | sin-emb freqs g | sin-emb phase].
    """
    w_ss = jnp.concatenate([raw["wt1"], raw["wt2"]], axis=1).astype(jnp.float32)
    plus1 = jnp.concatenate([jnp.ones((1, f_dim), jnp.float32),
                             jnp.zeros((1, f_dim), jnp.float32)] * 2, axis=1)
    b_ss = (jnp.concatenate([raw["bt1"], raw["bt2"]], axis=1) + plus1).astype(jnp.float32)
    w12 = jnp.concatenate([raw["w1"], raw["w2"]], axis=0).astype(jnp.float32)
    g, phase = _sin_emb_consts(f_dim)
    cvec = jnp.concatenate([raw["b1"], raw["b2"], g, phase], axis=0).astype(jnp.float32)
    return dict(w_ss=w_ss, b_ss=b_ss, w12=w12, cvec=cvec)


# ----------------------------------------------------------------------------- forward
def _schedule_coeffs(t, rows):
    # TODO(synk): the 50-entry schedule gather stays as a wrapper-side XLA op; an in-kernel
    # per-row SMEM gather would assemble vectors from scalar reads and be slower.
    betas = jnp.linspace(1e-4, 0.02, TIMESTEPS, dtype=jnp.float32)
    ac = jnp.cumprod(1.0 - betas)
    sac = jnp.sqrt(ac)[t].reshape(rows, 1).astype(jnp.float32)
    somac = jnp.sqrt(1.0 - ac)[t].reshape(rows, 1).astype(jnp.float32)
    return sac, somac


@jax.jit
def diffusion_forward_pallas(x, t, noise, packed):
    """x: [rows, F] f32, t: [rows] int32, noise: [rows, F] f32 -> scalar L1 loss (mean)."""
    rows, f = x.shape
    tm = _pick_row_block(rows)
    num_steps = rows // tm

    sac, somac = _schedule_coeffs(t, rows)
    t_f = t.astype(jnp.float32).reshape(rows, 1)

    w_ss, b_ss, w12, cvec = packed["w_ss"], packed["b_ss"], packed["w12"], packed["cvec"]

    row_spec = pl.BlockSpec((tm, f), lambda i: (i, 0))
    col_spec = pl.BlockSpec((tm, 1), lambda i: (i, 0))

    def const_spec(shape):
        return pl.BlockSpec(shape, lambda i: (0, 0))

    out = pl.pallas_call(
        _diffusion_kernel,
        grid=(num_steps,),
        in_specs=[row_spec, row_spec, col_spec, col_spec, col_spec,
                  const_spec(w_ss.shape), const_spec(b_ss.shape),
                  const_spec(w12.shape), const_spec(cvec.shape)],
        out_specs=pl.BlockSpec((1, 8, 128), lambda i: (i, 0, 0)),
        out_shape=jax.ShapeDtypeStruct((num_steps, 8, 128), jnp.float32),
        compiler_params=pltpu.CompilerParams(dimension_semantics=("parallel",)),
    )(x, noise, t_f, sac, somac, w_ss, b_ss, w12, cvec)

    # Every grid step reduces the same number of rows -> mean of per-step means == overall mean.
    return jnp.mean(out[:, 0, 0])


# ----------------------------------------------------------------------------- pure-JAX reference
def diffusion_forward_reference(x, t, noise, raw):
    rows, f = x.shape
    sac, somac = _schedule_coeffs(t, rows)
    x_noisy = sac * x + somac * noise

    half = f // 2
    emb_c = math.log(10000.0) / (half - 1)
    freqs = jnp.exp(jnp.arange(half, dtype=jnp.float32) * -emb_c)
    ang = t.astype(jnp.float32)[:, None] * freqs[None, :]
    pos = jnp.concatenate([jnp.sin(ang), jnp.cos(ang)], axis=1)

    hp = lax.Precision.HIGHEST
    h1 = jnp.dot(pos, raw["w1"], precision=hp) + raw["b1"]
    h1 = 0.5 * h1 * (1.0 + lax.erf(h1 * _INV_SQRT2))
    t_feat = jnp.dot(h1, raw["w2"], precision=hp) + raw["b2"]

    def block(h, tf, wt, bt):                          # literal PyTorch Block.forward
        tt = jnp.dot(jax.nn.silu(tf), wt, precision=hp) + bt
        scale, shift = jnp.split(tt, 2, axis=1)        # chunk(2, dim=1): scale first
        return (scale + 1.0) * h + shift

    h = block(x_noisy, t_feat, raw["wt1"], raw["bt1"])
    h = block(h, t_feat, raw["wt2"], raw["bt2"])
    return jnp.mean(jnp.abs(noise - h))


if __name__ == "__main__":
    key = jax.random.PRNGKey(0)
    kx, kn, kt, kp = jax.random.split(key, 4)

    rows = N_PROBLEMS * B_PER_PROBLEM                                   # 512 rows, 2 grid steps
    x = jax.random.normal(kx, (rows, F_DIM), dtype=jnp.float32)
    noise = jax.random.normal(kn, (rows, F_DIM), dtype=jnp.float32)     # randn_like(x)
    t = jax.random.randint(kt, (rows,), 0, TIMESTEPS, dtype=jnp.int32)  # randint(0, timesteps)

    raw = init_raw_params(kp, F_DIM)
    packed = pack_params(raw, F_DIM)

    loss = diffusion_forward_pallas(x, t, noise, packed)
    loss = jax.block_until_ready(loss)

    ref = diffusion_forward_reference(x, t, noise, raw)
    assert loss.shape == () and bool(jnp.isfinite(loss))
    assert bool(jnp.allclose(loss, ref, rtol=2e-3, atol=2e-3)), (float(loss), float(ref))
    print("KERNEL_OK")
</pallas_src>

<mosaic_0001>
module attributes {stable_mosaic.version = 11 : i64} {
  func.func @_diffusion_kernel(%arg0: i32, %arg1: memref<256x32xf32, #tpu.memory_space<vmem>>, %arg2: memref<256x32xf32, #tpu.memory_space<vmem>>, %arg3: memref<256x1xf32, #tpu.memory_space<vmem>>, %arg4: memref<256x1xf32, #tpu.memory_space<vmem>>, %arg5: memref<256x1xf32, #tpu.memory_space<vmem>>, %arg6: memref<32x128xf32, #tpu.memory_space<vmem>>, %arg7: memref<1x128xf32, #tpu.memory_space<vmem>>, %arg8: memref<64x32xf32, #tpu.memory_space<vmem>>, %arg9: memref<4x32xf32, #tpu.memory_space<vmem>>, %arg10: memref<1x8x128xf32, #tpu.memory_space<vmem>>) attributes {dimension_semantics = [#tpu.dimension_semantics<parallel>], iteration_bounds = array<i64: 2>, scalar_prefetch = 0 : i64, scratch_operands = 0 : i64, tpu.core_type = #tpu.core_type<tc>, window_params = [{transform_indices = @transform_0, window_bounds = array<i64: 256, 32>}, {transform_indices = @transform_1, window_bounds = array<i64: 256, 32>}, {transform_indices = @transform_2, window_bounds = array<i64: 256, 1>}, {transform_indices = @transform_3, window_bounds = array<i64: 256, 1>}, {transform_indices = @transform_4, window_bounds = array<i64: 256, 1>}, {pipeline_mode = #tpu.pipeline_mode<synchronous>, transform_indices = @transform_5, window_bounds = array<i64: 32, 128>}, {pipeline_mode = #tpu.pipeline_mode<synchronous>, transform_indices = @transform_6, window_bounds = array<i64: 1, 128>}, {pipeline_mode = #tpu.pipeline_mode<synchronous>, transform_indices = @transform_7, window_bounds = array<i64: 64, 32>}, {pipeline_mode = #tpu.pipeline_mode<synchronous>, transform_indices = @transform_8, window_bounds = array<i64: 4, 32>}, {transform_indices = @transform_9, window_bounds = array<i64: 1, 8, 128>}]} {
    %c0 = arith.constant 0 : index
    %c0_0 = arith.constant 0 : index
    %0 = vector.load %arg1[%c0, %c0_0] : memref<256x32xf32, #tpu.memory_space<vmem>>, vector<256x32xf32>
    %c0_1 = arith.constant 0 : index
    %c0_2 = arith.constant 0 : index
    %1 = vector.load %arg2[%c0_1, %c0_2] : memref<256x32xf32, #tpu.memory_space<vmem>>, vector<256x32xf32>
    %c0_3 = arith.constant 0 : index
    %c0_4 = arith.constant 0 : index
    %2 = vector.load %arg3[%c0_3, %c0_4] : memref<256x1xf32, #tpu.memory_space<vmem>>, vector<256x1xf32>
    %c0_5 = arith.constant 0 : index
    %c0_6 = arith.constant 0 : index
    %3 = vector.load %arg4[%c0_5, %c0_6] : memref<256x1xf32, #tpu.memory_space<vmem>>, vector<256x1xf32>
    %c0_7 = arith.constant 0 : index
    %c0_8 = arith.constant 0 : index
    %4 = vector.load %arg5[%c0_7, %c0_8] : memref<256x1xf32, #tpu.memory_space<vmem>>, vector<256x1xf32>
    %c0_9 = arith.constant 0 : index
    %c0_10 = arith.constant 0 : index
    %5 = vector.load %arg9[%c0_9, %c0_10] : memref<4x32xf32, #tpu.memory_space<vmem>>, vector<1x32xf32>
    %c1 = arith.constant 1 : index
    %c0_11 = arith.constant 0 : index
    %6 = vector.load %arg9[%c1, %c0_11] : memref<4x32xf32, #tpu.memory_space<vmem>>, vector<1x32xf32>
    %c2 = arith.constant 2 : index
    %c0_12 = arith.constant 0 : index
    %7 = vector.load %arg9[%c2, %c0_12] : memref<4x32xf32, #tpu.memory_space<vmem>>, vector<1x32xf32>
    %c3 = arith.constant 3 : index
    %c0_13 = arith.constant 0 : index
    %8 = vector.load %arg9[%c3, %c0_13] : memref<4x32xf32, #tpu.memory_space<vmem>>, vector<1x32xf32>
    %9 = vector.broadcast %3 : vector<256x1xf32> to vector<256x32xf32>
    %10 = arith.mulf %9, %0 : vector<256x32xf32>
    %11 = vector.broadcast %4 : vector<256x1xf32> to vector<256x32xf32>
    %12 = arith.mulf %11, %1 : vector<256x32xf32>
    %13 = arith.addf %10, %12 : vector<256x32xf32>
    %14 = vector.broadcast %2 : vector<256x1xf32> to vector<256x32xf32>
    %15 = vector.broadcast %7 : vector<1x32xf32> to vector<256x32xf32>
    %16 = arith.mulf %14, %15 : vector<256x32xf32>
    %17 = vector.broadcast %8 : vector<1x32xf32> to vector<256x32xf32>
    %18 = arith.addf %16, %17 : vector<256x32xf32>
    %19 = math.sin %18 : vector<256x32xf32>
    %c0_14 = arith.constant 0 : index
    %c0_15 = arith.constant 0 : index
    %20 = vector.load %arg8[%c0_14, %c0_15] : memref<64x32xf32, #tpu.memory_space<vmem>>, vector<32x32xf32>
    %c32 = arith.constant 32 : index
    %c0_16 = arith.constant 0 : index
    %21 = vector.load %arg8[%c32, %c0_16] : memref<64x32xf32, #tpu.memory_space<vmem>>, vector<32x32xf32>
    %cst = arith.constant dense<0.000000e+00> : vector<256x32xf32>
    %22 = tpu.matmul %19, %20, %cst {dimension_numbers = #tpu.dot_dimension_numbers<[1], [0], [0], [1], [0, 0, 1, 1], [], []>} : vector<256x32xf32>, vector<32x32xf32>, vector<256x32xf32> -> vector<256x32xf32>
    %23 = vector.broadcast %5 : vector<1x32xf32> to vector<256x32xf32>
    %24 = arith.addf %22, %23 : vector<256x32xf32>
    %cst_17 = arith.constant 5.000000e-01 : f32
    %25 = vector.broadcast %cst_17 : f32 to vector<256x32xf32>
    %26 = arith.mulf %25, %24 : vector<256x32xf32>
    %cst_18 = arith.constant 0.707106769 : f32
    %27 = vector.broadcast %cst_18 : f32 to vector<256x32xf32>
    %28 = arith.mulf %24, %27 : vector<256x32xf32>
    %29 = math.erf %28 : vector<256x32xf32>
    %cst_19 = arith.constant 1.000000e+00 : f32
    %30 = vector.broadcast %cst_19 : f32 to vector<256x32xf32>
    %31 = arith.addf %30, %29 : vector<256x32xf32>
    %32 = arith.mulf %26, %31 : vector<256x32xf32>
    %cst_20 = arith.constant dense<0.000000e+00> : vector<256x32xf32>
    %33 = tpu.matmul %32, %21, %cst_20 {dimension_numbers = #tpu.dot_dimension_numbers<[1], [0], [0], [1], [0, 0, 1, 1], [], []>} : vector<256x32xf32>, vector<32x32xf32>, vector<256x32xf32> -> vector<256x32xf32>
    %34 = vector.broadcast %6 : vector<1x32xf32> to vector<256x32xf32>
    %35 = arith.addf %33, %34 : vector<256x32xf32>
    %36 = arith.negf %35 : vector<256x32xf32>
    %37 = math.exp %36 : vector<256x32xf32>
    %cst_21 = arith.constant 1.000000e+00 : f32
    %38 = vector.broadcast %cst_21 : f32 to vector<256x32xf32>
    %39 = arith.addf %38, %37 : vector<256x32xf32>
    %40 = arith.divf %38, %39 : vector<256x32xf32>
    %41 = arith.mulf %35, %40 : vector<256x32xf32>
    %c0_22 = arith.constant 0 : index
    %c0_23 = arith.constant 0 : index
    %42 = vector.load %arg6[%c0_22, %c0_23] : memref<32x128xf32, #tpu.memory_space<vmem>>, vector<32x128xf32>
    %cst_24 = arith.constant dense<0.000000e+00> : vector<256x128xf32>
    %43 = tpu.matmul %41, %42, %cst_24 {dimension_numbers = #tpu.dot_dimension_numbers<[1], [0], [0], [1], [0, 0, 1, 1], [], []>} : vector<256x32xf32>, vector<32x128xf32>, vector<256x128xf32> -> vector<256x128xf32>
    %c0_25 = arith.constant 0 : index
    %c0_26 = arith.constant 0 : index
    %44 = vector.load %arg7[%c0_25, %c0_26] : memref<1x128xf32, #tpu.memory_space<vmem>>, vector<1x128xf32>
    %45 = vector.broadcast %44 : vector<1x128xf32> to vector<256x128xf32>
    %46 = arith.addf %43, %45 : vector<256x128xf32>
    %47 = vector.extract_strided_slice %46 {offsets = [0, 0], sizes = [256, 32], strides = [1, 1]} : vector<256x128xf32> to vector<256x32xf32>
    %48 = vector.extract_strided_slice %46 {offsets = [0, 32], sizes = [256, 32], strides = [1, 1]} : vector<256x128xf32> to vector<256x32xf32>
    %49 = vector.extract_strided_slice %46 {offsets = [0, 64], sizes = [256, 32], strides = [1, 1]} : vector<256x128xf32> to vector<256x32xf32>
    %50 = vector.extract_strided_slice %46 {offsets = [0, 96], sizes = [256, 32], strides = [1, 1]} : vector<256x128xf32> to vector<256x32xf32>
    %51 = arith.mulf %47, %13 : vector<256x32xf32>
    %52 = arith.addf %51, %48 : vector<256x32xf32>
    %53 = arith.mulf %49, %52 : vector<256x32xf32>
    %54 = arith.addf %53, %50 : vector<256x32xf32>
    %55 = arith.subf %1, %54 : vector<256x32xf32>
    %56 = math.absf %55 : vector<256x32xf32>
    %57 = vector.shape_cast %56 : vector<256x32xf32> to vector<1x256x32xf32>
    %cst_27 = arith.constant dense<0.000000e+00> : vector<1xf32>
    %58 = vector.multi_reduction <add>, %57, %cst_27 [1, 2] : vector<1x256x32xf32> to vector<1xf32>
    %59 = vector.shape_cast %58 : vector<1xf32> to vector<1x1x1xf32>
    %60 = vector.extract %59[0, 0, 0] : f32 from vector<1x1x1xf32>
    %cst_28 = arith.constant 8.192000e+03 : f32
    %61 = arith.divf %60, %cst_28 : f32
    %62 = vector.broadcast %61 : f32 to vector<1x8x128xf32>
    %c0_29 = arith.constant 0 : index
    %c0_30 = arith.constant 0 : index
    %c0_31 = arith.constant 0 : index
    %63 = vector.load %arg10[%c0_29, %c0_30, %c0_31] : memref<1x8x128xf32, #tpu.memory_space<vmem>>, vector<1x8x128xf32>
    tpu.vector_store %arg10[%c0_29, %c0_30, %c0_31], %62 {strides = array<i32>} : memref<1x8x128xf32, #tpu.memory_space<vmem>>, vector<1x8x128xf32>,
    return
  }
  func.func @transform_0(%arg0: i32) -> (i32, i32) {
    %c0_i32 = arith.constant 0 : i32
    %c0_i32_0 = arith.constant 0 : i32
    return %arg0, %c0_i32 : i32, i32
  }
  func.func @transform_1(%arg0: i32) -> (i32, i32) {
    %c0_i32 = arith.constant 0 : i32
    %c0_i32_0 = arith.constant 0 : i32
    return %arg0, %c0_i32 : i32, i32
  }
  func.func @transform_2(%arg0: i32) -> (i32, i32) {
    %c0_i32 = arith.constant 0 : i32
    %c0_i32_0 = arith.constant 0 : i32
    return %arg0, %c0_i32 : i32, i32
  }
  func.func @transform_3(%arg0: i32) -> (i32, i32) {
    %c0_i32 = arith.constant 0 : i32
    %c0_i32_0 = arith.constant 0 : i32
    return %arg0, %c0_i32 : i32, i32
  }
  func.func @transform_4(%arg0: i32) -> (i32, i32) {
    %c0_i32 = arith.constant 0 : i32
    %c0_i32_0 = arith.constant 0 : i32
    return %arg0, %c0_i32 : i32, i32
  }
  func.func @transform_5(%arg0: i32) -> (i32, i32) {
    %c0_i32 = arith.constant 0 : i32
    %c0_i32_0 = arith.constant 0 : i32
    %c0_i32_1 = arith.constant 0 : i32
    return %c0_i32, %c0_i32_0 : i32, i32
  }
  func.func @transform_6(%arg0: i32) -> (i32, i32) {
    %c0_i32 = arith.constant 0 : i32
    %c0_i32_0 = arith.constant 0 : i32
    %c0_i32_1 = arith.constant 0 : i32
    return %c0_i32, %c0_i32_0 : i32, i32
  }
  func.func @transform_7(%arg0: i32) -> (i32, i32) {
    %c0_i32 = arith.constant 0 : i32
    %c0_i32_0 = arith.constant 0 : i32
    %c0_i32_1 = arith.constant 0 : i32
    return %c0_i32, %c0_i32_0 : i32, i32
  }
  func.func @transform_8(%arg0: i32) -> (i32, i32) {
    %c0_i32 = arith.constant 0 : i32
    %c0_i32_0 = arith.constant 0 : i32
    %c0_i32_1 = arith.constant 0 : i32
    return %c0_i32, %c0_i32_0 : i32, i32
  }
  func.func @transform_9(%arg0: i32) -> (i32, i32, i32) {
    %c0_i32 = arith.constant 0 : i32
    %c0_i32_0 = arith.constant 0 : i32
    %c0_i32_1 = arith.constant 0 : i32
    return %arg0, %c0_i32, %c0_i32_0 : i32, i32, i32
  }
}

</mosaic_0001>

<llo_original>
// kernel: diffusion_forward_pallas.1
$region0: #{diffusion_forward_pallas.1}
  #allocation0 [shape = 'u32[]', space=smem, size = 0x4, offset = 0x4, fixed_abs, tag = 'smem constant byte address 0x4 - core index']
  #allocation1 [shape = 'u32[144,128]{1,0:T(1,128)}', space=vmem, size = 0x12000, scoped, tag = 'internal scratch']
  %s0 = inlined_call_operand.vmem [shape: f32[512,32], index: 0, kind: input, shape index: {}]
  %s1 = inlined_call_operand.vmem [shape: f32[512,32], index: 1, kind: input, shape index: {}]
  %s2 = inlined_call_operand.vmem [shape: f32[512,1], index: 2, kind: input, shape index: {}]
  %s3 = inlined_call_operand.vmem [shape: f32[512,1], index: 3, kind: input, shape index: {}]
  %s4 = inlined_call_operand.vmem [shape: f32[512,1], index: 4, kind: input, shape index: {}]
  %s5 = inlined_call_operand.vmem [shape: f32[32,128], index: 5, kind: input, shape index: {}]
  %s6 = inlined_call_operand.vmem [shape: f32[1,128], index: 6, kind: input, shape index: {}]
  %s7 = inlined_call_operand.vmem [shape: f32[64,32], index: 7, kind: input, shape index: {}]
  %s8 = inlined_call_operand.vmem [shape: f32[4,32], index: 8, kind: input, shape index: {}]
  %s9 = inlined_call_operand.vmem [shape: f32[2,8,128], index: 9, kind: output, shape index: {}]
  %s10 = sld [smem:[#allocation0]]
  $region69: #{diffusion_forward_pallas.1} parent=0
    _
  %s12 = ssub.s32 1, %s10
  %s13 = scalar_select 0, %s12, %s10
  loop: start=0, step=1, limit=4
  $region2: #{diffusion_forward_pallas.1} parent=0 // loop_pre_header
    _
  $region3: #{diffusion_forward_pallas.1} parent=0 // loop_header
    %s15 = sphi 0, %s19
    %p16 = scmp.ge.s32.totalorder %s15, 4
    %s25 = sphi 0, %s27
    %s28 = sphi 0, %s25
    %s29 = sphi 0, %s28
    %s45 = sphi 0, %s29
    %s51 = sphi 0, %s53
    %s54 = sphi 0, %s51
    %s55 = sphi 0, %s54
    %s71 = sphi 0, %s55
    %s77 = sphi 0, %s79
    %s80 = sphi 0, %s77
    %s81 = sphi 0, %s80
    %s97 = sphi 0, %s81
    %s103 = sphi 0, %s105
    %s106 = sphi 0, %s103
    %s107 = sphi 0, %s106
    %s123 = sphi 0, %s107
    %s129 = sphi 0, %s131
    %s132 = sphi 0, %s129
    %s133 = sphi 0, %s132
    %s149 = sphi 0, %s133
    %s153 = sphi 0, %s153
    %s155 = sphi 0, %s153
    %s156 = sphi 0, %s155
    %s170 = sphi 0, %s156
    %s174 = sphi 0, %s174
    %s176 = sphi 0, %s174
    %s177 = sphi 0, %s176
    %s191 = sphi 0, %s177
    %s195 = sphi 0, %s195
    %s197 = sphi 0, %s195
    %s198 = sphi 0, %s197
    %s212 = sphi 0, %s198
    %s216 = sphi 0, %s216
    %s218 = sphi 0, %s216
    %s219 = sphi 0, %s218
    %s233 = sphi 0, %s219
    %s239 = sphi 0, %s241
    %s242 = sphi 0, %s239
    %s243 = sphi 0, %s242
    %s259 = sphi 0, %s243
  $region4: #{diffusion_forward_pallas.1} parent=0 // loop_header_branch
    %18 = sbr.rel (%p16) target = $region8
  $region5: #{diffusion_forward_pallas.1} parent=0 // loop_body
    %s20 = ssub.s32 %s15, 1
    %s21 = ssub.s32 %s15, 2
    %s22 = sadd.s32 %s15, 1
    %s23 = ssub.s32 %s15, %s22
    %p24 = scmp.eq.s32.totalorder %s23, 0
    %s26 = sadd.s32 %s25, 1
    %s27 = scalar_select %p24, %s25, %s26
    %p30 = pneg %p24
    %p31 = scmp.eq.s32.totalorder %s15, 1
    %p32 = por %p30, %p31
    %p33 = scmp.ne.s32.totalorder %s25, %s28
    %p34 = scmp.eq.s32.totalorder %s15, 0
    %p35 = por %p33, %p34
    %p36 = scmp.ne.s32.totalorder %s25, %s28
    %p37 = scmp.eq.s32.totalorder %s20, 1
    %p38 = por %p36, %p37
    %p39 = scmp.ne.s32.totalorder %s28, %s29
    %p40 = scmp.eq.s32.totalorder %s20, 0
    %p41 = por %p39, %p40
    %p42 = scmp.ne.s32.totalorder %s28, %s29
    %p43 = scmp.eq.s32.totalorder %s21, 1
    %p44 = por %p42, %p43
    %p46 = scmp.ne.s32.totalorder %s29, %s45
    %p47 = scmp.eq.s32.totalorder %s21, 0
    %p48 = por %p46, %p47
    %s49 = ssub.s32 %s15, %s22
    %p50 = scmp.eq.s32.totalorder %s49, 0
    %s52 = sadd.s32 %s51, 1
    %s53 = scalar_select %p50, %s51, %s52
    %p56 = pneg %p50
    %p57 = scmp.eq.s32.totalorder %s15, 1
    %p58 = por %p56, %p57
    %p59 = scmp.ne.s32.totalorder %s51, %s54
    %p60 = scmp.eq.s32.totalorder %s15, 0
    %p61 = por %p59, %p60
    %p62 = scmp.ne.s32.totalorder %s51, %s54
    %p63 = scmp.eq.s32.totalorder %s20, 1
    %p64 = por %p62, %p63
    %p65 = scmp.ne.s32.totalorder %s54, %s55
    %p66 = scmp.eq.s32.totalorder %s20, 0
    %p67 = por %p65, %p66
    %p68 = scmp.ne.s32.totalorder %s54, %s55
    %p69 = scmp.eq.s32.totalorder %s21, 1
    %p70 = por %p68, %p69
    %p72 = scmp.ne.s32.totalorder %s55, %s71
    %p73 = scmp.eq.s32.totalorder %s21, 0
    %p74 = por %p72, %p73
    %s75 = ssub.s32 %s15, %s22
    %p76 = scmp.eq.s32.totalorder %s75, 0
    %s78 = sadd.s32 %s77, 1
    %s79 = scalar_select %p76, %s77, %s78
    %p82 = pneg %p76
    %p83 = scmp.eq.s32.totalorder %s15, 1
    %p84 = por %p82, %p83
    %p85 = scmp.ne.s32.totalorder %s77, %s80
    %p86 = scmp.eq.s32.totalorder %s15, 0
    %p87 = por %p85, %p86
    %p88 = scmp.ne.s32.totalorder %s77, %s80
    %p89 = scmp.eq.s32.totalorder %s20, 1
    %p90 = por %p88, %p89
    %p91 = scmp.ne.s32.totalorder %s80, %s81
    %p92 = scmp.eq.s32.totalorder %s20, 0
    %p93 = por %p91, %p92
    %p94 = scmp.ne.s32.totalorder %s80, %s81
    %p95 = scmp.eq.s32.totalorder %s21, 1
    %p96 = por %p94, %p95
    %p98 = scmp.ne.s32.totalorder %s81, %s97
    %p99 = scmp.eq.s32.totalorder %s21, 0
    %p100 = por %p98, %p99
    %s101 = ssub.s32 %s15, %s22
    %p102 = scmp.eq.s32.totalorder %s101, 0
    %s104 = sadd.s32 %s103, 1
    %s105 = scalar_select %p102, %s103, %s104
    %p108 = pneg %p102
    %p109 = scmp.eq.s32.totalorder %s15, 1
    %p110 = por %p108, %p109
    %p111 = scmp.ne.s32.totalorder %s103, %s106
    %p112 = scmp.eq.s32.totalorder %s15, 0
    %p113 = por %p111, %p112
    %p114 = scmp.ne.s32.totalorder %s103, %s106
    %p115 = scmp.eq.s32.totalorder %s20, 1
    %p116 = por %p114, %p115
    %p117 = scmp.ne.s32.totalorder %s106, %s107
    %p118 = scmp.eq.s32.totalorder %s20, 0
    %p119 = por %p117, %p118
    %p120 = scmp.ne.s32.totalorder %s106, %s107
    %p121 = scmp.eq.s32.totalorder %s21, 1
    %p122 = por %p120, %p121
    %p124 = scmp.ne.s32.totalorder %s107, %s123
    %p125 = scmp.eq.s32.totalorder %s21, 0
    %p126 = por %p124, %p125
    %s127 = ssub.s32 %s15, %s22
    %p128 = scmp.eq.s32.totalorder %s127, 0
    %s130 = sadd.s32 %s129, 1
    %s131 = scalar_select %p128, %s129, %s130
    %p134 = pneg %p128
    %p135 = scmp.eq.s32.totalorder %s15, 1
    %p136 = por %p134, %p135
    %p137 = scmp.ne.s32.totalorder %s129, %s132
    %p138 = scmp.eq.s32.totalorder %s15, 0
    %p139 = por %p137, %p138
    %p140 = scmp.ne.s32.totalorder %s129, %s132
    %p141 = scmp.eq.s32.totalorder %s20, 1
    %p142 = por %p140, %p141
    %p143 = scmp.ne.s32.totalorder %s132, %s133
    %p144 = scmp.eq.s32.totalorder %s20, 0
    %p145 = por %p143, %p144
    %p146 = scmp.ne.s32.totalorder %s132, %s133
    %p147 = scmp.eq.s32.totalorder %s21, 1
    %p148 = por %p146, %p147
    %p150 = scmp.ne.s32.totalorder %s133, %s149
    %p151 = scmp.eq.s32.totalorder %s21, 0
    %p152 = por %p150, %p151
    %s154 = sadd.s32 %s153, 1
    %p157 = scmp.eq.s32.totalorder %s15, 1
    %p158 = scmp.ne.s32.totalorder %s153, %s155
    %p159 = scmp.eq.s32.totalorder %s15, 0
    %p160 = por %p158, %p159
    %p161 = scmp.ne.s32.totalorder %s153, %s155
    %p162 = scmp.eq.s32.totalorder %s20, 1
    %p163 = por %p161, %p162
    %p164 = scmp.ne.s32.totalorder %s155, %s156
    %p165 = scmp.eq.s32.totalorder %s20, 0
    %p166 = por %p164, %p165
    %p167 = scmp.ne.s32.totalorder %s155, %s156
    %p168 = scmp.eq.s32.totalorder %s21, 1
    %p169 = por %p167, %p168
    %p171 = scmp.ne.s32.totalorder %s156, %s170
    %p172 = scmp.eq.s32.totalorder %s21, 0
    %p173 = por %p171, %p172
    %s175 = sadd.s32 %s174, 1
    %p178 = scmp.eq.s32.totalorder %s15, 1
    %p179 = scmp.ne.s32.totalorder %s174, %s176
    %p180 = scmp.eq.s32.totalorder %s15, 0
    %p181 = por %p179, %p180
    %p182 = scmp.ne.s32.totalorder %s174, %s176
    %p183 = scmp.eq.s32.totalorder %s20, 1
    %p184 = por %p182, %p183
    %p185 = scmp.ne.s32.totalorder %s176, %s177
    %p186 = scmp.eq.s32.totalorder %s20, 0
    %p187 = por %p185, %p186
    %p188 = scmp.ne.s32.totalorder %s176, %s177
    %p189 = scmp.eq.s32.totalorder %s21, 1
    %p190 = por %p188, %p189
    %p192 = scmp.ne.s32.totalorder %s177, %s191
    %p193 = scmp.eq.s32.totalorder %s21, 0
    %p194 = por %p192, %p193
    %s196 = sadd.s32 %s195, 1
    %p199 = scmp.eq.s32.totalorder %s15, 1
    %p200 = scmp.ne.s32.totalorder %s195, %s197
    %p201 = scmp.eq.s32.totalorder %s15, 0
    %p202 = por %p200, %p201
    %p203 = scmp.ne.s32.totalorder %s195, %s197
    %p204 = scmp.eq.s32.totalorder %s20, 1
    %p205 = por %p203, %p204
    %p206 = scmp.ne.s32.totalorder %s197, %s198
    %p207 = scmp.eq.s32.totalorder %s20, 0
    %p208 = por %p206, %p207
    %p209 = scmp.ne.s32.totalorder %s197, %s198
    %p210 = scmp.eq.s32.totalorder %s21, 1
    %p211 = por %p209, %p210
    %p213 = scmp.ne.s32.totalorder %s198, %s212
    %p214 = scmp.eq.s32.totalorder %s21, 0
    %p215 = por %p213, %p214
    %s217 = sadd.s32 %s216, 1
    %p220 = scmp.eq.s32.totalorder %s15, 1
    %p221 = scmp.ne.s32.totalorder %s216, %s218
    %p222 = scmp.eq.s32.totalorder %s15, 0
    %p223 = por %p221, %p222
    %p224 = scmp.ne.s32.totalorder %s216, %s218
    %p225 = scmp.eq.s32.totalorder %s20, 1
    %p226 = por %p224, %p225
    %p227 = scmp.ne.s32.totalorder %s218, %s219
    %p228 = scmp.eq.s32.totalorder %s20, 0
    %p229 = por %p227, %p228
    %p230 = scmp.ne.s32.totalorder %s218, %s219
    %p231 = scmp.eq.s32.totalorder %s21, 1
    %p232 = por %p230, %p231
    %p234 = scmp.ne.s32.totalorder %s219, %s233
    %p235 = scmp.eq.s32.totalorder %s21, 0
    %p236 = por %p234, %p235
    %s237 = ssub.s32 %s15, %s22
    %p238 = scmp.eq.s32.totalorder %s237, 0
    %s240 = sadd.s32 %s239, 1
    %s241 = scalar_select %p238, %s239, %s240
    %p244 = pneg %p238
    %p245 = scmp.eq.s32.totalorder %s15, 1
    %p246 = por %p244, %p245
    %p247 = scmp.ne.s32.totalorder %s239, %s242
    %p248 = scmp.eq.s32.totalorder %s15, 0
    %p249 = por %p247, %p248
    %p250 = scmp.ne.s32.totalorder %s239, %s242
    %p251 = scmp.eq.s32.totalorder %s20, 1
    %p252 = por %p250, %p251
    %p253 = scmp.ne.s32.totalorder %s242, %s243
    %p254 = scmp.eq.s32.totalorder %s20, 0
    %p255 = por %p253, %p254
    %p256 = scmp.ne.s32.totalorder %s242, %s243
    %p257 = scmp.eq.s32.totalorder %s21, 1
    %p258 = por %p256, %p257
    %p260 = scmp.ne.s32.totalorder %s243, %s259
    %p261 = scmp.eq.s32.totalorder %s21, 0
    %p262 = por %p260, %p261
    %p263 = scmp.le.s32.totalorder 1, %s15
    %p264 = scmp.lt.s32.totalorder %s15, 3
    %p265 = pnand %p263, %p264
    %p266 = pneg %p265
    // Predicated region
    $region9: #{diffusion_forward_pallas.1} parent=5 // pred_check
      _
    $region10: #{diffusion_forward_pallas.1} parent=5 // pred_check_branch
      %268 = sbr.rel (%p265) target = $region12
    $region11: #{diffusion_forward_pallas.1} parent=5 // pred_region
      %s269 = ssub.s32 %s15, 1
      // Predicated region
      $region13: #{diffusion_forward_pallas.1} parent=11 // pred_check
        %p270 = pneg %p166
      $region14: #{diffusion_forward_pallas.1} parent=11 // pred_check_branch
        %272 = sbr.rel (%p270) target = $region16
      $region15: #{diffusion_forward_pallas.1} parent=11 // pred_region
        _
      $region16: #{diffusion_forward_pallas.1} parent=11 // pred_fallthru
        _
      // Predicated region
      $region17: #{diffusion_forward_pallas.1} parent=11 // pred_check
        %p273 = pneg %p187
      $region18: #{diffusion_forward_pallas.1} parent=11 // pred_check_branch
        %275 = sbr.rel (%p273) target = $region20
      $region19: #{diffusion_forward_pallas.1} parent=11 // pred_region
        _
      $region20: #{diffusion_forward_pallas.1} parent=11 // pred_fallthru
        _
      // Predicated region
      $region21: #{diffusion_forward_pallas.1} parent=11 // pred_check
        %p276 = pneg %p208
      $region22: #{diffusion_forward_pallas.1} parent=11 // pred_check_branch
        %278 = sbr.rel (%p276) target = $region24
      $region23: #{diffusion_forward_pallas.1} parent=11 // pred_region
        _
      $region24: #{diffusion_forward_pallas.1} parent=11 // pred_fallthru
        _
      // Predicated region
      $region25: #{diffusion_forward_pallas.1} parent=11 // pred_check
        %p279 = pneg %p229
      $region26: #{diffusion_forward_pallas.1} parent=11 // pred_check_branch
        %281 = sbr.rel (%p279) target = $region28
      $region27: #{diffusion_forward_pallas.1} parent=11 // pred_region
        _
      $region28: #{diffusion_forward_pallas.1} parent=11 // pred_fallthru
        _
    $region12: #{diffusion_forward_pallas.1} parent=5 // pred_fallthru
      _
    %p282 = scmp.lt.s32.totalorder %s15, 2
    // Predicated region
    $region29: #{diffusion_forward_pallas.1} parent=5 // pred_check
      %p283 = pneg %p282
    $region30: #{diffusion_forward_pallas.1} parent=5 // pred_check_branch
      %285 = sbr.rel (%p283) target = $region32
    $region31: #{diffusion_forward_pallas.1} parent=5 // pred_region
      // Predicated region
      $region33: #{diffusion_forward_pallas.1} parent=31 // pred_check
        %p286 = pneg %p35
      $region34: #{diffusion_forward_pallas.1} parent=31 // pred_check_branch
        %288 = sbr.rel (%p286) target = $region36
      $region35: #{diffusion_forward_pallas.1} parent=31 // pred_region
        %s289 = smul.u32 32, %s15
        %p290 = scmp.lt.s32.totalorder %s289, 63
        %s291 = scalar_select %p290, %s289, 63
        %s292 = smul.addr %s291, 8
        %s293 = scalar_lea.vmem %s0, %s292
        %s294 = smul.u32 32, %s15
      $region36: #{diffusion_forward_pallas.1} parent=31 // pred_fallthru
        _
      // Predicated region
      $region37: #{diffusion_forward_pallas.1} parent=31 // pred_check
        %p295 = pneg %p61
      $region38: #{diffusion_forward_pallas.1} parent=31 // pred_check_branch
        %297 = sbr.rel (%p295) target = $region40
      $region39: #{diffusion_forward_pallas.1} parent=31 // pred_region
        %s298 = smul.u32 32, %s15
        %p299 = scmp.lt.s32.totalorder %s298, 63
        %s300 = scalar_select %p299, %s298, 63
        %s301 = smul.addr %s300, 8
        %s302 = scalar_lea.vmem %s1, %s301
        %s303 = smul.u32 32, %s15
      $region40: #{diffusion_forward_pallas.1} parent=31 // pred_fallthru
        _
      // Predicated region
      $region41: #{diffusion_forward_pallas.1} parent=31 // pred_check
        %p304 = pneg %p87
      $region42: #{diffusion_forward_pallas.1} parent=31 // pred_check_branch
        %306 = sbr.rel (%p304) target = $region44
      $region43: #{diffusion_forward_pallas.1} parent=31 // pred_region
        %s307 = smul.u32 32, %s15
        %p308 = scmp.lt.s32.totalorder %s307, 63
        %s309 = scalar_select %p308, %s307, 63
        %s310 = smul.addr %s309, 8
        %s311 = scalar_lea.vmem %s2, %s310
        %s312 = smul.u32 32, %s15
      $region44: #{diffusion_forward_pallas.1} parent=31 // pred_fallthru
        _
      // Predicated region
      $region45: #{diffusion_forward_pallas.1} parent=31 // pred_check
        %p313 = pneg %p113
      $region46: #{diffusion_forward_pallas.1} parent=31 // pred_check_branch
        %315 = sbr.rel (%p313) target = $region48
      $region47: #{diffusion_forward_pallas.1} parent=31 // pred_region
        %s316 = smul.u32 32, %s15
        %p317 = scmp.lt.s32.totalorder %s316, 63
        %s318 = scalar_select %p317, %s316, 63
        %s319 = smul.addr %s318, 8
        %s320 = scalar_lea.vmem %s3, %s319
        %s321 = smul.u32 32, %s15
      $region48: #{diffusion_forward_pallas.1} parent=31 // pred_fallthru
        _
      // Predicated region
      $region49: #{diffusion_forward_pallas.1} parent=31 // pred_check
        %p322 = pneg %p139
      $region50: #{diffusion_forward_pallas.1} parent=31 // pred_check_branch
        %324 = sbr.rel (%p322) target = $region52
      $region51: #{diffusion_forward_pallas.1} parent=31 // pred_region
        %s325 = smul.u32 32, %s15
        %p326 = scmp.lt.s32.totalorder %s325, 63
        %s327 = scalar_select %p326, %s325, 63
        %s328 = smul.addr %s327, 8
        %s329 = scalar_lea.vmem %s4, %s328
        %s330 = smul.u32 32, %s15
      $region52: #{diffusion_forward_pallas.1} parent=31 // pred_fallthru
        _
    $region32: #{diffusion_forward_pallas.1} parent=5 // pred_fallthru
      _
    %p331 = scmp.le.s32.totalorder 1, %s15
    %p332 = scmp.lt.s32.totalorder %s15, 3
    %p333 = pnand %p331, %p332
    %p334 = pneg %p333
    // Predicated region
    $region53: #{diffusion_forward_pallas.1} parent=5 // pred_check
      _
    $region54: #{diffusion_forward_pallas.1} parent=5 // pred_check_branch
      %336 = sbr.rel (%p333) target = $region56
    $region55: #{diffusion_forward_pallas.1} parent=5 // pred_region
      %s337 = ssub.s32 %s15, 1
      %s338 = smul.u32 32, %s20
      %p339 = scmp.lt.s32.totalorder %s338, 63
      %s340 = scalar_select %p339, %s338, 63
      %s341 = smul.addr %s340, 8
      %s342 = scalar_lea.vmem %s0, %s341
      %p343 = pneg %p41
      %p344 = pneg %p38
      %s345 = smul.u32 32, %s20
      %p346 = scmp.lt.s32.totalorder %s345, 63
      %s347 = scalar_select %p346, %s345, 63
      %s348 = smul.addr %s347, 8
      %s349 = scalar_lea.vmem %s1, %s348
      %p350 = pneg %p67
      %p351 = pneg %p64
      %s352 = smul.u32 32, %s20
      %p353 = scmp.lt.s32.totalorder %s352, 63
      %s354 = scalar_select %p353, %s352, 63
      %s355 = smul.addr %s354, 8
      %s356 = scalar_lea.vmem %s2, %s355
      %p357 = pneg %p93
      %p358 = pneg %p90
      %s359 = smul.u32 32, %s20
      %p360 = scmp.lt.s32.totalorder %s359, 63
      %s361 = scalar_select %p360, %s359, 63
      %s362 = smul.addr %s361, 8
      %s363 = scalar_lea.vmem %s3, %s362
      %p364 = pneg %p119
      %p365 = pneg %p116
      %s366 = smul.u32 32, %s20
      %p367 = scmp.lt.s32.totalorder %s366, 63
      %s368 = scalar_select %p367, %s366, 63
      %s369 = smul.addr %s368, 8
      %s370 = scalar_lea.vmem %s4, %s369
      %p371 = pneg %p145
      %p372 = pneg %p142
      %p373 = pneg %p166
      %p374 = pneg %p163
      %p375 = pneg %p187
      %p376 = pneg %p184
      %p377 = pneg %p208
      %p378 = pneg %p205
      %p379 = pneg %p229
      %p380 = pneg %p226
      %p381 = pneg %p255
      %p382 = pneg %p252
      %p383 = scmp.lt.s32.totalorder %s20, 1
      %s384 = scalar_select %p383, %s20, 1
      %s385 = smul.addr %s384, 8
      %s386 = scalar_lea.vmem %s9, %s385
      %s387 = smul.u32 32, %s20
      %p388 = scmp.lt.s32.totalorder %s387, 63
      %s389 = scalar_select %p388, %s387, 63
      %s390 = smul.addr %s389, 8
      %s391 = scalar_lea.vmem %s0, %s390
      %s392 = smul.u32 32, %s20
      %s393 = smul.u32 32, %s20
      %p394 = scmp.lt.s32.totalorder %s393, 63
      %s395 = scalar_select %p394, %s393, 63
      %s396 = smul.addr %s395, 8
      %s397 = scalar_lea.vmem %s1, %s396
      %s398 = smul.u32 32, %s20
      %s399 = smul.u32 32, %s20
      %p400 = scmp.lt.s32.totalorder %s399, 63
      %s401 = scalar_select %p400, %s399, 63
      %s402 = smul.addr %s401, 8
      %s403 = scalar_lea.vmem %s2, %s402
      %s404 = smul.u32 32, %s20
      %s405 = smul.u32 32, %s20
      %p406 = scmp.lt.s32.totalorder %s405, 63
      %s407 = scalar_select %p406, %s405, 63
      %s408 = smul.addr %s407, 8
      %s409 = scalar_lea.vmem %s3, %s408
      %s410 = smul.u32 32, %s20
      %s411 = smul.u32 32, %s20
      %p412 = scmp.lt.s32.totalorder %s411, 63
      %s413 = scalar_select %p412, %s411, 63
      %s414 = smul.addr %s413, 8
      %s415 = scalar_lea.vmem %s4, %s414
      %s416 = smul.u32 32, %s20
      %p417 = scmp.lt.s32.totalorder %s20, 1
      %s418 = scalar_select %p417, %s20, 1
      %s419 = smul.addr %s418, 8
      %s420 = scalar_lea.vmem %s9, %s419
      %v421 = vld [vmem:[%s391] sm:$0xff]
      %v422 = vld [vmem:[%s391 + $0x8] sm:$0xff]
      %v423 = vld [vmem:[%s391 + $0x10] sm:$0xff]
      %v424 = vld [vmem:[%s391 + $0x18] sm:$0xff]
      %v425 = vld [vmem:[%s391 + $0x20] sm:$0xff]
      %v426 = vld [vmem:[%s391 + $0x28] sm:$0xff]
      %v427 = vld [vmem:[%s391 + $0x30] sm:$0xff]
      %v428 = vld [vmem:[%s391 + $0x38] sm:$0xff]
      %v429 = vld [vmem:[%s391 + $0x40] sm:$0xff]
      %v430 = vld [vmem:[%s391 + $0x48] sm:$0xff]
      %v431 = vld [vmem:[%s391 + $0x50] sm:$0xff]
      %v432 = vld [vmem:[%s391 + $0x58] sm:$0xff]
      %v433 = vld [vmem:[%s391 + $0x60] sm:$0xff]
      %v434 = vld [vmem:[%s391 + $0x68] sm:$0xff]
      %v435 = vld [vmem:[%s391 + $0x70] sm:$0xff]
      %v436 = vld [vmem:[%s391 + $0x78] sm:$0xff]
      %v437 = vld [vmem:[%s391 + $0x80] sm:$0xff]
      %v438 = vld [vmem:[%s391 + $0x88] sm:$0xff]
      %v439 = vld [vmem:[%s391 + $0x90] sm:$0xff]
      %v440 = vld [vmem:[%s391 + $0x98] sm:$0xff]
      %v441 = vld [vmem:[%s391 + $0xa0] sm:$0xff]
      %v442 = vld [vmem:[%s391 + $0xa8] sm:$0xff]
      %v443 = vld [vmem:[%s391 + $0xb0] sm:$0xff]
      %v444 = vld [vmem:[%s391 + $0xb8] sm:$0xff]
      %v445 = vld [vmem:[%s391 + $0xc0] sm:$0xff]
      %v446 = vld [vmem:[%s391 + $0xc8] sm:$0xff]
      %v447 = vld [vmem:[%s391 + $0xd0] sm:$0xff]
      %v448 = vld [vmem:[%s391 + $0xd8] sm:$0xff]
      %v449 = vld [vmem:[%s391 + $0xe0] sm:$0xff]
      %v450 = vld [vmem:[%s391 + $0xe8] sm:$0xff]
      %v451 = vld [vmem:[%s391 + $0xf0] sm:$0xff]
      %v452 = vld [vmem:[%s391 + $0xf8] sm:$0xff]
      %v453 = vld [vmem:[%s397] sm:$0xff]
      %v454 = vld [vmem:[%s397 + $0x8] sm:$0xff]
      %v455 = vld [vmem:[%s397 + $0x10] sm:$0xff]
      %v456 = vld [vmem:[%s397 + $0x18] sm:$0xff]
      %v457 = vld [vmem:[%s397 + $0x20] sm:$0xff]
      %v458 = vld [vmem:[%s397 + $0x28] sm:$0xff]
      %v459 = vld [vmem:[%s397 + $0x30] sm:$0xff]
      %v460 = vld [vmem:[%s397 + $0x38] sm:$0xff]
      %v461 = vld [vmem:[%s397 + $0x40] sm:$0xff]
      %v462 = vld [vmem:[%s397 + $0x48] sm:$0xff]
      %v463 = vld [vmem:[%s397 + $0x50] sm:$0xff]
      %v464 = vld [vmem:[%s397 + $0x58] sm:$0xff]
      %v465 = vld [vmem:[%s397 + $0x60] sm:$0xff]
      %v466 = vld [vmem:[%s397 + $0x68] sm:$0xff]
      %v467 = vld [vmem:[%s397 + $0x70] sm:$0xff]
      %v468 = vld [vmem:[%s397 + $0x78] sm:$0xff]
      %v469 = vld [vmem:[%s397 + $0x80] sm:$0xff]
      %v470 = vld [vmem:[%s397 + $0x88] sm:$0xff]
      %v471 = vld [vmem:[%s397 + $0x90] sm:$0xff]
      %v472 = vld [vmem:[%s397 + $0x98] sm:$0xff]
      %v473 = vld [vmem:[%s397 + $0xa0] sm:$0xff]
      %v474 = vld [vmem:[%s397 + $0xa8] sm:$0xff]
      %v475 = vld [vmem:[%s397 + $0xb0] sm:$0xff]
      %v476 = vld [vmem:[%s397 + $0xb8] sm:$0xff]
      %v477 = vld [vmem:[%s397 + $0xc0] sm:$0xff]
      %v478 = vld [vmem:[%s397 + $0xc8] sm:$0xff]
      %v479 = vld [vmem:[%s397 + $0xd0] sm:$0xff]
      %v480 = vld [vmem:[%s397 + $0xd8] sm:$0xff]
      %v481 = vld [vmem:[%s397 + $0xe0] sm:$0xff]
      %v482 = vld [vmem:[%s397 + $0xe8] sm:$0xff]
      %v483 = vld [vmem:[%s397 + $0xf0] sm:$0xff]
      %v484 = vld [vmem:[%s397 + $0xf8] sm:$0xff]
      %v485 = vld [vmem:[%s403] sm:$0xff]
      %v486 = vld [vmem:[%s403 + $0x8] sm:$0xff]
      %v487 = vld [vmem:[%s403 + $0x10] sm:$0xff]
      %v488 = vld [vmem:[%s403 + $0x18] sm:$0xff]
      %v489 = vld [vmem:[%s403 + $0x20] sm:$0xff]
      %v490 = vld [vmem:[%s403 + $0x28] sm:$0xff]
      %v491 = vld [vmem:[%s403 + $0x30] sm:$0xff]
      %v492 = vld [vmem:[%s403 + $0x38] sm:$0xff]
      %v493 = vld [vmem:[%s403 + $0x40] sm:$0xff]
      %v494 = vld [vmem:[%s403 + $0x48] sm:$0xff]
      %v495 = vld [vmem:[%s403 + $0x50] sm:$0xff]
      %v496 = vld [vmem:[%s403 + $0x58] sm:$0xff]
      %v497 = vld [vmem:[%s403 + $0x60] sm:$0xff]
      %v498 = vld [vmem:[%s403 + $0x68] sm:$0xff]
      %v499 = vld [vmem:[%s403 + $0x70] sm:$0xff]
      %v500 = vld [vmem:[%s403 + $0x78] sm:$0xff]
      %v501 = vld [vmem:[%s403 + $0x80] sm:$0xff]
      %v502 = vld [vmem:[%s403 + $0x88] sm:$0xff]
      %v503 = vld [vmem:[%s403 + $0x90] sm:$0xff]
      %v504 = vld [vmem:[%s403 + $0x98] sm:$0xff]
      %v505 = vld [vmem:[%s403 + $0xa0] sm:$0xff]
      %v506 = vld [vmem:[%s403 + $0xa8] sm:$0xff]
      %v507 = vld [vmem:[%s403 + $0xb0] sm:$0xff]
      %v508 = vld [vmem:[%s403 + $0xb8] sm:$0xff]
      %v509 = vld [vmem:[%s403 + $0xc0] sm:$0xff]
      %v510 = vld [vmem:[%s403 + $0xc8] sm:$0xff]
      %v511 = vld [vmem:[%s403 + $0xd0] sm:$0xff]
      %v512 = vld [vmem:[%s403 + $0xd8] sm:$0xff]
      %v513 = vld [vmem:[%s403 + $0xe0] sm:$0xff]
      %v514 = vld [vmem:[%s403 + $0xe8] sm:$0xff]
      %v515 = vld [vmem:[%s403 + $0xf0] sm:$0xff]
      %v516 = vld [vmem:[%s403 + $0xf8] sm:$0xff]
      %v517 = vld [vmem:[%s409] sm:$0xff]
      %v518 = vld [vmem:[%s409 + $0x8] sm:$0xff]
      %v519 = vld [vmem:[%s409 + $0x10] sm:$0xff]
      %v520 = vld [vmem:[%s409 + $0x18] sm:$0xff]
      %v521 = vld [vmem:[%s409 + $0x20] sm:$0xff]
      %v522 = vld [vmem:[%s409 + $0x28] sm:$0xff]
      %v523 = vld [vmem:[%s409 + $0x30] sm:$0xff]
      %v524 = vld [vmem:[%s409 + $0x38] sm:$0xff]
      %v525 = vld [vmem:[%s409 + $0x40] sm:$0xff]
      %v526 = vld [vmem:[%s409 + $0x48] sm:$0xff]
      %v527 = vld [vmem:[%s409 + $0x50] sm:$0xff]
      %v528 = vld [vmem:[%s409 + $0x58] sm:$0xff]
      %v529 = vld [vmem:[%s409 + $0x60] sm:$0xff]
      %v530 = vld [vmem:[%s409 + $0x68] sm:$0xff]
      %v531 = vld [vmem:[%s409 + $0x70] sm:$0xff]
      %v532 = vld [vmem:[%s409 + $0x78] sm:$0xff]
      %v533 = vld [vmem:[%s409 + $0x80] sm:$0xff]
      %v534 = vld [vmem:[%s409 + $0x88] sm:$0xff]
      %v535 = vld [vmem:[%s409 + $0x90] sm:$0xff]
      %v536 = vld [vmem:[%s409 + $0x98] sm:$0xff]
      %v537 = vld [vmem:[%s409 + $0xa0] sm:$0xff]
      %v538 = vld [vmem:[%s409 + $0xa8] sm:$0xff]
      %v539 = vld [vmem:[%s409 + $0xb0] sm:$0xff]
      %v540 = vld [vmem:[%s409 + $0xb8] sm:$0xff]
      %v541 = vld [vmem:[%s409 + $0xc0] sm:$0xff]
      %v542 = vld [vmem:[%s409 + $0xc8] sm:$0xff]
      %v543 = vld [vmem:[%s409 + $0xd0] sm:$0xff]
      %v544 = vld [vmem:[%s409 + $0xd8] sm:$0xff]
      %v545 = vld [vmem:[%s409 + $0xe0] sm:$0xff]
      %v546 = vld [vmem:[%s409 + $0xe8] sm:$0xff]
      %v547 = vld [vmem:[%s409 + $0xf0] sm:$0xff]
      %v548 = vld [vmem:[%s409 + $0xf8] sm:$0xff]
      %v549 = vld [vmem:[%s415] sm:$0xff]
      %v550 = vld [vmem:[%s415 + $0x8] sm:$0xff]
      %v551 = vld [vmem:[%s415 + $0x10] sm:$0xff]
      %v552 = vld [vmem:[%s415 + $0x18] sm:$0xff]
      %v553 = vld [vmem:[%s415 + $0x20] sm:$0xff]
      %v554 = vld [vmem:[%s415 + $0x28] sm:$0xff]
      %v555 = vld [vmem:[%s415 + $0x30] sm:$0xff]
      %v556 = vld [vmem:[%s415 + $0x38] sm:$0xff]
      %v557 = vld [vmem:[%s415 + $0x40] sm:$0xff]
      %v558 = vld [vmem:[%s415 + $0x48] sm:$0xff]
      %v559 = vld [vmem:[%s415 + $0x50] sm:$0xff]
      %v560 = vld [vmem:[%s415 + $0x58] sm:$0xff]
      %v561 = vld [vmem:[%s415 + $0x60] sm:$0xff]
      %v562 = vld [vmem:[%s415 + $0x68] sm:$0xff]
      %v563 = vld [vmem:[%s415 + $0x70] sm:$0xff]
      %v564 = vld [vmem:[%s415 + $0x78] sm:$0xff]
      %v565 = vld [vmem:[%s415 + $0x80] sm:$0xff]
      %v566 = vld [vmem:[%s415 + $0x88] sm:$0xff]
      %v567 = vld [vmem:[%s415 + $0x90] sm:$0xff]
      %v568 = vld [vmem:[%s415 + $0x98] sm:$0xff]
      %v569 = vld [vmem:[%s415 + $0xa0] sm:$0xff]
      %v570 = vld [vmem:[%s415 + $0xa8] sm:$0xff]
      %v571 = vld [vmem:[%s415 + $0xb0] sm:$0xff]
      %v572 = vld [vmem:[%s415 + $0xb8] sm:$0xff]
      %v573 = vld [vmem:[%s415 + $0xc0] sm:$0xff]
      %v574 = vld [vmem:[%s415 + $0xc8] sm:$0xff]
      %v575 = vld [vmem:[%s415 + $0xd0] sm:$0xff]
      %v576 = vld [vmem:[%s415 + $0xd8] sm:$0xff]
      %v577 = vld [vmem:[%s415 + $0xe0] sm:$0xff]
      %v578 = vld [vmem:[%s415 + $0xe8] sm:$0xff]
      %v579 = vld [vmem:[%s415 + $0xf0] sm:$0xff]
      %v580 = vld [vmem:[%s415 + $0xf8] sm:$0xff]
      %v581 = vld [vmem:[%s8] sm:$0x1]
      %v582 = vld [vmem:[%s8 + $0x1] sm:$0x1]
      %v583 = vld [vmem:[%s8 + $0x2] sm:$0x1]
      %v584 = vld [vmem:[%s8 + $0x3] sm:$0x1]
      %586 = vset.pattern.permute.xlu0 0
      %587 = vperm.xlu0 %586, %v517
      %v588 = vpop.permute.xlu0 %587
      %591 = vset.pattern.permute.xlu0 0
      %592 = vperm.xlu0 %591, %v518
      %v593 = vpop.permute.xlu0 %592
      %596 = vset.pattern.permute.xlu0 0
      %597 = vperm.xlu0 %596, %v519
      %v598 = vpop.permute.xlu0 %597
      %601 = vset.pattern.permute.xlu0 0
      %602 = vperm.xlu0 %601, %v520
      %v603 = vpop.permute.xlu0 %602
      %606 = vset.pattern.permute.xlu0 0
      %607 = vperm.xlu0 %606, %v521
      %v608 = vpop.permute.xlu0 %607
      %611 = vset.pattern.permute.xlu0 0
      %612 = vperm.xlu0 %611, %v522
      %v613 = vpop.permute.xlu0 %612
      %616 = vset.pattern.permute.xlu0 0
      %617 = vperm.xlu0 %616, %v523
      %v618 = vpop.permute.xlu0 %617
      %621 = vset.pattern.permute.xlu0 0
      %622 = vperm.xlu0 %621, %v524
      %v623 = vpop.permute.xlu0 %622
      %626 = vset.pattern.permute.xlu0 0
      %627 = vperm.xlu0 %626, %v525
      %v628 = vpop.permute.xlu0 %627
      %631 = vset.pattern.permute.xlu0 0
      %632 = vperm.xlu0 %631, %v526
      %v633 = vpop.permute.xlu0 %632
      %636 = vset.pattern.permute.xlu0 0
      %637 = vperm.xlu0 %636, %v527
      %v638 = vpop.permute.xlu0 %637
      %641 = vset.pattern.permute.xlu0 0
      %642 = vperm.xlu0 %641, %v528
      %v643 = vpop.permute.xlu0 %642
      %646 = vset.pattern.permute.xlu0 0
      %647 = vperm.xlu0 %646, %v529
      %v648 = vpop.permute.xlu0 %647
      %651 = vset.pattern.permute.xlu0 0
      %652 = vperm.xlu0 %651, %v530
      %v653 = vpop.permute.xlu0 %652
      %656 = vset.pattern.permute.xlu0 0
      %657 = vperm.xlu0 %656, %v531
      %v658 = vpop.permute.xlu0 %657
      %661 = vset.pattern.permute.xlu0 0
      %662 = vperm.xlu0 %661, %v532
      %v663 = vpop.permute.xlu0 %662
      %666 = vset.pattern.permute.xlu0 0
      %667 = vperm.xlu0 %666, %v533
      %v668 = vpop.permute.xlu0 %667
      %671 = vset.pattern.permute.xlu0 0
      %672 = vperm.xlu0 %671, %v534
      %v673 = vpop.permute.xlu0 %672
      %676 = vset.pattern.permute.xlu0 0
      %677 = vperm.xlu0 %676, %v535
      %v678 = vpop.permute.xlu0 %677
      %681 = vset.pattern.permute.xlu0 0
      %682 = vperm.xlu0 %681, %v536
      %v683 = vpop.permute.xlu0 %682
      %686 = vset.pattern.permute.xlu0 0
      %687 = vperm.xlu0 %686, %v537
      %v688 = vpop.permute.xlu0 %687
      %691 = vset.pattern.permute.xlu0 0
      %692 = vperm.xlu0 %691, %v538
      %v693 = vpop.permute.xlu0 %692
      %696 = vset.pattern.permute.xlu0 0
      %697 = vperm.xlu0 %696, %v539
      %v698 = vpop.permute.xlu0 %697
      %701 = vset.pattern.permute.xlu0 0
      %702 = vperm.xlu0 %701, %v540
      %v703 = vpop.permute.xlu0 %702
      %706 = vset.pattern.permute.xlu0 0
      %707 = vperm.xlu0 %706, %v541
      %v708 = vpop.permute.xlu0 %707
      %711 = vset.pattern.permute.xlu0 0
      %712 = vperm.xlu0 %711, %v542
      %v713 = vpop.permute.xlu0 %712
      %716 = vset.pattern.permute.xlu0 0
      %717 = vperm.xlu0 %716, %v543
      %v718 = vpop.permute.xlu0 %717
      %721 = vset.pattern.permute.xlu0 0
      %722 = vperm.xlu0 %721, %v544
      %v723 = vpop.permute.xlu0 %722
      %726 = vset.pattern.permute.xlu0 0
      %727 = vperm.xlu0 %726, %v545
      %v728 = vpop.permute.xlu0 %727
      %731 = vset.pattern.permute.xlu0 0
      %732 = vperm.xlu0 %731, %v546
      %v733 = vpop.permute.xlu0 %732
      %736 = vset.pattern.permute.xlu0 0
      %737 = vperm.xlu0 %736, %v547
      %v738 = vpop.permute.xlu0 %737
      %741 = vset.pattern.permute.xlu0 0
      %742 = vperm.xlu0 %741, %v548
      %v743 = vpop.permute.xlu0 %742
      %v745 = vmul.f32 %v588, %v421
      %v746 = vmul.f32 %v593, %v422
      %v747 = vmul.f32 %v598, %v423
      %v748 = vmul.f32 %v603, %v424
      %v749 = vmul.f32 %v608, %v425
      %v750 = vmul.f32 %v613, %v426
      %v751 = vmul.f32 %v618, %v427
      %v752 = vmul.f32 %v623, %v428
      %v753 = vmul.f32 %v628, %v429
      %v754 = vmul.f32 %v633, %v430
      %v755 = vmul.f32 %v638, %v431
      %v756 = vmul.f32 %v643, %v432
      %v757 = vmul.f32 %v648, %v433
      %v758 = vmul.f32 %v653, %v434
      %v759 = vmul.f32 %v658, %v435
      %v760 = vmul.f32 %v663, %v436
      %v761 = vmul.f32 %v668, %v437
      %v762 = vmul.f32 %v673, %v438
      %v763 = vmul.f32 %v678, %v439
      %v764 = vmul.f32 %v683, %v440
      %v765 = vmul.f32 %v688, %v441
      %v766 = vmul.f32 %v693, %v442
      %v767 = vmul.f32 %v698, %v443
      %v768 = vmul.f32 %v703, %v444
      %v769 = vmul.f32 %v708, %v445
      %v770 = vmul.f32 %v713, %v446
      %v771 = vmul.f32 %v718, %v447
      %v772 = vmul.f32 %v723, %v448
      %v773 = vmul.f32 %v728, %v449
      %v774 = vmul.f32 %v733, %v450
      %v775 = vmul.f32 %v738, %v451
      %v776 = vmul.f32 %v743, %v452
      %778 = vset.pattern.permute.xlu0 0
      %779 = vperm.xlu0 %778, %v549
      %v780 = vpop.permute.xlu0 %779
      %783 = vset.pattern.permute.xlu0 0
      %784 = vperm.xlu0 %783, %v550
      %v785 = vpop.permute.xlu0 %784
      %788 = vset.pattern.permute.xlu0 0
      %789 = vperm.xlu0 %788, %v551
      %v790 = vpop.permute.xlu0 %789
      %793 = vset.pattern.permute.xlu0 0
      %794 = vperm.xlu0 %793, %v552
      %v795 = vpop.permute.xlu0 %794
      %798 = vset.pattern.permute.xlu0 0
      %799 = vperm.xlu0 %798, %v553
      %v800 = vpop.permute.xlu0 %799
      %803 = vset.pattern.permute.xlu0 0
      %804 = vperm.xlu0 %803, %v554
      %v805 = vpop.permute.xlu0 %804
      %808 = vset.pattern.permute.xlu0 0
      %809 = vperm.xlu0 %808, %v555
      %v810 = vpop.permute.xlu0 %809
      %813 = vset.pattern.permute.xlu0 0
      %814 = vperm.xlu0 %813, %v556
      %v815 = vpop.permute.xlu0 %814
      %818 = vset.pattern.permute.xlu0 0
      %819 = vperm.xlu0 %818, %v557
      %v820 = vpop.permute.xlu0 %819
      %823 = vset.pattern.permute.xlu0 0
      %824 = vperm.xlu0 %823, %v558
      %v825 = vpop.permute.xlu0 %824
      %828 = vset.pattern.permute.xlu0 0
      %829 = vperm.xlu0 %828, %v559
      %v830 = vpop.permute.xlu0 %829
      %833 = vset.pattern.permute.xlu0 0
      %834 = vperm.xlu0 %833, %v560
      %v835 = vpop.permute.xlu0 %834
      %838 = vset.pattern.permute.xlu0 0
      %839 = vperm.xlu0 %838, %v561
      %v840 = vpop.permute.xlu0 %839
      %843 = vset.pattern.permute.xlu0 0
      %844 = vperm.xlu0 %843, %v562
      %v845 = vpop.permute.xlu0 %844
      %848 = vset.pattern.permute.xlu0 0
      %849 = vperm.xlu0 %848, %v563
      %v850 = vpop.permute.xlu0 %849
      %853 = vset.pattern.permute.xlu0 0
      %854 = vperm.xlu0 %853, %v564
      %v855 = vpop.permute.xlu0 %854
      %858 = vset.pattern.permute.xlu0 0
      %859 = vperm.xlu0 %858, %v565
      %v860 = vpop.permute.xlu0 %859
      %863 = vset.pattern.permute.xlu0 0
      %864 = vperm.xlu0 %863, %v566
      %v865 = vpop.permute.xlu0 %864
      %868 = vset.pattern.permute.xlu0 0
      %869 = vperm.xlu0 %868, %v567
      %v870 = vpop.permute.xlu0 %869
      %873 = vset.pattern.permute.xlu0 0
      %874 = vperm.xlu0 %873, %v568
      %v875 = vpop.permute.xlu0 %874
      %878 = vset.pattern.permute.xlu0 0
      %879 = vperm.xlu0 %878, %v569
      %v880 = vpop.permute.xlu0 %879
      %883 = vset.pattern.permute.xlu0 0
      %884 = vperm.xlu0 %883, %v570
      %v885 = vpop.permute.xlu0 %884
      %888 = vset.pattern.permute.xlu0 0
      %889 = vperm.xlu0 %888, %v571
      %v890 = vpop.permute.xlu0 %889
      %893 = vset.pattern.permute.xlu0 0
      %894 = vperm.xlu0 %893, %v572
      %v895 = vpop.permute.xlu0 %894
      %898 = vset.pattern.permute.xlu0 0
      %899 = vperm.xlu0 %898, %v573
      %v900 = vpop.permute.xlu0 %899
      %903 = vset.pattern.permute.xlu0 0
      %904 = vperm.xlu0 %903, %v574
      %v905 = vpop.permute.xlu0 %904
      %908 = vset.pattern.permute.xlu0 0
      %909 = vperm.xlu0 %908, %v575
      %v910 = vpop.permute.xlu0 %909
      %913 = vset.pattern.permute.xlu0 0
      %914 = vperm.xlu0 %913, %v576
      %v915 = vpop.permute.xlu0 %914
      %918 = vset.pattern.permute.xlu0 0
      %919 = vperm.xlu0 %918, %v577
      %v920 = vpop.permute.xlu0 %919
      %923 = vset.pattern.permute.xlu0 0
      %924 = vperm.xlu0 %923, %v578
      %v925 = vpop.permute.xlu0 %924
      %928 = vset.pattern.permute.xlu0 0
      %929 = vperm.xlu0 %928, %v579
      %v930 = vpop.permute.xlu0 %929
      %933 = vset.pattern.permute.xlu0 0
      %934 = vperm.xlu0 %933, %v580
      %v935 = vpop.permute.xlu0 %934
      %v937 = vmul.f32 %v780, %v453
      %v938 = vmul.f32 %v785, %v454
      %v939 = vmul.f32 %v790, %v455
      %v940 = vmul.f32 %v795, %v456
      %v941 = vmul.f32 %v800, %v457
      %v942 = vmul.f32 %v805, %v458
      %v943 = vmul.f32 %v810, %v459
      %v944 = vmul.f32 %v815, %v460
      %v945 = vmul.f32 %v820, %v461
      %v946 = vmul.f32 %v825, %v462
      %v947 = vmul.f32 %v830, %v463
      %v948 = vmul.f32 %v835, %v464
      %v949 = vmul.f32 %v840, %v465
      %v950 = vmul.f32 %v845, %v466
      %v951 = vmul.f32 %v850, %v467
      %v952 = vmul.f32 %v855, %v468
      %v953 = vmul.f32 %v860, %v469
      %v954 = vmul.f32 %v865, %v470
      %v955 = vmul.f32 %v870, %v471
      %v956 = vmul.f32 %v875, %v472
      %v957 = vmul.f32 %v880, %v473
      %v958 = vmul.f32 %v885, %v474
      %v959 = vmul.f32 %v890, %v475
      %v960 = vmul.f32 %v895, %v476
      %v961 = vmul.f32 %v900, %v477
      %v962 = vmul.f32 %v905, %v478
      %v963 = vmul.f32 %v910, %v479
      %v964 = vmul.f32 %v915, %v480
      %v965 = vmul.f32 %v920, %v481
      %v966 = vmul.f32 %v925, %v482
      %v967 = vmul.f32 %v930, %v483
      %v968 = vmul.f32 %v935, %v484
      %v969 = vadd.f32 %v745, %v937
      %v970 = vadd.f32 %v746, %v938
      %v971 = vadd.f32 %v747, %v939
      %v972 = vadd.f32 %v748, %v940
      %v973 = vadd.f32 %v749, %v941
      %v974 = vadd.f32 %v750, %v942
      %v975 = vadd.f32 %v751, %v943
      %v976 = vadd.f32 %v752, %v944
      %v977 = vadd.f32 %v753, %v945
      %v978 = vadd.f32 %v754, %v946
      %v979 = vadd.f32 %v755, %v947
      %v980 = vadd.f32 %v756, %v948
      %v981 = vadd.f32 %v757, %v949
      %v982 = vadd.f32 %v758, %v950
      %v983 = vadd.f32 %v759, %v951
      %v984 = vadd.f32 %v760, %v952
      %v985 = vadd.f32 %v761, %v953
      %v986 = vadd.f32 %v762, %v954
      %v987 = vadd.f32 %v763, %v955
      %v988 = vadd.f32 %v764, %v956
      %v989 = vadd.f32 %v765, %v957
      %v990 = vadd.f32 %v766, %v958
      %v991 = vadd.f32 %v767, %v959
      %v992 = vadd.f32 %v768, %v960
      %v993 = vadd.f32 %v769, %v961
      %v994 = vadd.f32 %v770, %v962
      %v995 = vadd.f32 %v771, %v963
      %v996 = vadd.f32 %v772, %v964
      %v997 = vadd.f32 %v773, %v965
      %v998 = vadd.f32 %v774, %v966
      %v999 = vadd.f32 %v775, %v967
      %v1000 = vadd.f32 %v776, %v968
      %1002 = vset.pattern.permute.xlu0 0
      %1003 = vperm.xlu0 %1002, %v485
      %v1004 = vpop.permute.xlu0 %1003
      %1007 = vset.pattern.permute.xlu0 0
      %1008 = vperm.xlu0 %1007, %v486
      %v1009 = vpop.permute.xlu0 %1008
      %1012 = vset.pattern.permute.xlu0 0
      %1013 = vperm.xlu0 %1012, %v487
      %v1014 = vpop.permute.xlu0 %1013
      %1017 = vset.pattern.permute.xlu0 0
      %1018 = vperm.xlu0 %1017, %v488
      %v1019 = vpop.permute.xlu0 %1018
      %1022 = vset.pattern.permute.xlu0 0
      %1023 = vperm.xlu0 %1022, %v489
      %v1024 = vpop.permute.xlu0 %1023
      %1027 = vset.pattern.permute.xlu0 0
      %1028 = vperm.xlu0 %1027, %v490
      %v1029 = vpop.permute.xlu0 %1028
      %1032 = vset.pattern.permute.xlu0 0
      %1033 = vperm.xlu0 %1032, %v491
      %v1034 = vpop.permute.xlu0 %1033
      %1037 = vset.pattern.permute.xlu0 0
      %1038 = vperm.xlu0 %1037, %v492
      %v1039 = vpop.permute.xlu0 %1038
      %1042 = vset.pattern.permute.xlu0 0
      %1043 = vperm.xlu0 %1042, %v493
      %v1044 = vpop.permute.xlu0 %1043
      %1047 = vset.pattern.permute.xlu0 0
      %1048 = vperm.xlu0 %1047, %v494
      %v1049 = vpop.permute.xlu0 %1048
      %1052 = vset.pattern.permute.xlu0 0
      %1053 = vperm.xlu0 %1052, %v495
      %v1054 = vpop.permute.xlu0 %1053
      %1057 = vset.pattern.permute.xlu0 0
      %1058 = vperm.xlu0 %1057, %v496
      %v1059 = vpop.permute.xlu0 %1058
      %1062 = vset.pattern.permute.xlu0 0
      %1063 = vperm.xlu0 %1062, %v497
      %v1064 = vpop.permute.xlu0 %1063
      %1067 = vset.pattern.permute.xlu0 0
      %1068 = vperm.xlu0 %1067, %v498
      %v1069 = vpop.permute.xlu0 %1068
      %1072 = vset.pattern.permute.xlu0 0
      %1073 = vperm.xlu0 %1072, %v499
      %v1074 = vpop.permute.xlu0 %1073
      %1077 = vset.pattern.permute.xlu0 0
      %1078 = vperm.xlu0 %1077, %v500
      %v1079 = vpop.permute.xlu0 %1078
      %1082 = vset.pattern.permute.xlu0 0
      %1083 = vperm.xlu0 %1082, %v501
      %v1084 = vpop.permute.xlu0 %1083
      %1087 = vset.pattern.permute.xlu0 0
      %1088 = vperm.xlu0 %1087, %v502
      %v1089 = vpop.permute.xlu0 %1088
      %1092 = vset.pattern.permute.xlu0 0
      %1093 = vperm.xlu0 %1092, %v503
      %v1094 = vpop.permute.xlu0 %1093
      %1097 = vset.pattern.permute.xlu0 0
      %1098 = vperm.xlu0 %1097, %v504
      %v1099 = vpop.permute.xlu0 %1098
      %1102 = vset.pattern.permute.xlu0 0
      %1103 = vperm.xlu0 %1102, %v505
      %v1104 = vpop.permute.xlu0 %1103
      %1107 = vset.pattern.permute.xlu0 0
      %1108 = vperm.xlu0 %1107, %v506
      %v1109 = vpop.permute.xlu0 %1108
      %1112 = vset.pattern.permute.xlu0 0
      %1113 = vperm.xlu0 %1112, %v507
      %v1114 = vpop.permute.xlu0 %1113
      %1117 = vset.pattern.permute.xlu0 0
      %1118 = vperm.xlu0 %1117, %v508
      %v1119 = vpop.permute.xlu0 %1118
      %1122 = vset.pattern.permute.xlu0 0
      %1123 = vperm.xlu0 %1122, %v509
      %v1124 = vpop.permute.xlu0 %1123
      %1127 = vset.pattern.permute.xlu0 0
      %1128 = vperm.xlu0 %1127, %v510
      %v1129 = vpop.permute.xlu0 %1128
      %1132 = vset.pattern.permute.xlu0 0
      %1133 = vperm.xlu0 %1132, %v511
      %v1134 = vpop.permute.xlu0 %1133
      %1137 = vset.pattern.permute.xlu0 0
      %1138 = vperm.xlu0 %1137, %v512
      %v1139 = vpop.permute.xlu0 %1138
      %1142 = vset.pattern.permute.xlu0 0
      %1143 = vperm.xlu0 %1142, %v513
      %v1144 = vpop.permute.xlu0 %1143
      %1147 = vset.pattern.permute.xlu0 0
      %1148 = vperm.xlu0 %1147, %v514
      %v1149 = vpop.permute.xlu0 %1148
      %1152 = vset.pattern.permute.xlu0 0
      %1153 = vperm.xlu0 %1152, %v515
      %v1154 = vpop.permute.xlu0 %1153
      %1157 = vset.pattern.permute.xlu0 0
      %1158 = vperm.xlu0 %1157, %v516
      %v1159 = vpop.permute.xlu0 %1158
      %v1161 = vlaneseq
      %v1162 = vshrl.u32 %v1161, 7
      %v1163 = vsub.s32 0, %v1162
      %v1164 = vrot.slane %v583, %v1163
      %v1165 = vmul.f32 %v1004, %v1164
      %v1166 = vmul.f32 %v1009, %v1164
      %v1167 = vmul.f32 %v1014, %v1164
      %v1168 = vmul.f32 %v1019, %v1164
      %v1169 = vmul.f32 %v1024, %v1164
      %v1170 = vmul.f32 %v1029, %v1164
      %v1171 = vmul.f32 %v1034, %v1164
      %v1172 = vmul.f32 %v1039, %v1164
      %v1173 = vmul.f32 %v1044, %v1164
      %v1174 = vmul.f32 %v1049, %v1164
      %v1175 = vmul.f32 %v1054, %v1164
      %v1176 = vmul.f32 %v1059, %v1164
      %v1177 = vmul.f32 %v1064, %v1164
      %v1178 = vmul.f32 %v1069, %v1164
      %v1179 = vmul.f32 %v1074, %v1164
      %v1180 = vmul.f32 %v1079, %v1164
      %v1181 = vmul.f32 %v1084, %v1164
      %v1182 = vmul.f32 %v1089, %v1164
      %v1183 = vmul.f32 %v1094, %v1164
      %v1184 = vmul.f32 %v1099, %v1164
      %v1185 = vmul.f32 %v1104, %v1164
      %v1186 = vmul.f32 %v1109, %v1164
      %v1187 = vmul.f32 %v1114, %v1164
      %v1188 = vmul.f32 %v1119, %v1164
      %v1189 = vmul.f32 %v1124, %v1164
      %v1190 = vmul.f32 %v1129, %v1164
      %v1191 = vmul.f32 %v1134, %v1164
      %v1192 = vmul.f32 %v1139, %v1164
      %v1193 = vmul.f32 %v1144, %v1164
      %v1194 = vmul.f32 %v1149, %v1164
      %v1195 = vmul.f32 %v1154, %v1164
      %v1196 = vmul.f32 %v1159, %v1164
      %v1197 = vlaneseq
      %v1198 = vshrl.u32 %v1197, 7
      %v1199 = vsub.s32 0, %v1198
      %v1200 = vrot.slane %v584, %v1199
      %v1201 = vadd.f32 %v1165, %v1200
      %v1202 = vadd.f32 %v1166, %v1200
      %v1203 = vadd.f32 %v1167, %v1200
      %v1204 = vadd.f32 %v1168, %v1200
      %v1205 = vadd.f32 %v1169, %v1200
      %v1206 = vadd.f32 %v1170, %v1200
      %v1207 = vadd.f32 %v1171, %v1200
      %v1208 = vadd.f32 %v1172, %v1200
      %v1209 = vadd.f32 %v1173, %v1200
      %v1210 = vadd.f32 %v1174, %v1200
      %v1211 = vadd.f32 %v1175, %v1200
      %v1212 = vadd.f32 %v1176, %v1200
      %v1213 = vadd.f32 %v1177, %v1200
      %v1214 = vadd.f32 %v1178, %v1200
      %v1215 = vadd.f32 %v1179, %v1200
      %v1216 = vadd.f32 %v1180, %v1200
      %v1217 = vadd.f32 %v1181, %v1200
      %v1218 = vadd.f32 %v1182, %v1200
      %v1219 = vadd.f32 %v1183, %v1200
      %v1220 = vadd.f32 %v1184, %v1200
      %v1221 = vadd.f32 %v1185, %v1200
      %v1222 = vadd.f32 %v1186, %v1200
      %v1223 = vadd.f32 %v1187, %v1200
      %v1224 = vadd.f32 %v1188, %v1200
      %v1225 = vadd.f32 %v1189, %v1200
      %v1226 = vadd.f32 %v1190, %v1200
      %v1227 = vadd.f32 %v1191, %v1200
      %v1228 = vadd.f32 %v1192, %v1200
      %v1229 = vadd.f32 %v1193, %v1200
      %v1230 = vadd.f32 %v1194, %v1200
      %v1231 = vadd.f32 %v1195, %v1200
      %v1232 = vadd.f32 %v1196, %v1200
      %v1233 = vand.u32 2147483647, %v1201
      %vm1234 = vcmp.le.f32.partialorder %v1233, 0.7853982
      %vm1235 = vcmp.lt.s32.totalorder %v1201, 0
      %v1236 = vand.u32 %v1201, 2139095040
      %v1237 = vshrl.u32 %v1236, 23
      %v1238 = vsub.s32 %v1237, 127
      %v1239 = vand.u32 2147483647, %v1201
      %v1240 = vand.u32 %v1239, 8388607
      %v1241 = vor.u32 %v1240, 8388608
      %v1242 = vsub.s32 0, %v1241
      %v1243 = vadd.s32 %v1238, 1
      %vm1244 = vcmp.gt.s32.totalorder %v1243, 0
      %v1245 = vsel %vm1244, %v1243, 0
      %v1246 = vshrl.u32 %v1245, 5
      %v1247 = vand.u32 %v1245, 31
      %v1248 = vsub.s32 32, %v1247
      %v1249 = vshrl.u32 683565275, %v1248
      %v1250 = vshll.u32 683565275, %v1247
      %v1251 = vshrl.u32 2475754826, %v1248
      %v1252 = vor.u32 %v1250, %v1251
      %v1253 = vshll.u32 2475754826, %v1247
      %v1254 = vshrl.u32 2131351028, %v1248
      %v1255 = vor.u32 %v1253, %v1254
      %v1256 = vshll.u32 2131351028, %v1247
      %v1257 = vshrl.u32 2102212464, %v1248
      %v1258 = vor.u32 %v1256, %v1257
      %v1259 = vshll.u32 2102212464, %v1247
      %v1260 = vshrl.u32 920167782, %v1248
      %v1261 = vor.u32 %v1259, %v1260
      %v1262 = vshll.u32 920167782, %v1247
      %v1263 = vshrl.u32 1326507024, %v1248
      %v1264 = vor.u32 %v1262, %v1263
      %vm1265 = vcmp.lt.s32.totalorder %v1246, 1
      %vm1266 = vcmp.lt.s32.totalorder %v1246, 2
      %vm1267 = vcmp.lt.s32.totalorder %v1246, 3
      %vm1268 = vcmp.lt.s32.totalorder %v1246, 4
      %v1269 = vsel %vm1265, %v1249, %v1252
      %v1270 = vsel %vm1268, %v1258, 2102212464
      %v1271 = vsel %vm1267, %v1255, %v1270
      %v1272 = vsel %vm1266, %v1269, %v1271
      %v1273 = vsel %vm1265, %v1252, %v1255
      %v1274 = vsel %vm1268, %v1261, 920167782
      %v1275 = vsel %vm1267, %v1258, %v1274
      %v1276 = vsel %vm1266, %v1273, %v1275
      %v1277 = vsel %vm1265, %v1255, %v1258
      %v1278 = vsel %vm1268, %v1264, 1326507024
      %v1279 = vsel %vm1267, %v1261, %v1278
      %v1280 = vsel %vm1266, %v1277, %v1279
      %v1281 = vshll.u32 %v1241, 8
      %v1282 = vmul.u32.u64.compose %v1281, %v1280
      %v1283 = vextract.low.u32 %v1282
      %v1284 = vextract.high.u32 %v1282
      %v1285 = vmul.u32.u64.compose %v1281, %v1276
      %v1286 = vextract.low.u32 %v1285
      %v1287 = vextract.high.u32 %v1285
      %v1288 = vmul.u32 %v1281, %v1272
      %v1289 = vadd.s32 %v1284, %v1286
      %vm1290 = vc.u32 %v1284, %v1286
      %v1291 = vadd.s32 %v1287, 1
      %v1292 = vsel %vm1290, %v1291, %v1287
      %v1293 = vadd.s32 %v1288, %v1292
      %v1294 = vadd.s32 %v1293, 536870912
      %v1295 = vshrl.u32 %v1294, 30
      %v1296 = vshll.u32 %v1295, 30
      %v1297 = vsub.s32 %v1293, %v1296
      %vm1298 = vcmp.lt.s32.totalorder %v1297, 0
      %v1299 = vsub.s32 0, %v1297
      %v1300 = vsel %vm1298, %v1299, %v1297
      %v1301 = vclz %v1300
      %v1302 = vsub.s32 %v1301, 2
      %vm1303 = vcmp.gt.s32.totalorder 0, %v1302
      %v1304 = vsel %vm1303, 0, %v1302
      %v1305 = vsub.s32 32, %v1304
      %v1306 = vshll.u32 %v1297, %v1304
      %v1307 = vshrl.u32 %v1289, %v1305
      %v1308 = vor.u32 %v1306, %v1307
      %v1309 = vsub.s32 4294967266, %v1304
      %v1310 = vadd.s32 %v1309, 127
      %v1311 = vshll.u32 %v1310, 23
      %v1312 = vor.u32 4788187, %v1311
      %v1313 = vand.u32 2147483647, %v1312
      %v1315 = vcvt.s32.f32 %v1308
      %v1316 = vmul.f32 %v1315, %v1313
      %v1317 = vxor.u32 %v1316, 2147483648
      %v1318 = vsel %vm1235, %v1317, %v1316
      %v1319 = vsub.s32 4, %v1295
      %v1320 = vsel %vm1235, %v1319, %v1295
      %v1321 = vsel %vm1234, %v1201, %v1318
      %v1322 = vsel %vm1234, 0, %v1320
      %v1323 = vcosq.f32.pop %v1321
      %v1324 = vsinq.f32.pop %v1321
      %vm1325 = vweird.f32 %v1201
      %v1326 = vadd.s32 %v1322, 3
      %v1327 = vand.u32 %v1326, 3
      %vm1328 = vcmp.lt.s32.totalorder %v1327, 2
      %vm1329 = vcmp.eq.s32.totalorder %v1327, 0
      %v1330 = vxor.u32 %v1324, 2147483648
      %v1331 = vsel %vm1329, %v1323, %v1330
      %vm1332 = vcmp.eq.s32.totalorder %v1327, 2
      %v1333 = vxor.u32 %v1323, 2147483648
      %v1334 = vsel %vm1332, %v1333, %v1324
      %v1335 = vsel %vm1328, %v1331, %v1334
      %v1336 = vsel %vm1325, nan, %v1335
      %v1337 = vand.u32 2147483647, %v1202
      %vm1338 = vcmp.le.f32.partialorder %v1337, 0.7853982
      %vm1339 = vcmp.lt.s32.totalorder %v1202, 0
      %v1340 = vand.u32 %v1202, 2139095040
      %v1341 = vshrl.u32 %v1340, 23
      %v1342 = vsub.s32 %v1341, 127
      %v1343 = vand.u32 2147483647, %v1202
      %v1344 = vand.u32 %v1343, 8388607
      %v1345 = vor.u32 %v1344, 8388608
      %v1346 = vsub.s32 0, %v1345
      %v1347 = vadd.s32 %v1342, 1
      %vm1348 = vcmp.gt.s32.totalorder %v1347, 0
      %v1349 = vsel %vm1348, %v1347, 0
      %v1350 = vshrl.u32 %v1349, 5
      %v1351 = vand.u32 %v1349, 31
      %v1352 = vsub.s32 32, %v1351
      %v1353 = vshrl.u32 683565275, %v1352
      %v1354 = vshll.u32 683565275, %v1351
      %v1355 = vshrl.u32 2475754826, %v1352
      %v1356 = vor.u32 %v1354, %v1355
      %v1357 = vshll.u32 2475754826, %v1351
      %v1358 = vshrl.u32 2131351028, %v1352
      %v1359 = vor.u32 %v1357, %v1358
      %v1360 = vshll.u32 2131351028, %v1351
      %v1361 = vshrl.u32 2102212464, %v1352
      %v1362 = vor.u32 %v1360, %v1361
      %v1363 = vshll.u32 2102212464, %v1351
      %v1364 = vshrl.u32 920167782, %v1352
      %v1365 = vor.u32 %v1363, %v1364
      %v1366 = vshll.u32 920167782, %v1351
      %v1367 = vshrl.u32 1326507024, %v1352
      %v1368 = vor.u32 %v1366, %v1367
      %vm1369 = vcmp.lt.s32.totalorder %v1350, 1
      %vm1370 = vcmp.lt.s32.totalorder %v1350, 2
      %vm1371 = vcmp.lt.s32.totalorder %v1350, 3
      %vm1372 = vcmp.lt.s32.totalorder %v1350, 4
      %v1373 = vsel %vm1369, %v1353, %v1356
      %v1374 = vsel %vm1372, %v1362, 2102212464
      %v1375 = vsel %vm1371, %v1359, %v1374
      %v1376 = vsel %vm1370, %v1373, %v1375
      %v1377 = vsel %vm1369, %v1356, %v1359
      %v1378 = vsel %vm1372, %v1365, 920167782
      %v1379 = vsel %vm1371, %v1362, %v1378
      %v1380 = vsel %vm1370, %v1377, %v1379
      %v1381 = vsel %vm1369, %v1359, %v1362
      %v1382 = vsel %vm1372, %v1368, 1326507024
      %v1383 = vsel %vm1371, %v1365, %v1382
      %v1384 = vsel %vm1370, %v1381, %v1383
      %v1385 = vshll.u32 %v1345, 8
      %v1386 = vmul.u32.u64.compose %v1385, %v1384
      %v1387 = vextract.low.u32 %v1386
      %v1388 = vextract.high.u32 %v1386
      %v1389 = vmul.u32.u64.compose %v1385, %v1380
      %v1390 = vextract.low.u32 %v1389
      %v1391 = vextract.high.u32 %v1389
      %v1392 = vmul.u32 %v1385, %v1376
      %v1393 = vadd.s32 %v1388, %v1390
      %vm1394 = vc.u32 %v1388, %v1390
      %v1395 = vadd.s32 %v1391, 1
      %v1396 = vsel %vm1394, %v1395, %v1391
      %v1397 = vadd.s32 %v1392, %v1396
      %v1398 = vadd.s32 %v1397, 536870912
      %v1399 = vshrl.u32 %v1398, 30
      %v1400 = vshll.u32 %v1399, 30
      %v1401 = vsub.s32 %v1397, %v1400
      %vm1402 = vcmp.lt.s32.totalorder %v1401, 0
      %v1403 = vsub.s32 0, %v1401
      %v1404 = vsel %vm1402, %v1403, %v1401
      %v1405 = vclz %v1404
      %v1406 = vsub.s32 %v1405, 2
      %vm1407 = vcmp.gt.s32.totalorder 0, %v1406
      %v1408 = vsel %vm1407, 0, %v1406
      %v1409 = vsub.s32 32, %v1408
      %v1410 = vshll.u32 %v1401, %v1408
      %v1411 = vshrl.u32 %v1393, %v1409
      %v1412 = vor.u32 %v1410, %v1411
      %v1413 = vsub.s32 4294967266, %v1408
      %v1414 = vadd.s32 %v1413, 127
      %v1415 = vshll.u32 %v1414, 23
      %v1416 = vor.u32 4788187, %v1415
      %v1417 = vand.u32 2147483647, %v1416
      %v1419 = vcvt.s32.f32 %v1412
      %v1420 = vmul.f32 %v1419, %v1417
      %v1421 = vxor.u32 %v1420, 2147483648
      %v1422 = vsel %vm1339, %v1421, %v1420
      %v1423 = vsub.s32 4, %v1399
      %v1424 = vsel %vm1339, %v1423, %v1399
      %v1425 = vsel %vm1338, %v1202, %v1422
      %v1426 = vsel %vm1338, 0, %v1424
      %v1427 = vcosq.f32.pop %v1425
      %v1428 = vsinq.f32.pop %v1425
      %vm1429 = vweird.f32 %v1202
      %v1430 = vadd.s32 %v1426, 3
      %v1431 = vand.u32 %v1430, 3
      %vm1432 = vcmp.lt.s32.totalorder %v1431, 2
      %vm1433 = vcmp.eq.s32.totalorder %v1431, 0
      %v1434 = vxor.u32 %v1428, 2147483648
      %v1435 = vsel %vm1433, %v1427, %v1434
      %vm1436 = vcmp.eq.s32.totalorder %v1431, 2
      %v1437 = vxor.u32 %v1427, 2147483648
      %v1438 = vsel %vm1436, %v1437, %v1428
      %v1439 = vsel %vm1432, %v1435, %v1438
      %v1440 = vsel %vm1429, nan, %v1439
      %v1441 = vand.u32 2147483647, %v1203
      %vm1442 = vcmp.le.f32.partialorder %v1441, 0.7853982
      %vm1443 = vcmp.lt.s32.totalorder %v1203, 0
      %v1444 = vand.u32 %v1203, 2139095040
      %v1445 = vshrl.u32 %v1444, 23
      %v1446 = vsub.s32 %v1445, 127
      %v1447 = vand.u32 2147483647, %v1203
      %v1448 = vand.u32 %v1447, 8388607
      %v1449 = vor.u32 %v1448, 8388608
      %v1450 = vsub.s32 0, %v1449
      %v1451 = vadd.s32 %v1446, 1
      %vm1452 = vcmp.gt.s32.totalorder %v1451, 0
      %v1453 = vsel %vm1452, %v1451, 0
      %v1454 = vshrl.u32 %v1453, 5
      %v1455 = vand.u32 %v1453, 31
      %v1456 = vsub.s32 32, %v1455
      %v1457 = vshrl.u32 683565275, %v1456
      %v1458 = vshll.u32 683565275, %v1455
      %v1459 = vshrl.u32 2475754826, %v1456
      %v1460 = vor.u32 %v1458, %v1459
      %v1461 = vshll.u32 2475754826, %v1455
      %v1462 = vshrl.u32 2131351028, %v1456
      %v1463 = vor.u32 %v1461, %v1462
      %v1464 = vshll.u32 2131351028, %v1455
      %v1465 = vshrl.u32 2102212464, %v1456
      %v1466 = vor.u32 %v1464, %v1465
      %v1467 = vshll.u32 2102212464, %v1455
      %v1468 = vshrl.u32 920167782, %v1456
      %v1469 = vor.u32 %v1467, %v1468
      %v1470 = vshll.u32 920167782, %v1455
      %v1471 = vshrl.u32 1326507024, %v1456
      %v1472 = vor.u32 %v1470, %v1471
      %vm1473 = vcmp.lt.s32.totalorder %v1454, 1
      %vm1474 = vcmp.lt.s32.totalorder %v1454, 2
      %vm1475 = vcmp.lt.s32.totalorder %v1454, 3
      %vm1476 = vcmp.lt.s32.totalorder %v1454, 4
      %v1477 = vsel %vm1473, %v1457, %v1460
      %v1478 = vsel %vm1476, %v1466, 2102212464
      %v1479 = vsel %vm1475, %v1463, %v1478
      %v1480 = vsel %vm1474, %v1477, %v1479
      %v1481 = vsel %vm1473, %v1460, %v1463
      %v1482 = vsel %vm1476, %v1469, 920167782
      %v1483 = vsel %vm1475, %v1466, %v1482
      %v1484 = vsel %vm1474, %v1481, %v1483
      %v1485 = vsel %vm1473, %v1463, %v1466
      %v1486 = vsel %vm1476, %v1472, 1326507024
      %v1487 = vsel %vm1475, %v1469, %v1486
      %v1488 = vsel %vm1474, %v1485, %v1487
      %v1489 = vshll.u32 %v1449, 8
      %v1490 = vmul.u32.u64.compose %v1489, %v1488
      %v1491 = vextract.low.u32 %v1490
      %v1492 = vextract.high.u32 %v1490
      %v1493 = vmul.u32.u64.compose %v1489, %v1484
      %v1494 = vextract.low.u32 %v1493
      %v1495 = vextract.high.u32 %v1493
      %v1496 = vmul.u32 %v1489, %v1480
      %v1497 = vadd.s32 %v1492, %v1494
      %vm1498 = vc.u32 %v1492, %v1494
      %v1499 = vadd.s32 %v1495, 1
      %v1500 = vsel %vm1498, %v1499, %v1495
      %v1501 = vadd.s32 %v1496, %v1500
      %v1502 = vadd.s32 %v1501, 536870912
      %v1503 = vshrl.u32 %v1502, 30
      %v1504 = vshll.u32 %v1503, 30
      %v1505 = vsub.s32 %v1501, %v1504
      %vm1506 = vcmp.lt.s32.totalorder %v1505, 0
      %v1507 = vsub.s32 0, %v1505
      %v1508 = vsel %vm1506, %v1507, %v1505
      %v1509 = vclz %v1508
      %v1510 = vsub.s32 %v1509, 2
      %vm1511 = vcmp.gt.s32.totalorder 0, %v1510
      %v1512 = vsel %vm1511, 0, %v1510
      %v1513 = vsub.s32 32, %v1512
      %v1514 = vshll.u32 %v1505, %v1512
      %v1515 = vshrl.u32 %v1497, %v1513
      %v1516 = vor.u32 %v1514, %v1515
      %v1517 = vsub.s32 4294967266, %v1512
      %v1518 = vadd.s32 %v1517, 127
      %v1519 = vshll.u32 %v1518, 23
      %v1520 = vor.u32 4788187, %v1519
      %v1521 = vand.u32 2147483647, %v1520
      %v1523 = vcvt.s32.f32 %v1516
      %v1524 = vmul.f32 %v1523, %v1521
      %v1525 = vxor.u32 %v1524, 2147483648
      %v1526 = vsel %vm1443, %v1525, %v1524
      %v1527 = vsub.s32 4, %v1503
      %v1528 = vsel %vm1443, %v1527, %v1503
      %v1529 = vsel %vm1442, %v1203, %v1526
      %v1530 = vsel %vm1442, 0, %v1528
      %v1531 = vcosq.f32.pop %v1529
      %v1532 = vsinq.f32.pop %v1529
      %vm1533 = vweird.f32 %v1203
      %v1534 = vadd.s32 %v1530, 3
      %v1535 = vand.u32 %v1534, 3
      %vm1536 = vcmp.lt.s32.totalorder %v1535, 2
      %vm1537 = vcmp.eq.s32.totalorder %v1535, 0
      %v1538 = vxor.u32 %v1532, 2147483648
      %v1539 = vsel %vm1537, %v1531, %v1538
      %vm1540 = vcmp.eq.s32.totalorder %v1535, 2
      %v1541 = vxor.u32 %v1531, 2147483648
      %v1542 = vsel %vm1540, %v1541, %v1532
      %v1543 = vsel %vm1536, %v1539, %v1542
      %v1544 = vsel %vm1533, nan, %v1543
      %v1545 = vand.u32 2147483647, %v1204
      %vm1546 = vcmp.le.f32.partialorder %v1545, 0.7853982
      %vm1547 = vcmp.lt.s32.totalorder %v1204, 0
      %v1548 = vand.u32 %v1204, 2139095040
      %v1549 = vshrl.u32 %v1548, 23
      %v1550 = vsub.s32 %v1549, 127
      %v1551 = vand.u32 2147483647, %v1204
      %v1552 = vand.u32 %v1551, 8388607
      %v1553 = vor.u32 %v1552, 8388608
      %v1554 = vsub.s32 0, %v1553
      %v1555 = vadd.s32 %v1550, 1
      %vm1556 = vcmp.gt.s32.totalorder %v1555, 0
      %v1557 = vsel %vm1556, %v1555, 0
      %v1558 = vshrl.u32 %v1557, 5
      %v1559 = vand.u32 %v1557, 31
      %v1560 = vsub.s32 32, %v1559
      %v1561 = vshrl.u32 683565275, %v1560
      %v1562 = vshll.u32 683565275, %v1559
      %v1563 = vshrl.u32 2475754826, %v1560
      %v1564 = vor.u32 %v1562, %v1563
      %v1565 = vshll.u32 2475754826, %v1559
      %v1566 = vshrl.u32 2131351028, %v1560
      %v1567 = vor.u32 %v1565, %v1566
      %v1568 = vshll.u32 2131351028, %v1559
      %v1569 = vshrl.u32 2102212464, %v1560
      %v1570 = vor.u32 %v1568, %v1569
      %v1571 = vshll.u32 2102212464, %v1559
      %v1572 = vshrl.u32 920167782, %v1560
      %v1573 = vor.u32 %v1571, %v1572
      %v1574 = vshll.u32 920167782, %v1559
      %v1575 = vshrl.u32 1326507024, %v1560
      %v1576 = vor.u32 %v1574, %v1575
      %vm1577 = vcmp.lt.s32.totalorder %v1558, 1
      %vm1578 = vcmp.lt.s32.totalorder %v1558, 2
      %vm1579 = vcmp.lt.s32.totalorder %v1558, 3
      %vm1580 = vcmp.lt.s32.totalorder %v1558, 4
      %v1581 = vsel %vm1577, %v1561, %v1564
      %v1582 = vsel %vm1580, %v1570, 2102212464
      %v1583 = vsel %vm1579, %v1567, %v1582
      %v1584 = vsel %vm1578, %v1581, %v1583
      %v1585 = vsel %vm1577, %v1564, %v1567
      %v1586 = vsel %vm1580, %v1573, 920167782
      %v1587 = vsel %vm1579, %v1570, %v1586
      %v1588 = vsel %vm1578, %v1585, %v1587
      %v1589 = vsel %vm1577, %v1567, %v1570
      %v1590 = vsel %vm1580, %v1576, 1326507024
      %v1591 = vsel %vm1579, %v1573, %v1590
      %v1592 = vsel %vm1578, %v1589, %v1591
      %v1593 = vshll.u32 %v1553, 8
      %v1594 = vmul.u32.u64.compose %v1593, %v1592
      %v1595 = vextract.low.u32 %v1594
      %v1596 = vextract.high.u32 %v1594
      %v1597 = vmul.u32.u64.compose %v1593, %v1588
      %v1598 = vextract.low.u32 %v1597
      %v1599 = vextract.high.u32 %v1597
      %v1600 = vmul.u32 %v1593, %v1584
      %v1601 = vadd.s32 %v1596, %v1598
      %vm1602 = vc.u32 %v1596, %v1598
      %v1603 = vadd.s32 %v1599, 1
      %v1604 = vsel %vm1602, %v1603, %v1599
      %v1605 = vadd.s32 %v1600, %v1604
      %v1606 = vadd.s32 %v1605, 536870912
      %v1607 = vshrl.u32 %v1606, 30
      %v1608 = vshll.u32 %v1607, 30
      %v1609 = vsub.s32 %v1605, %v1608
      %vm1610 = vcmp.lt.s32.totalorder %v1609, 0
      %v1611 = vsub.s32 0, %v1609
      %v1612 = vsel %vm1610, %v1611, %v1609
      %v1613 = vclz %v1612
      %v1614 = vsub.s32 %v1613, 2
      %vm1615 = vcmp.gt.s32.totalorder 0, %v1614
      %v1616 = vsel %vm1615, 0, %v1614
      %v1617 = vsub.s32 32, %v1616
      %v1618 = vshll.u32 %v1609, %v1616
      %v1619 = vshrl.u32 %v1601, %v1617
      %v1620 = vor.u32 %v1618, %v1619
      %v1621 = vsub.s32 4294967266, %v1616
      %v1622 = vadd.s32 %v1621, 127
      %v1623 = vshll.u32 %v1622, 23
      %v1624 = vor.u32 4788187, %v1623
      %v1625 = vand.u32 2147483647, %v1624
      %v1627 = vcvt.s32.f32 %v1620
      %v1628 = vmul.f32 %v1627, %v1625
      %v1629 = vxor.u32 %v1628, 2147483648
      %v1630 = vsel %vm1547, %v1629, %v1628
      %v1631 = vsub.s32 4, %v1607
      %v1632 = vsel %vm1547, %v1631, %v1607
      %v1633 = vsel %vm1546, %v1204, %v1630
      %v1634 = vsel %vm1546, 0, %v1632
      %v1635 = vcosq.f32.pop %v1633
      %v1636 = vsinq.f32.pop %v1633
      %vm1637 = vweird.f32 %v1204
      %v1638 = vadd.s32 %v1634, 3
      %v1639 = vand.u32 %v1638, 3
      %vm1640 = vcmp.lt.s32.totalorder %v1639, 2
      %vm1641 = vcmp.eq.s32.totalorder %v1639, 0
      %v1642 = vxor.u32 %v1636, 2147483648
      %v1643 = vsel %vm1641, %v1635, %v1642
      %vm1644 = vcmp.eq.s32.totalorder %v1639, 2
      %v1645 = vxor.u32 %v1635, 2147483648
      %v1646 = vsel %vm1644, %v1645, %v1636
      %v1647 = vsel %vm1640, %v1643, %v1646
      %v1648 = vsel %vm1637, nan, %v1647
      %v1649 = vand.u32 2147483647, %v1205
      %vm1650 = vcmp.le.f32.partialorder %v1649, 0.7853982
      %vm1651 = vcmp.lt.s32.totalorder %v1205, 0
      %v1652 = vand.u32 %v1205, 2139095040
      %v1653 = vshrl.u32 %v1652, 23
      %v1654 = vsub.s32 %v1653, 127
      %v1655 = vand.u32 2147483647, %v1205
      %v1656 = vand.u32 %v1655, 8388607
      %v1657 = vor.u32 %v1656, 8388608
      %v1658 = vsub.s32 0, %v1657
      %v1659 = vadd.s32 %v1654, 1
      %vm1660 = vcmp.gt.s32.totalorder %v1659, 0
      %v1661 = vsel %vm1660, %v1659, 0
      %v1662 = vshrl.u32 %v1661, 5
      %v1663 = vand.u32 %v1661, 31
      %v1664 = vsub.s32 32, %v1663
      %v1665 = vshrl.u32 683565275, %v1664
      %v1666 = vshll.u32 683565275, %v1663
      %v1667 = vshrl.u32 2475754826, %v1664
      %v1668 = vor.u32 %v1666, %v1667
      %v1669 = vshll.u32 2475754826, %v1663
      %v1670 = vshrl.u32 2131351028, %v1664
      %v1671 = vor.u32 %v1669, %v1670
      %v1672 = vshll.u32 2131351028, %v1663
      %v1673 = vshrl.u32 2102212464, %v1664
      %v1674 = vor.u32 %v1672, %v1673
      %v1675 = vshll.u32 2102212464, %v1663
      %v1676 = vshrl.u32 920167782, %v1664
      %v1677 = vor.u32 %v1675, %v1676
      %v1678 = vshll.u32 920167782, %v1663
      %v1679 = vshrl.u32 1326507024, %v1664
      %v1680 = vor.u32 %v1678, %v1679
      %vm1681 = vcmp.lt.s32.totalorder %v1662, 1
      %vm1682 = vcmp.lt.s32.totalorder %v1662, 2
      %vm1683 = vcmp.lt.s32.totalorder %v1662, 3
      %vm1684 = vcmp.lt.s32.totalorder %v1662, 4
      %v1685 = vsel %vm1681, %v1665, %v1668
      %v1686 = vsel %vm1684, %v1674, 2102212464
      %v1687 = vsel %vm1683, %v1671, %v1686
      %v1688 = vsel %vm1682, %v1685, %v1687
      %v1689 = vsel %vm1681, %v1668, %v1671
      %v1690 = vsel %vm1684, %v1677, 920167782
      %v1691 = vsel %vm1683, %v1674, %v1690
      %v1692 = vsel %vm1682, %v1689, %v1691
      %v1693 = vsel %vm1681, %v1671, %v1674
      %v1694 = vsel %vm1684, %v1680, 1326507024
      %v1695 = vsel %vm1683, %v1677, %v1694
      %v1696 = vsel %vm1682, %v1693, %v1695
      %v1697 = vshll.u32 %v1657, 8
      %v1698 = vmul.u32.u64.compose %v1697, %v1696
      %v1699 = vextract.low.u32 %v1698
      %v1700 = vextract.high.u32 %v1698
      %v1701 = vmul.u32.u64.compose %v1697, %v1692
      %v1702 = vextract.low.u32 %v1701
      %v1703 = vextract.high.u32 %v1701
      %v1704 = vmul.u32 %v1697, %v1688
      %v1705 = vadd.s32 %v1700, %v1702
      %vm1706 = vc.u32 %v1700, %v1702
      %v1707 = vadd.s32 %v1703, 1
      %v1708 = vsel %vm1706, %v1707, %v1703
      %v1709 = vadd.s32 %v1704, %v1708
      %v1710 = vadd.s32 %v1709, 536870912
      %v1711 = vshrl.u32 %v1710, 30
      %v1712 = vshll.u32 %v1711, 30
      %v1713 = vsub.s32 %v1709, %v1712
      %vm1714 = vcmp.lt.s32.totalorder %v1713, 0
      %v1715 = vsub.s32 0, %v1713
      %v1716 = vsel %vm1714, %v1715, %v1713
      %v1717 = vclz %v1716
      %v1718 = vsub.s32 %v1717, 2
      %vm1719 = vcmp.gt.s32.totalorder 0, %v1718
      %v1720 = vsel %vm1719, 0, %v1718
      %v1721 = vsub.s32 32, %v1720
      %v1722 = vshll.u32 %v1713, %v1720
      %v1723 = vshrl.u32 %v1705, %v1721
      %v1724 = vor.u32 %v1722, %v1723
      %v1725 = vsub.s32 4294967266, %v1720
      %v1726 = vadd.s32 %v1725, 127
      %v1727 = vshll.u32 %v1726, 23
      %v1728 = vor.u32 4788187, %v1727
      %v1729 = vand.u32 2147483647, %v1728
      %v1731 = vcvt.s32.f32 %v1724
      %v1732 = vmul.f32 %v1731, %v1729
      %v1733 = vxor.u32 %v1732, 2147483648
      %v1734 = vsel %vm1651, %v1733, %v1732
      %v1735 = vsub.s32 4, %v1711
      %v1736 = vsel %vm1651, %v1735, %v1711
      %v1737 = vsel %vm1650, %v1205, %v1734
      %v1738 = vsel %vm1650, 0, %v1736
      %v1739 = vcosq.f32.pop %v1737
      %v1740 = vsinq.f32.pop %v1737
      %vm1741 = vweird.f32 %v1205
      %v1742 = vadd.s32 %v1738, 3
      %v1743 = vand.u32 %v1742, 3
      %vm1744 = vcmp.lt.s32.totalorder %v1743, 2
      %vm1745 = vcmp.eq.s32.totalorder %v1743, 0
      %v1746 = vxor.u32 %v1740, 2147483648
      %v1747 = vsel %vm1745, %v1739, %v1746
      %vm1748 = vcmp.eq.s32.totalorder %v1743, 2
      %v1749 = vxor.u32 %v1739, 2147483648
      %v1750 = vsel %vm1748, %v1749, %v1740
      %v1751 = vsel %vm1744, %v1747, %v1750
      %v1752 = vsel %vm1741, nan, %v1751
      %v1753 = vand.u32 2147483647, %v1206
      %vm1754 = vcmp.le.f32.partialorder %v1753, 0.7853982
      %vm1755 = vcmp.lt.s32.totalorder %v1206, 0
      %v1756 = vand.u32 %v1206, 2139095040
      %v1757 = vshrl.u32 %v1756, 23
      %v1758 = vsub.s32 %v1757, 127
      %v1759 = vand.u32 2147483647, %v1206
      %v1760 = vand.u32 %v1759, 8388607
      %v1761 = vor.u32 %v1760, 8388608
      %v1762 = vsub.s32 0, %v1761
      %v1763 = vadd.s32 %v1758, 1
      %vm1764 = vcmp.gt.s32.totalorder %v1763, 0
      %v1765 = vsel %vm1764, %v1763, 0
      %v1766 = vshrl.u32 %v1765, 5
      %v1767 = vand.u32 %v1765, 31
      %v1768 = vsub.s32 32, %v1767
      %v1769 = vshrl.u32 683565275, %v1768
      %v1770 = vshll.u32 683565275, %v1767
      %v1771 = vshrl.u32 2475754826, %v1768
      %v1772 = vor.u32 %v1770, %v1771
      %v1773 = vshll.u32 2475754826, %v1767
      %v1774 = vshrl.u32 2131351028, %v1768
      %v1775 = vor.u32 %v1773, %v1774
      %v1776 = vshll.u32 2131351028, %v1767
      %v1777 = vshrl.u32 2102212464, %v1768
      %v1778 = vor.u32 %v1776, %v1777
      %v1779 = vshll.u32 2102212464, %v1767
      %v1780 = vshrl.u32 920167782, %v1768
      %v1781 = vor.u32 %v1779, %v1780
      %v1782 = vshll.u32 920167782, %v1767
      %v1783 = vshrl.u32 1326507024, %v1768
      %v1784 = vor.u32 %v1782, %v1783
      %vm1785 = vcmp.lt.s32.totalorder %v1766, 1
      %vm1786 = vcmp.lt.s32.totalorder %v1766, 2
      %vm1787 = vcmp.lt.s32.totalorder %v1766, 3
      %vm1788 = vcmp.lt.s32.totalorder %v1766, 4
      %v1789 = vsel %vm1785, %v1769, %v1772
      %v1790 = vsel %vm1788, %v1778, 2102212464
      %v1791 = vsel %vm1787, %v1775, %v1790
      %v1792 = vsel %vm1786, %v1789, %v1791
      %v1793 = vsel %vm1785, %v1772, %v1775
      %v1794 = vsel %vm1788, %v1781, 920167782
      %v1795 = vsel %vm1787, %v1778, %v1794
      %v1796 = vsel %vm1786, %v1793, %v1795
      %v1797 = vsel %vm1785, %v1775, %v1778
      %v1798 = vsel %vm1788, %v1784, 1326507024
      %v1799 = vsel %vm1787, %v1781, %v1798
      %v1800 = vsel %vm1786, %v1797, %v1799
      %v1801 = vshll.u32 %v1761, 8
      %v1802 = vmul.u32.u64.compose %v1801, %v1800
      %v1803 = vextract.low.u32 %v1802
      %v1804 = vextract.high.u32 %v1802
      %v1805 = vmul.u32.u64.compose %v1801, %v1796
      %v1806 = vextract.low.u32 %v1805
      %v1807 = vextract.high.u32 %v1805
      %v1808 = vmul.u32 %v1801, %v1792
      %v1809 = vadd.s32 %v1804, %v1806
      %vm1810 = vc.u32 %v1804, %v1806
      %v1811 = vadd.s32 %v1807, 1
      %v1812 = vsel %vm1810, %v1811, %v1807
      %v1813 = vadd.s32 %v1808, %v1812
      %v1814 = vadd.s32 %v1813, 536870912
      %v1815 = vshrl.u32 %v1814, 30
      %v1816 = vshll.u32 %v1815, 30
      %v1817 = vsub.s32 %v1813, %v1816
      %vm1818 = vcmp.lt.s32.totalorder %v1817, 0
      %v1819 = vsub.s32 0, %v1817
      %v1820 = vsel %vm1818, %v1819, %v1817
      %v1821 = vclz %v1820
      %v1822 = vsub.s32 %v1821, 2
      %vm1823 = vcmp.gt.s32.totalorder 0, %v1822
      %v1824 = vsel %vm1823, 0, %v1822
      %v1825 = vsub.s32 32, %v1824
      %v1826 = vshll.u32 %v1817, %v1824
      %v1827 = vshrl.u32 %v1809, %v1825
      %v1828 = vor.u32 %v1826, %v1827
      %v1829 = vsub.s32 4294967266, %v1824
      %v1830 = vadd.s32 %v1829, 127
      %v1831 = vshll.u32 %v1830, 23
      %v1832 = vor.u32 4788187, %v1831
      %v1833 = vand.u32 2147483647, %v1832
      %v1835 = vcvt.s32.f32 %v1828
      %v1836 = vmul.f32 %v1835, %v1833
      %v1837 = vxor.u32 %v1836, 2147483648
      %v1838 = vsel %vm1755, %v1837, %v1836
      %v1839 = vsub.s32 4, %v1815
      %v1840 = vsel %vm1755, %v1839, %v1815
      %v1841 = vsel %vm1754, %v1206, %v1838
      %v1842 = vsel %vm1754, 0, %v1840
      %v1843 = vcosq.f32.pop %v1841
      %v1844 = vsinq.f32.pop %v1841
      %vm1845 = vweird.f32 %v1206
      %v1846 = vadd.s32 %v1842, 3
      %v1847 = vand.u32 %v1846, 3
      %vm1848 = vcmp.lt.s32.totalorder %v1847, 2
      %vm1849 = vcmp.eq.s32.totalorder %v1847, 0
      %v1850 = vxor.u32 %v1844, 2147483648
      %v1851 = vsel %vm1849, %v1843, %v1850
      %vm1852 = vcmp.eq.s32.totalorder %v1847, 2
      %v1853 = vxor.u32 %v1843, 2147483648
      %v1854 = vsel %vm1852, %v1853, %v1844
      %v1855 = vsel %vm1848, %v1851, %v1854
      %v1856 = vsel %vm1845, nan, %v1855
      %v1857 = vand.u32 2147483647, %v1207
      %vm1858 = vcmp.le.f32.partialorder %v1857, 0.7853982
      %vm1859 = vcmp.lt.s32.totalorder %v1207, 0
      %v1860 = vand.u32 %v1207, 2139095040
      %v1861 = vshrl.u32 %v1860, 23
      %v1862 = vsub.s32 %v1861, 127
      %v1863 = vand.u32 2147483647, %v1207
      %v1864 = vand.u32 %v1863, 8388607
      %v1865 = vor.u32 %v1864, 8388608
      %v1866 = vsub.s32 0, %v1865
      %v1867 = vadd.s32 %v1862, 1
      %vm1868 = vcmp.gt.s32.totalorder %v1867, 0
      %v1869 = vsel %vm1868, %v1867, 0
      %v1870 = vshrl.u32 %v1869, 5
      %v1871 = vand.u32 %v1869, 31
      %v1872 = vsub.s32 32, %v1871
      %v1873 = vshrl.u32 683565275, %v1872
      %v1874 = vshll.u32 683565275, %v1871
      %v1875 = vshrl.u32 2475754826, %v1872
      %v1876 = vor.u32 %v1874, %v1875
      %v1877 = vshll.u32 2475754826, %v1871
      %v1878 = vshrl.u32 2131351028, %v1872
      %v1879 = vor.u32 %v1877, %v1878
      %v1880 = vshll.u32 2131351028, %v1871
      %v1881 = vshrl.u32 2102212464, %v1872
      %v1882 = vor.u32 %v1880, %v1881
      %v1883 = vshll.u32 2102212464, %v1871
      %v1884 = vshrl.u32 920167782, %v1872
      %v1885 = vor.u32 %v1883, %v1884
      %v1886 = vshll.u32 920167782, %v1871
      %v1887 = vshrl.u32 1326507024, %v1872
      %v1888 = vor.u32 %v1886, %v1887
      %vm1889 = vcmp.lt.s32.totalorder %v1870, 1
      %vm1890 = vcmp.lt.s32.totalorder %v1870, 2
      %vm1891 = vcmp.lt.s32.totalorder %v1870, 3
      %vm1892 = vcmp.lt.s32.totalorder %v1870, 4
      %v1893 = vsel %vm1889, %v1873, %v1876
      %v1894 = vsel %vm1892, %v1882, 2102212464
      %v1895 = vsel %vm1891, %v1879, %v1894
      %v1896 = vsel %vm1890, %v1893, %v1895
      %v1897 = vsel %vm1889, %v1876, %v1879
      %v1898 = vsel %vm1892, %v1885, 920167782
      %v1899 = vsel %vm1891, %v1882, %v1898
      %v1900 = vsel %vm1890, %v1897, %v1899
      %v1901 = vsel %vm1889, %v1879, %v1882
      %v1902 = vsel %vm1892, %v1888, 1326507024
      %v1903 = vsel %vm1891, %v1885, %v1902
      %v1904 = vsel %vm1890, %v1901, %v1903
      %v1905 = vshll.u32 %v1865, 8
      %v1906 = vmul.u32.u64.compose %v1905, %v1904
      %v1907 = vextract.low.u32 %v1906
      %v1908 = vextract.high.u32 %v1906
      %v1909 = vmul.u32.u64.compose %v1905, %v1900
      %v1910 = vextract.low.u32 %v1909
      %v1911 = vextract.high.u32 %v1909
      %v1912 = vmul.u32 %v1905, %v1896
      %v1913 = vadd.s32 %v1908, %v1910
      %vm1914 = vc.u32 %v1908, %v1910
      %v1915 = vadd.s32 %v1911, 1
      %v1916 = vsel %vm1914, %v1915, %v1911
      %v1917 = vadd.s32 %v1912, %v1916
      %v1918 = vadd.s32 %v1917, 536870912
      %v1919 = vshrl.u32 %v1918, 30
      %v1920 = vshll.u32 %v1919, 30
      %v1921 = vsub.s32 %v1917, %v1920
      %vm1922 = vcmp.lt.s32.totalorder %v1921, 0
      %v1923 = vsub.s32 0, %v1921
      %v1924 = vsel %vm1922, %v1923, %v1921
      %v1925 = vclz %v1924
      %v1926 = vsub.s32 %v1925, 2
      %vm1927 = vcmp.gt.s32.totalorder 0, %v1926
      %v1928 = vsel %vm1927, 0, %v1926
      %v1929 = vsub.s32 32, %v1928
      %v1930 = vshll.u32 %v1921, %v1928
      %v1931 = vshrl.u32 %v1913, %v1929
      %v1932 = vor.u32 %v1930, %v1931
      %v1933 = vsub.s32 4294967266, %v1928
      %v1934 = vadd.s32 %v1933, 127
      %v1935 = vshll.u32 %v1934, 23
      %v1936 = vor.u32 4788187, %v1935
      %v1937 = vand.u32 2147483647, %v1936
      %v1939 = vcvt.s32.f32 %v1932
      %v1940 = vmul.f32 %v1939, %v1937
      %v1941 = vxor.u32 %v1940, 2147483648
      %v1942 = vsel %vm1859, %v1941, %v1940
      %v1943 = vsub.s32 4, %v1919
      %v1944 = vsel %vm1859, %v1943, %v1919
      %v1945 = vsel %vm1858, %v1207, %v1942
      %v1946 = vsel %vm1858, 0, %v1944
      %v1947 = vcosq.f32.pop %v1945
      %v1948 = vsinq.f32.pop %v1945
      %vm1949 = vweird.f32 %v1207
      %v1950 = vadd.s32 %v1946, 3
      %v1951 = vand.u32 %v1950, 3
      %vm1952 = vcmp.lt.s32.totalorder %v1951, 2
      %vm1953 = vcmp.eq.s32.totalorder %v1951, 0
      %v1954 = vxor.u32 %v1948, 2147483648
      %v1955 = vsel %vm1953, %v1947, %v1954
      %vm1956 = vcmp.eq.s32.totalorder %v1951, 2
      %v1957 = vxor.u32 %v1947, 2147483648
      %v1958 = vsel %vm1956, %v1957, %v1948
      %v1959 = vsel %vm1952, %v1955, %v1958
      %v1960 = vsel %vm1949, nan, %v1959
      %v1961 = vand.u32 2147483647, %v1208
      %vm1962 = vcmp.le.f32.partialorder %v1961, 0.7853982
      %vm1963 = vcmp.lt.s32.totalorder %v1208, 0
      %v1964 = vand.u32 %v1208, 2139095040
      %v1965 = vshrl.u32 %v1964, 23
      %v1966 = vsub.s32 %v1965, 127
      %v1967 = vand.u32 2147483647, %v1208
      %v1968 = vand.u32 %v1967, 8388607
      %v1969 = vor.u32 %v1968, 8388608
      %v1970 = vsub.s32 0, %v1969
      %v1971 = vadd.s32 %v1966, 1
      %vm1972 = vcmp.gt.s32.totalorder %v1971, 0
      %v1973 = vsel %vm1972, %v1971, 0
      %v1974 = vshrl.u32 %v1973, 5
      %v1975 = vand.u32 %v1973, 31
      %v1976 = vsub.s32 32, %v1975
      %v1977 = vshrl.u32 683565275, %v1976
      %v1978 = vshll.u32 683565275, %v1975
      %v1979 = vshrl.u32 2475754826, %v1976
      %v1980 = vor.u32 %v1978, %v1979
      %v1981 = vshll.u32 2475754826, %v1975
      %v1982 = vshrl.u32 2131351028, %v1976
      %v1983 = vor.u32 %v1981, %v1982
      %v1984 = vshll.u32 2131351028, %v1975
      %v1985 = vshrl.u32 2102212464, %v1976
      %v1986 = vor.u32 %v1984, %v1985
      %v1987 = vshll.u32 2102212464, %v1975
      %v1988 = vshrl.u32 920167782, %v1976
      %v1989 = vor.u32 %v1987, %v1988
      %v1990 = vshll.u32 920167782, %v1975
      %v1991 = vshrl.u32 1326507024, %v1976
      %v1992 = vor.u32 %v1990, %v1991
      %vm1993 = vcmp.lt.s32.totalorder %v1974, 1
      %vm1994 = vcmp.lt.s32.totalorder %v1974, 2
      %vm1995 = vcmp.lt.s32.totalorder %v1974, 3
      %vm1996 = vcmp.lt.s32.totalorder %v1974, 4
      %v1997 = vsel %vm1993, %v1977, %v1980
      %v1998 = vsel %vm1996, %v1986, 2102212464
      %v1999 = vsel %vm1995, %v1983, %v1998
      %v2000 = vsel %vm1994, %v1997, %v1999
      %v2001 = vsel %vm1993, %v1980, %v1983
      %v2002 = vsel %vm1996, %v1989, 920167782
      %v2003 = vsel %vm1995, %v1986, %v2002
      %v2004 = vsel %vm1994, %v2001, %v2003
      %v2005 = vsel %vm1993, %v1983, %v1986
      %v2006 = vsel %vm1996, %v1992, 1326507024
      %v2007 = vsel %vm1995, %v1989, %v2006
      %v2008 = vsel %vm1994, %v2005, %v2007
      %v2009 = vshll.u32 %v1969, 8
      %v2010 = vmul.u32.u64.compose %v2009, %v2008
      %v2011 = vextract.low.u32 %v2010
      %v2012 = vextract.high.u32 %v2010
      %v2013 = vmul.u32.u64.compose %v2009, %v2004
      %v2014 = vextract.low.u32 %v2013
      %v2015 = vextract.high.u32 %v2013
      %v2016 = vmul.u32 %v2009, %v2000
      %v2017 = vadd.s32 %v2012, %v2014
      %vm2018 = vc.u32 %v2012, %v2014
      %v2019 = vadd.s32 %v2015, 1
      %v2020 = vsel %vm2018, %v2019, %v2015
      %v2021 = vadd.s32 %v2016, %v2020
      %v2022 = vadd.s32 %v2021, 536870912
      %v2023 = vshrl.u32 %v2022, 30
      %v2024 = vshll.u32 %v2023, 30
      %v2025 = vsub.s32 %v2021, %v2024
      %vm2026 = vcmp.lt.s32.totalorder %v2025, 0
      %v2027 = vsub.s32 0, %v2025
      %v2028 = vsel %vm2026, %v2027, %v2025
      %v2029 = vclz %v2028
      %v2030 = vsub.s32 %v2029, 2
      %vm2031 = vcmp.gt.s32.totalorder 0, %v2030
      %v2032 = vsel %vm2031, 0, %v2030
      %v2033 = vsub.s32 32, %v2032
      %v2034 = vshll.u32 %v2025, %v2032
      %v2035 = vshrl.u32 %v2017, %v2033
      %v2036 = vor.u32 %v2034, %v2035
      %v2037 = vsub.s32 4294967266, %v2032
      %v2038 = vadd.s32 %v2037, 127
      %v2039 = vshll.u32 %v2038, 23
      %v2040 = vor.u32 4788187, %v2039
      %v2041 = vand.u32 2147483647, %v2040
      %v2043 = vcvt.s32.f32 %v2036
      %v2044 = vmul.f32 %v2043, %v2041
      %v2045 = vxor.u32 %v2044, 2147483648
      %v2046 = vsel %vm1963, %v2045, %v2044
      %v2047 = vsub.s32 4, %v2023
      %v2048 = vsel %vm1963, %v2047, %v2023
      %v2049 = vsel %vm1962, %v1208, %v2046
      %v2050 = vsel %vm1962, 0, %v2048
      %v2051 = vcosq.f32.pop %v2049
      %v2052 = vsinq.f32.pop %v2049
      %vm2053 = vweird.f32 %v1208
      %v2054 = vadd.s32 %v2050, 3
      %v2055 = vand.u32 %v2054, 3
      %vm2056 = vcmp.lt.s32.totalorder %v2055, 2
      %vm2057 = vcmp.eq.s32.totalorder %v2055, 0
      %v2058 = vxor.u32 %v2052, 2147483648
      %v2059 = vsel %vm2057, %v2051, %v2058
      %vm2060 = vcmp.eq.s32.totalorder %v2055, 2
      %v2061 = vxor.u32 %v2051, 2147483648
      %v2062 = vsel %vm2060, %v2061, %v2052
      %v2063 = vsel %vm2056, %v2059, %v2062
      %v2064 = vsel %vm2053, nan, %v2063
      %v2065 = vand.u32 2147483647, %v1209
      %vm2066 = vcmp.le.f32.partialorder %v2065, 0.7853982
      %vm2067 = vcmp.lt.s32.totalorder %v1209, 0
      %v2068 = vand.u32 %v1209, 2139095040
      %v2069 = vshrl.u32 %v2068, 23
      %v2070 = vsub.s32 %v2069, 127
      %v2071 = vand.u32 2147483647, %v1209
      %v2072 = vand.u32 %v2071, 8388607
      %v2073 = vor.u32 %v2072, 8388608
      %v2074 = vsub.s32 0, %v2073
      %v2075 = vadd.s32 %v2070, 1
      %vm2076 = vcmp.gt.s32.totalorder %v2075, 0
      %v2077 = vsel %vm2076, %v2075, 0
      %v2078 = vshrl.u32 %v2077, 5
      %v2079 = vand.u32 %v2077, 31
      %v2080 = vsub.s32 32, %v2079
      %v2081 = vshrl.u32 683565275, %v2080
      %v2082 = vshll.u32 683565275, %v2079
      %v2083 = vshrl.u32 2475754826, %v2080
      %v2084 = vor.u32 %v2082, %v2083
      %v2085 = vshll.u32 2475754826, %v2079
      %v2086 = vshrl.u32 2131351028, %v2080
      %v2087 = vor.u32 %v2085, %v2086
      %v2088 = vshll.u32 2131351028, %v2079
      %v2089 = vshrl.u32 2102212464, %v2080
      %v2090 = vor.u32 %v2088, %v2089
      %v2091 = vshll.u32 2102212464, %v2079
      %v2092 = vshrl.u32 920167782, %v2080
      %v2093 = vor.u32 %v2091, %v2092
      %v2094 = vshll.u32 920167782, %v2079
      %v2095 = vshrl.u32 1326507024, %v2080
      %v2096 = vor.u32 %v2094, %v2095
      %vm2097 = vcmp.lt.s32.totalorder %v2078, 1
      %vm2098 = vcmp.lt.s32.totalorder %v2078, 2
      %vm2099 = vcmp.lt.s32.totalorder %v2078, 3
      %vm2100 = vcmp.lt.s32.totalorder %v2078, 4
      %v2101 = vsel %vm2097, %v2081, %v2084
      %v2102 = vsel %vm2100, %v2090, 2102212464
      %v2103 = vsel %vm2099, %v2087, %v2102
      %v2104 = vsel %vm2098, %v2101, %v2103
      %v2105 = vsel %vm2097, %v2084, %v2087
      %v2106 = vsel %vm2100, %v2093, 920167782
      %v2107 = vsel %vm2099, %v2090, %v2106
      %v2108 = vsel %vm2098, %v2105, %v2107
      %v2109 = vsel %vm2097, %v2087, %v2090
      %v2110 = vsel %vm2100, %v2096, 1326507024
      %v2111 = vsel %vm2099, %v2093, %v2110
      %v2112 = vsel %vm2098, %v2109, %v2111
      %v2113 = vshll.u32 %v2073, 8
      %v2114 = vmul.u32.u64.compose %v2113, %v2112
      %v2115 = vextract.low.u32 %v2114
      %v2116 = vextract.high.u32 %v2114
      %v2117 = vmul.u32.u64.compose %v2113, %v2108
      %v2118 = vextract.low.u32 %v2117
      %v2119 = vextract.high.u32 %v2117
      %v2120 = vmul.u32 %v2113, %v2104
      %v2121 = vadd.s32 %v2116, %v2118
      %vm2122 = vc.u32 %v2116, %v2118
      %v2123 = vadd.s32 %v2119, 1
      %v2124 = vsel %vm2122, %v2123, %v2119
      %v2125 = vadd.s32 %v2120, %v2124
      %v2126 = vadd.s32 %v2125, 536870912
      %v2127 = vshrl.u32 %v2126, 30
      %v2128 = vshll.u32 %v2127, 30
      %v2129 = vsub.s32 %v2125, %v2128
      %vm2130 = vcmp.lt.s32.totalorder %v2129, 0
      %v2131 = vsub.s32 0, %v2129
      %v2132 = vsel %vm2130, %v2131, %v2129
      %v2133 = vclz %v2132
      %v2134 = vsub.s32 %v2133, 2
      %vm2135 = vcmp.gt.s32.totalorder 0, %v2134
      %v2136 = vsel %vm2135, 0, %v2134
      %v2137 = vsub.s32 32, %v2136
      %v2138 = vshll.u32 %v2129, %v2136
      %v2139 = vshrl.u32 %v2121, %v2137
      %v2140 = vor.u32 %v2138, %v2139
      %v2141 = vsub.s32 4294967266, %v2136
      %v2142 = vadd.s32 %v2141, 127
      %v2143 = vshll.u32 %v2142, 23
      %v2144 = vor.u32 4788187, %v2143
      %v2145 = vand.u32 2147483647, %v2144
      %v2147 = vcvt.s32.f32 %v2140
      %v2148 = vmul.f32 %v2147, %v2145
      %v2149 = vxor.u32 %v2148, 2147483648
      %v2150 = vsel %vm2067, %v2149, %v2148
      %v2151 = vsub.s32 4, %v2127
      %v2152 = vsel %vm2067, %v2151, %v2127
      %v2153 = vsel %vm2066, %v1209, %v2150
      %v2154 = vsel %vm2066, 0, %v2152
      %v2155 = vcosq.f32.pop %v2153
      %v2156 = vsinq.f32.pop %v2153
      %vm2157 = vweird.f32 %v1209
      %v2158 = vadd.s32 %v2154, 3
      %v2159 = vand.u32 %v2158, 3
      %vm2160 = vcmp.lt.s32.totalorder %v2159, 2
      %vm2161 = vcmp.eq.s32.totalorder %v2159, 0
      %v2162 = vxor.u32 %v2156, 2147483648
      %v2163 = vsel %vm2161, %v2155, %v2162
      %vm2164 = vcmp.eq.s32.totalorder %v2159, 2
      %v2165 = vxor.u32 %v2155, 2147483648
      %v2166 = vsel %vm2164, %v2165, %v2156
      %v2167 = vsel %vm2160, %v2163, %v2166
      %v2168 = vsel %vm2157, nan, %v2167
      %v2169 = vand.u32 2147483647, %v1210
      %vm2170 = vcmp.le.f32.partialorder %v2169, 0.7853982
      %vm2171 = vcmp.lt.s32.totalorder %v1210, 0
      %v2172 = vand.u32 %v1210, 2139095040
      %v2173 = vshrl.u32 %v2172, 23
      %v2174 = vsub.s32 %v2173, 127
      %v2175 = vand.u32 2147483647, %v1210
      %v2176 = vand.u32 %v2175, 8388607
      %v2177 = vor.u32 %v2176, 8388608
      %v2178 = vsub.s32 0, %v2177
      %v2179 = vadd.s32 %v2174, 1
      %vm2180 = vcmp.gt.s32.totalorder %v2179, 0
      %v2181 = vsel %vm2180, %v2179, 0
      %v2182 = vshrl.u32 %v2181, 5
      %v2183 = vand.u32 %v2181, 31
      %v2184 = vsub.s32 32, %v2183
      %v2185 = vshrl.u32 683565275, %v2184
      %v2186 = vshll.u32 683565275, %v2183
      %v2187 = vshrl.u32 2475754826, %v2184
      %v2188 = vor.u32 %v2186, %v2187
      %v2189 = vshll.u32 2475754826, %v2183
      %v2190 = vshrl.u32 2131351028, %v2184
      %v2191 = vor.u32 %v2189, %v2190
      %v2192 = vshll.u32 2131351028, %v2183
      %v2193 = vshrl.u32 2102212464, %v2184
      %v2194 = vor.u32 %v2192, %v2193
      %v2195 = vshll.u32 2102212464, %v2183
      %v2196 = vshrl.u32 920167782, %v2184
      %v2197 = vor.u32 %v2195, %v2196
      %v2198 = vshll.u32 920167782, %v2183
      %v2199 = vshrl.u32 1326507024, %v2184
      %v2200 = vor.u32 %v2198, %v2199
      %vm2201 = vcmp.lt.s32.totalorder %v2182, 1
      %vm2202 = vcmp.lt.s32.totalorder %v2182, 2
      %vm2203 = vcmp.lt.s32.totalorder %v2182, 3
      %vm2204 = vcmp.lt.s32.totalorder %v2182, 4
      %v2205 = vsel %vm2201, %v2185, %v2188
      %v2206 = vsel %vm2204, %v2194, 2102212464
      %v2207 = vsel %vm2203, %v2191, %v2206
      %v2208 = vsel %vm2202, %v2205, %v2207
      %v2209 = vsel %vm2201, %v2188, %v2191
      %v2210 = vsel %vm2204, %v2197, 920167782
      %v2211 = vsel %vm2203, %v2194, %v2210
      %v2212 = vsel %vm2202, %v2209, %v2211
      %v2213 = vsel %vm2201, %v2191, %v2194
      %v2214 = vsel %vm2204, %v2200, 1326507024
      %v2215 = vsel %vm2203, %v2197, %v2214
      %v2216 = vsel %vm2202, %v2213, %v2215
      %v2217 = vshll.u32 %v2177, 8
      %v2218 = vmul.u32.u64.compose %v2217, %v2216
      %v2219 = vextract.low.u32 %v2218
      %v2220 = vextract.high.u32 %v2218
      %v2221 = vmul.u32.u64.compose %v2217, %v2212
      %v2222 = vextract.low.u32 %v2221
      %v2223 = vextract.high.u32 %v2221
      %v2224 = vmul.u32 %v2217, %v2208
      %v2225 = vadd.s32 %v2220, %v2222
      %vm2226 = vc.u32 %v2220, %v2222
      %v2227 = vadd.s32 %v2223, 1
      %v2228 = vsel %vm2226, %v2227, %v2223
      %v2229 = vadd.s32 %v2224, %v2228
      %v2230 = vadd.s32 %v2229, 536870912
      %v2231 = vshrl.u32 %v2230, 30
      %v2232 = vshll.u32 %v2231, 30
      %v2233 = vsub.s32 %v2229, %v2232
      %vm2234 = vcmp.lt.s32.totalorder %v2233, 0
      %v2235 = vsub.s32 0, %v2233
      %v2236 = vsel %vm2234, %v2235, %v2233
      %v2237 = vclz %v2236
      %v2238 = vsub.s32 %v2237, 2
      %vm2239 = vcmp.gt.s32.totalorder 0, %v2238
      %v2240 = vsel %vm2239, 0, %v2238
      %v2241 = vsub.s32 32, %v2240
      %v2242 = vshll.u32 %v2233, %v2240
      %v2243 = vshrl.u32 %v2225, %v2241
      %v2244 = vor.u32 %v2242, %v2243
      %v2245 = vsub.s32 4294967266, %v2240
      %v2246 = vadd.s32 %v2245, 127
      %v2247 = vshll.u32 %v2246, 23
      %v2248 = vor.u32 4788187, %v2247
      %v2249 = vand.u32 2147483647, %v2248
      %v2251 = vcvt.s32.f32 %v2244
      %v2252 = vmul.f32 %v2251, %v2249
      %v2253 = vxor.u32 %v2252, 2147483648
      %v2254 = vsel %vm2171, %v2253, %v2252
      %v2255 = vsub.s32 4, %v2231
      %v2256 = vsel %vm2171, %v2255, %v2231
      %v2257 = vsel %vm2170, %v1210, %v2254
      %v2258 = vsel %vm2170, 0, %v2256
      %v2259 = vcosq.f32.pop %v2257
      %v2260 = vsinq.f32.pop %v2257
      %vm2261 = vweird.f32 %v1210
      %v2262 = vadd.s32 %v2258, 3
      %v2263 = vand.u32 %v2262, 3
      %vm2264 = vcmp.lt.s32.totalorder %v2263, 2
      %vm2265 = vcmp.eq.s32.totalorder %v2263, 0
      %v2266 = vxor.u32 %v2260, 2147483648
      %v2267 = vsel %vm2265, %v2259, %v2266
      %vm2268 = vcmp.eq.s32.totalorder %v2263, 2
      %v2269 = vxor.u32 %v2259, 2147483648
      %v2270 = vsel %vm2268, %v2269, %v2260
      %v2271 = vsel %vm2264, %v2267, %v2270
      %v2272 = vsel %vm2261, nan, %v2271
      %v2273 = vand.u32 2147483647, %v1211
      %vm2274 = vcmp.le.f32.partialorder %v2273, 0.7853982
      %vm2275 = vcmp.lt.s32.totalorder %v1211, 0
      %v2276 = vand.u32 %v1211, 2139095040
      %v2277 = vshrl.u32 %v2276, 23
      %v2278 = vsub.s32 %v2277, 127
      %v2279 = vand.u32 2147483647, %v1211
      %v2280 = vand.u32 %v2279, 8388607
      %v2281 = vor.u32 %v2280, 8388608
      %v2282 = vsub.s32 0, %v2281
      %v2283 = vadd.s32 %v2278, 1
      %vm2284 = vcmp.gt.s32.totalorder %v2283, 0
      %v2285 = vsel %vm2284, %v2283, 0
      %v2286 = vshrl.u32 %v2285, 5
      %v2287 = vand.u32 %v2285, 31
      %v2288 = vsub.s32 32, %v2287
      %v2289 = vshrl.u32 683565275, %v2288
      %v2290 = vshll.u32 683565275, %v2287
      %v2291 = vshrl.u32 2475754826, %v2288
      %v2292 = vor.u32 %v2290, %v2291
      %v2293 = vshll.u32 2475754826, %v2287
      %v2294 = vshrl.u32 2131351028, %v2288
      %v2295 = vor.u32 %v2293, %v2294
      %v2296 = vshll.u32 2131351028, %v2287
      %v2297 = vshrl.u32 2102212464, %v2288
      %v2298 = vor.u32 %v2296, %v2297
      %v2299 = vshll.u32 2102212464, %v2287
      %v2300 = vshrl.u32 920167782, %v2288
      %v2301 = vor.u32 %v2299, %v2300
      %v2302 = vshll.u32 920167782, %v2287
      %v2303 = vshrl.u32 1326507024, %v2288
      %v2304 = vor.u32 %v2302, %v2303
      %vm2305 = vcmp.lt.s32.totalorder %v2286, 1
      %vm2306 = vcmp.lt.s32.totalorder %v2286, 2
      %vm2307 = vcmp.lt.s32.totalorder %v2286, 3
      %vm2308 = vcmp.lt.s32.totalorder %v2286, 4
      %v2309 = vsel %vm2305, %v2289, %v2292
      %v2310 = vsel %vm2308, %v2298, 2102212464
      %v2311 = vsel %vm2307, %v2295, %v2310
      %v2312 = vsel %vm2306, %v2309, %v2311
      %v2313 = vsel %vm2305, %v2292, %v2295
      %v2314 = vsel %vm2308, %v2301, 920167782
      %v2315 = vsel %vm2307, %v2298, %v2314
      %v2316 = vsel %vm2306, %v2313, %v2315
      %v2317 = vsel %vm2305, %v2295, %v2298
      %v2318 = vsel %vm2308, %v2304, 1326507024
      %v2319 = vsel %vm2307, %v2301, %v2318
      %v2320 = vsel %vm2306, %v2317, %v2319
      %v2321 = vshll.u32 %v2281, 8
      %v2322 = vmul.u32.u64.compose %v2321, %v2320
      %v2323 = vextract.low.u32 %v2322
      %v2324 = vextract.high.u32 %v2322
      %v2325 = vmul.u32.u64.compose %v2321, %v2316
      %v2326 = vextract.low.u32 %v2325
      %v2327 = vextract.high.u32 %v2325
      %v2328 = vmul.u32 %v2321, %v2312
      %v2329 = vadd.s32 %v2324, %v2326
      %vm2330 = vc.u32 %v2324, %v2326
      %v2331 = vadd.s32 %v2327, 1
      %v2332 = vsel %vm2330, %v2331, %v2327
      %v2333 = vadd.s32 %v2328, %v2332
      %v2334 = vadd.s32 %v2333, 536870912
      %v2335 = vshrl.u32 %v2334, 30
      %v2336 = vshll.u32 %v2335, 30
      %v2337 = vsub.s32 %v2333, %v2336
      %vm2338 = vcmp.lt.s32.totalorder %v2337, 0
      %v2339 = vsub.s32 0, %v2337
      %v2340 = vsel %vm2338, %v2339, %v2337
      %v2341 = vclz %v2340
      %v2342 = vsub.s32 %v2341, 2
      %vm2343 = vcmp.gt.s32.totalorder 0, %v2342
      %v2344 = vsel %vm2343, 0, %v2342
      %v2345 = vsub.s32 32, %v2344
      %v2346 = vshll.u32 %v2337, %v2344
      %v2347 = vshrl.u32 %v2329, %v2345
      %v2348 = vor.u32 %v2346, %v2347
      %v2349 = vsub.s32 4294967266, %v2344
      %v2350 = vadd.s32 %v2349, 127
      %v2351 = vshll.u32 %v2350, 23
      %v2352 = vor.u32 4788187, %v2351
      %v2353 = vand.u32 2147483647, %v2352
      %v2355 = vcvt.s32.f32 %v2348
      %v2356 = vmul.f32 %v2355, %v2353
      %v2357 = vxor.u32 %v2356, 2147483648
      %v2358 = vsel %vm2275, %v2357, %v2356
      %v2359 = vsub.s32 4, %v2335
      %v2360 = vsel %vm2275, %v2359, %v2335
      %v2361 = vsel %vm2274, %v1211, %v2358
      %v2362 = vsel %vm2274, 0, %v2360
      %v2363 = vcosq.f32.pop %v2361
      %v2364 = vsinq.f32.pop %v2361
      %vm2365 = vweird.f32 %v1211
      %v2366 = vadd.s32 %v2362, 3
      %v2367 = vand.u32 %v2366, 3
      %vm2368 = vcmp.lt.s32.totalorder %v2367, 2
      %vm2369 = vcmp.eq.s32.totalorder %v2367, 0
      %v2370 = vxor.u32 %v2364, 2147483648
      %v2371 = vsel %vm2369, %v2363, %v2370
      %vm2372 = vcmp.eq.s32.totalorder %v2367, 2
      %v2373 = vxor.u32 %v2363, 2147483648
      %v2374 = vsel %vm2372, %v2373, %v2364
      %v2375 = vsel %vm2368, %v2371, %v2374
      %v2376 = vsel %vm2365, nan, %v2375
      %v2377 = vand.u32 2147483647, %v1212
      %vm2378 = vcmp.le.f32.partialorder %v2377, 0.7853982
      %vm2379 = vcmp.lt.s32.totalorder %v1212, 0
      %v2380 = vand.u32 %v1212, 2139095040
      %v2381 = vshrl.u32 %v2380, 23
      %v2382 = vsub.s32 %v2381, 127
      %v2383 = vand.u32 2147483647, %v1212
      %v2384 = vand.u32 %v2383, 8388607
      %v2385 = vor.u32 %v2384, 8388608
      %v2386 = vsub.s32 0, %v2385
      %v2387 = vadd.s32 %v2382, 1
      %vm2388 = vcmp.gt.s32.totalorder %v2387, 0
      %v2389 = vsel %vm2388, %v2387, 0
      %v2390 = vshrl.u32 %v2389, 5
      %v2391 = vand.u32 %v2389, 31
      %v2392 = vsub.s32 32, %v2391
      %v2393 = vshrl.u32 683565275, %v2392
      %v2394 = vshll.u32 683565275, %v2391
      %v2395 = vshrl.u32 2475754826, %v2392
      %v2396 = vor.u32 %v2394, %v2395
      %v2397 = vshll.u32 2475754826, %v2391
      %v2398 = vshrl.u32 2131351028, %v2392
      %v2399 = vor.u32 %v2397, %v2398
      %v2400 = vshll.u32 2131351028, %v2391
      %v2401 = vshrl.u32 2102212464, %v2392
      %v2402 = vor.u32 %v2400, %v2401
      %v2403 = vshll.u32 2102212464, %v2391
      %v2404 = vshrl.u32 920167782, %v2392
      %v2405 = vor.u32 %v2403, %v2404
      %v2406 = vshll.u32 920167782, %v2391
      %v2407 = vshrl.u32 1326507024, %v2392
      %v2408 = vor.u32 %v2406, %v2407
      %vm2409 = vcmp.lt.s32.totalorder %v2390, 1
      %vm2410 = vcmp.lt.s32.totalorder %v2390, 2
      %vm2411 = vcmp.lt.s32.totalorder %v2390, 3
      %vm2412 = vcmp.lt.s32.totalorder %v2390, 4
      %v2413 = vsel %vm2409, %v2393, %v2396
      %v2414 = vsel %vm2412, %v2402, 2102212464
      %v2415 = vsel %vm2411, %v2399, %v2414
      %v2416 = vsel %vm2410, %v2413, %v2415
      %v2417 = vsel %vm2409, %v2396, %v2399
      %v2418 = vsel %vm2412, %v2405, 920167782
      %v2419 = vsel %vm2411, %v2402, %v2418
      %v2420 = vsel %vm2410, %v2417, %v2419
      %v2421 = vsel %vm2409, %v2399, %v2402
      %v2422 = vsel %vm2412, %v2408, 1326507024
      %v2423 = vsel %vm2411, %v2405, %v2422
      %v2424 = vsel %vm2410, %v2421, %v2423
      %v2425 = vshll.u32 %v2385, 8
      %v2426 = vmul.u32.u64.compose %v2425, %v2424
      %v2427 = vextract.low.u32 %v2426
      %v2428 = vextract.high.u32 %v2426
      %v2429 = vmul.u32.u64.compose %v2425, %v2420
      %v2430 = vextract.low.u32 %v2429
      %v2431 = vextract.high.u32 %v2429
      %v2432 = vmul.u32 %v2425, %v2416
      %v2433 = vadd.s32 %v2428, %v2430
      %vm2434 = vc.u32 %v2428, %v2430
      %v2435 = vadd.s32 %v2431, 1
      %v2436 = vsel %vm2434, %v2435, %v2431
      %v2437 = vadd.s32 %v2432, %v2436
      %v2438 = vadd.s32 %v2437, 536870912
      %v2439 = vshrl.u32 %v2438, 30
      %v2440 = vshll.u32 %v2439, 30
      %v2441 = vsub.s32 %v2437, %v2440
      %vm2442 = vcmp.lt.s32.totalorder %v2441, 0
      %v2443 = vsub.s32 0, %v2441
      %v2444 = vsel %vm2442, %v2443, %v2441
      %v2445 = vclz %v2444
      %v2446 = vsub.s32 %v2445, 2
      %vm2447 = vcmp.gt.s32.totalorder 0, %v2446
      %v2448 = vsel %vm2447, 0, %v2446
      %v2449 = vsub.s32 32, %v2448
      %v2450 = vshll.u32 %v2441, %v2448
      %v2451 = vshrl.u32 %v2433, %v2449
      %v2452 = vor.u32 %v2450, %v2451
      %v2453 = vsub.s32 4294967266, %v2448
      %v2454 = vadd.s32 %v2453, 127
      %v2455 = vshll.u32 %v2454, 23
      %v2456 = vor.u32 4788187, %v2455
      %v2457 = vand.u32 2147483647, %v2456
      %v2459 = vcvt.s32.f32 %v2452
      %v2460 = vmul.f32 %v2459, %v2457
      %v2461 = vxor.u32 %v2460, 2147483648
      %v2462 = vsel %vm2379, %v2461, %v2460
      %v2463 = vsub.s32 4, %v2439
      %v2464 = vsel %vm2379, %v2463, %v2439
      %v2465 = vsel %vm2378, %v1212, %v2462
      %v2466 = vsel %vm2378, 0, %v2464
      %v2467 = vcosq.f32.pop %v2465
      %v2468 = vsinq.f32.pop %v2465
      %vm2469 = vweird.f32 %v1212
      %v2470 = vadd.s32 %v2466, 3
      %v2471 = vand.u32 %v2470, 3
      %vm2472 = vcmp.lt.s32.totalorder %v2471, 2
      %vm2473 = vcmp.eq.s32.totalorder %v2471, 0
      %v2474 = vxor.u32 %v2468, 2147483648
      %v2475 = vsel %vm2473, %v2467, %v2474
      %vm2476 = vcmp.eq.s32.totalorder %v2471, 2
      %v2477 = vxor.u32 %v2467, 2147483648
      %v2478 = vsel %vm2476, %v2477, %v2468
      %v2479 = vsel %vm2472, %v2475, %v2478
      %v2480 = vsel %vm2469, nan, %v2479
      %v2481 = vand.u32 2147483647, %v1213
      %vm2482 = vcmp.le.f32.partialorder %v2481, 0.7853982
      %vm2483 = vcmp.lt.s32.totalorder %v1213, 0
      %v2484 = vand.u32 %v1213, 2139095040
      %v2485 = vshrl.u32 %v2484, 23
      %v2486 = vsub.s32 %v2485, 127
      %v2487 = vand.u32 2147483647, %v1213
      %v2488 = vand.u32 %v2487, 8388607
      %v2489 = vor.u32 %v2488, 8388608
      %v2490 = vsub.s32 0, %v2489
      %v2491 = vadd.s32 %v2486, 1
      %vm2492 = vcmp.gt.s32.totalorder %v2491, 0
      %v2493 = vsel %vm2492, %v2491, 0
      %v2494 = vshrl.u32 %v2493, 5
      %v2495 = vand.u32 %v2493, 31
      %v2496 = vsub.s32 32, %v2495
      %v2497 = vshrl.u32 683565275, %v2496
      %v2498 = vshll.u32 683565275, %v2495
      %v2499 = vshrl.u32 2475754826, %v2496
      %v2500 = vor.u32 %v2498, %v2499
      %v2501 = vshll.u32 2475754826, %v2495
      %v2502 = vshrl.u32 2131351028, %v2496
      %v2503 = vor.u32 %v2501, %v2502
      %v2504 = vshll.u32 2131351028, %v2495
      %v2505 = vshrl.u32 2102212464, %v2496
      %v2506 = vor.u32 %v2504, %v2505
      %v2507 = vshll.u32 2102212464, %v2495
      %v2508 = vshrl.u32 920167782, %v2496
      %v2509 = vor.u32 %v2507, %v2508
      %v2510 = vshll.u32 920167782, %v2495
      %v2511 = vshrl.u32 1326507024, %v2496
      %v2512 = vor.u32 %v2510, %v2511
      %vm2513 = vcmp.lt.s32.totalorder %v2494, 1
      %vm2514 = vcmp.lt.s32.totalorder %v2494, 2
      %vm2515 = vcmp.lt.s32.totalorder %v2494, 3
      %vm2516 = vcmp.lt.s32.totalorder %v2494, 4
      %v2517 = vsel %vm2513, %v2497, %v2500
      %v2518 = vsel %vm2516, %v2506, 2102212464
      %v2519 = vsel %vm2515, %v2503, %v2518
      %v2520 = vsel %vm2514, %v2517, %v2519
      %v2521 = vsel %vm2513, %v2500, %v2503
      %v2522 = vsel %vm2516, %v2509, 920167782
      %v2523 = vsel %vm2515, %v2506, %v2522
      %v2524 = vsel %vm2514, %v2521, %v2523
      %v2525 = vsel %vm2513, %v2503, %v2506
      %v2526 = vsel %vm2516, %v2512, 1326507024
      %v2527 = vsel %vm2515, %v2509, %v2526
      %v2528 = vsel %vm2514, %v2525, %v2527
      %v2529 = vshll.u32 %v2489, 8
      %v2530 = vmul.u32.u64.compose %v2529, %v2528
      %v2531 = vextract.low.u32 %v2530
      %v2532 = vextract.high.u32 %v2530
      %v2533 = vmul.u32.u64.compose %v2529, %v2524
      %v2534 = vextract.low.u32 %v2533
      %v2535 = vextract.high.u32 %v2533
      %v2536 = vmul.u32 %v2529, %v2520
      %v2537 = vadd.s32 %v2532, %v2534
      %vm2538 = vc.u32 %v2532, %v2534
      %v2539 = vadd.s32 %v2535, 1
      %v2540 = vsel %vm2538, %v2539, %v2535
      %v2541 = vadd.s32 %v2536, %v2540
      %v2542 = vadd.s32 %v2541, 536870912
      %v2543 = vshrl.u32 %v2542, 30
      %v2544 = vshll.u32 %v2543, 30
      %v2545 = vsub.s32 %v2541, %v2544
      %vm2546 = vcmp.lt.s32.totalorder %v2545, 0
      %v2547 = vsub.s32 0, %v2545
      %v2548 = vsel %vm2546, %v2547, %v2545
      %v2549 = vclz %v2548
      %v2550 = vsub.s32 %v2549, 2
      %vm2551 = vcmp.gt.s32.totalorder 0, %v2550
      %v2552 = vsel %vm2551, 0, %v2550
      %v2553 = vsub.s32 32, %v2552
      %v2554 = vshll.u32 %v2545, %v2552
      %v2555 = vshrl.u32 %v2537, %v2553
      %v2556 = vor.u32 %v2554, %v2555
      %v2557 = vsub.s32 4294967266, %v2552
      %v2558 = vadd.s32 %v2557, 127
      %v2559 = vshll.u32 %v2558, 23
      %v2560 = vor.u32 4788187, %v2559
      %v2561 = vand.u32 2147483647, %v2560
      %v2563 = vcvt.s32.f32 %v2556
      %v2564 = vmul.f32 %v2563, %v2561
      %v2565 = vxor.u32 %v2564, 2147483648
      %v2566 = vsel %vm2483, %v2565, %v2564
      %v2567 = vsub.s32 4, %v2543
      %v2568 = vsel %vm2483, %v2567, %v2543
      %v2569 = vsel %vm2482, %v1213, %v2566
      %v2570 = vsel %vm2482, 0, %v2568
      %v2571 = vcosq.f32.pop %v2569
      %v2572 = vsinq.f32.pop %v2569
      %vm2573 = vweird.f32 %v1213
      %v2574 = vadd.s32 %v2570, 3
      %v2575 = vand.u32 %v2574, 3
      %vm2576 = vcmp.lt.s32.totalorder %v2575, 2
      %vm2577 = vcmp.eq.s32.totalorder %v2575, 0
      %v2578 = vxor.u32 %v2572, 2147483648
      %v2579 = vsel %vm2577, %v2571, %v2578
      %vm2580 = vcmp.eq.s32.totalorder %v2575, 2
      %v2581 = vxor.u32 %v2571, 2147483648
      %v2582 = vsel %vm2580, %v2581, %v2572
      %v2583 = vsel %vm2576, %v2579, %v2582
      %v2584 = vsel %vm2573, nan, %v2583
      %v2585 = vand.u32 2147483647, %v1214
      %vm2586 = vcmp.le.f32.partialorder %v2585, 0.7853982
      %vm2587 = vcmp.lt.s32.totalorder %v1214, 0
      %v2588 = vand.u32 %v1214, 2139095040
      %v2589 = vshrl.u32 %v2588, 23
      %v2590 = vsub.s32 %v2589, 127
      %v2591 = vand.u32 2147483647, %v1214
      %v2592 = vand.u32 %v2591, 8388607
      %v2593 = vor.u32 %v2592, 8388608
      %v2594 = vsub.s32 0, %v2593
      %v2595 = vadd.s32 %v2590, 1
      %vm2596 = vcmp.gt.s32.totalorder %v2595, 0
      %v2597 = vsel %vm2596, %v2595, 0
      %v2598 = vshrl.u32 %v2597, 5
      %v2599 = vand.u32 %v2597, 31
      %v2600 = vsub.s32 32, %v2599
      %v2601 = vshrl.u32 683565275, %v2600
      %v2602 = vshll.u32 683565275, %v2599
      %v2603 = vshrl.u32 2475754826, %v2600
      %v2604 = vor.u32 %v2602, %v2603
      %v2605 = vshll.u32 2475754826, %v2599
      %v2606 = vshrl.u32 2131351028, %v2600
      %v2607 = vor.u32 %v2605, %v2606
      %v2608 = vshll.u32 2131351028, %v2599
      %v2609 = vshrl.u32 2102212464, %v2600
      %v2610 = vor.u32 %v2608, %v2609
      %v2611 = vshll.u32 2102212464, %v2599
      %v2612 = vshrl.u32 920167782, %v2600
      %v2613 = vor.u32 %v2611, %v2612
      %v2614 = vshll.u32 920167782, %v2599
      %v2615 = vshrl.u32 1326507024, %v2600
      %v2616 = vor.u32 %v2614, %v2615
      %vm2617 = vcmp.lt.s32.totalorder %v2598, 1
      %vm2618 = vcmp.lt.s32.totalorder %v2598, 2
      %vm2619 = vcmp.lt.s32.totalorder %v2598, 3
      %vm2620 = vcmp.lt.s32.totalorder %v2598, 4
      %v2621 = vsel %vm2617, %v2601, %v2604
      %v2622 = vsel %vm2620, %v2610, 2102212464
      %v2623 = vsel %vm2619, %v2607, %v2622
      %v2624 = vsel %vm2618, %v2621, %v2623
      %v2625 = vsel %vm2617, %v2604, %v2607
      %v2626 = vsel %vm2620, %v2613, 920167782
      %v2627 = vsel %vm2619, %v2610, %v2626
      %v2628 = vsel %vm2618, %v2625, %v2627
      %v2629 = vsel %vm2617, %v2607, %v2610
      %v2630 = vsel %vm2620, %v2616, 1326507024
      %v2631 = vsel %vm2619, %v2613, %v2630
      %v2632 = vsel %vm2618, %v2629, %v2631
      %v2633 = vshll.u32 %v2593, 8
      %v2634 = vmul.u32.u64.compose %v2633, %v2632
      %v2635 = vextract.low.u32 %v2634
      %v2636 = vextract.high.u32 %v2634
      %v2637 = vmul.u32.u64.compose %v2633, %v2628
      %v2638 = vextract.low.u32 %v2637
      %v2639 = vextract.high.u32 %v2637
      %v2640 = vmul.u32 %v2633, %v2624
      %v2641 = vadd.s32 %v2636, %v2638
      %vm2642 = vc.u32 %v2636, %v2638
      %v2643 = vadd.s32 %v2639, 1
      %v2644 = vsel %vm2642, %v2643, %v2639
      %v2645 = vadd.s32 %v2640, %v2644
      %v2646 = vadd.s32 %v2645, 536870912
      %v2647 = vshrl.u32 %v2646, 30
      %v2648 = vshll.u32 %v2647, 30
      %v2649 = vsub.s32 %v2645, %v2648
      %vm2650 = vcmp.lt.s32.totalorder %v2649, 0
      %v2651 = vsub.s32 0, %v2649
      %v2652 = vsel %vm2650, %v2651, %v2649
      %v2653 = vclz %v2652
      %v2654 = vsub.s32 %v2653, 2
      %vm2655 = vcmp.gt.s32.totalorder 0, %v2654
      %v2656 = vsel %vm2655, 0, %v2654
      %v2657 = vsub.s32 32, %v2656
      %v2658 = vshll.u32 %v2649, %v2656
      %v2659 = vshrl.u32 %v2641, %v2657
      %v2660 = vor.u32 %v2658, %v2659
      %v2661 = vsub.s32 4294967266, %v2656
      %v2662 = vadd.s32 %v2661, 127
      %v2663 = vshll.u32 %v2662, 23
      %v2664 = vor.u32 4788187, %v2663
      %v2665 = vand.u32 2147483647, %v2664
      %v2667 = vcvt.s32.f32 %v2660
      %v2668 = vmul.f32 %v2667, %v2665
      %v2669 = vxor.u32 %v2668, 2147483648
      %v2670 = vsel %vm2587, %v2669, %v2668
      %v2671 = vsub.s32 4, %v2647
      %v2672 = vsel %vm2587, %v2671, %v2647
      %v2673 = vsel %vm2586, %v1214, %v2670
      %v2674 = vsel %vm2586, 0, %v2672
      %v2675 = vcosq.f32.pop %v2673
      %v2676 = vsinq.f32.pop %v2673
      %vm2677 = vweird.f32 %v1214
      %v2678 = vadd.s32 %v2674, 3
      %v2679 = vand.u32 %v2678, 3
      %vm2680 = vcmp.lt.s32.totalorder %v2679, 2
      %vm2681 = vcmp.eq.s32.totalorder %v2679, 0
      %v2682 = vxor.u32 %v2676, 2147483648
      %v2683 = vsel %vm2681, %v2675, %v2682
      %vm2684 = vcmp.eq.s32.totalorder %v2679, 2
      %v2685 = vxor.u32 %v2675, 2147483648
      %v2686 = vsel %vm2684, %v2685, %v2676
      %v2687 = vsel %vm2680, %v2683, %v2686
      %v2688 = vsel %vm2677, nan, %v2687
      %v2689 = vand.u32 2147483647, %v1215
      %vm2690 = vcmp.le.f32.partialorder %v2689, 0.7853982
      %vm2691 = vcmp.lt.s32.totalorder %v1215, 0
      %v2692 = vand.u32 %v1215, 2139095040
      %v2693 = vshrl.u32 %v2692, 23
      %v2694 = vsub.s32 %v2693, 127
      %v2695 = vand.u32 2147483647, %v1215
      %v2696 = vand.u32 %v2695, 8388607
      %v2697 = vor.u32 %v2696, 8388608
      %v2698 = vsub.s32 0, %v2697
      %v2699 = vadd.s32 %v2694, 1
      %vm2700 = vcmp.gt.s32.totalorder %v2699, 0
      %v2701 = vsel %vm2700, %v2699, 0
      %v2702 = vshrl.u32 %v2701, 5
      %v2703 = vand.u32 %v2701, 31
      %v2704 = vsub.s32 32, %v2703
      %v2705 = vshrl.u32 683565275, %v2704
      %v2706 = vshll.u32 683565275, %v2703
      %v2707 = vshrl.u32 2475754826, %v2704
      %v2708 = vor.u32 %v2706, %v2707
      %v2709 = vshll.u32 2475754826, %v2703
      %v2710 = vshrl.u32 2131351028, %v2704
      %v2711 = vor.u32 %v2709, %v2710
      %v2712 = vshll.u32 2131351028, %v2703
      %v2713 = vshrl.u32 2102212464, %v2704
      %v2714 = vor.u32 %v2712, %v2713
      %v2715 = vshll.u32 2102212464, %v2703
      %v2716 = vshrl.u32 920167782, %v2704
      %v2717 = vor.u32 %v2715, %v2716
      %v2718 = vshll.u32 920167782, %v2703
      %v2719 = vshrl.u32 1326507024, %v2704
      %v2720 = vor.u32 %v2718, %v2719
      %vm2721 = vcmp.lt.s32.totalorder %v2702, 1
      %vm2722 = vcmp.lt.s32.totalorder %v2702, 2
      %vm2723 = vcmp.lt.s32.totalorder %v2702, 3
      %vm2724 = vcmp.lt.s32.totalorder %v2702, 4
      %v2725 = vsel %vm2721, %v2705, %v2708
      %v2726 = vsel %vm2724, %v2714, 2102212464
      %v2727 = vsel %vm2723, %v2711, %v2726
      %v2728 = vsel %vm2722, %v2725, %v2727
      %v2729 = vsel %vm2721, %v2708, %v2711
      %v2730 = vsel %vm2724, %v2717, 920167782
      %v2731 = vsel %vm2723, %v2714, %v2730
      %v2732 = vsel %vm2722, %v2729, %v2731
      %v2733 = vsel %vm2721, %v2711, %v2714
      %v2734 = vsel %vm2724, %v2720, 1326507024
      %v2735 = vsel %vm2723, %v2717, %v2734
      %v2736 = vsel %vm2722, %v2733, %v2735
      %v2737 = vshll.u32 %v2697, 8
      %v2738 = vmul.u32.u64.compose %v2737, %v2736
      %v2739 = vextract.low.u32 %v2738
      %v2740 = vextract.high.u32 %v2738
      %v2741 = vmul.u32.u64.compose %v2737, %v2732
      %v2742 = vextract.low.u32 %v2741
      %v2743 = vextract.high.u32 %v2741
      %v2744 = vmul.u32 %v2737, %v2728
      %v2745 = vadd.s32 %v2740, %v2742
      %vm2746 = vc.u32 %v2740, %v2742
      %v2747 = vadd.s32 %v2743, 1
      %v2748 = vsel %vm2746, %v2747, %v2743
      %v2749 = vadd.s32 %v2744, %v2748
      %v2750 = vadd.s32 %v2749, 536870912
      %v2751 = vshrl.u32 %v2750, 30
      %v2752 = vshll.u32 %v2751, 30
      %v2753 = vsub.s32 %v2749, %v2752
      %vm2754 = vcmp.lt.s32.totalorder %v2753, 0
      %v2755 = vsub.s32 0, %v2753
      %v2756 = vsel %vm2754, %v2755, %v2753
      %v2757 = vclz %v2756
      %v2758 = vsub.s32 %v2757, 2
      %vm2759 = vcmp.gt.s32.totalorder 0, %v2758
      %v2760 = vsel %vm2759, 0, %v2758
      %v2761 = vsub.s32 32, %v2760
      %v2762 = vshll.u32 %v2753, %v2760
      %v2763 = vshrl.u32 %v2745, %v2761
      %v2764 = vor.u32 %v2762, %v2763
      %v2765 = vsub.s32 4294967266, %v2760
      %v2766 = vadd.s32 %v2765, 127
      %v2767 = vshll.u32 %v2766, 23
      %v2768 = vor.u32 4788187, %v2767
      %v2769 = vand.u32 2147483647, %v2768
      %v2771 = vcvt.s32.f32 %v2764
      %v2772 = vmul.f32 %v2771, %v2769
      %v2773 = vxor.u32 %v2772, 2147483648
      %v2774 = vsel %vm2691, %v2773, %v2772
      %v2775 = vsub.s32 4, %v2751
      %v2776 = vsel %vm2691, %v2775, %v2751
      %v2777 = vsel %vm2690, %v1215, %v2774
      %v2778 = vsel %vm2690, 0, %v2776
      %v2779 = vcosq.f32.pop %v2777
      %v2780 = vsinq.f32.pop %v2777
      %vm2781 = vweird.f32 %v1215
      %v2782 = vadd.s32 %v2778, 3
      %v2783 = vand.u32 %v2782, 3
      %vm2784 = vcmp.lt.s32.totalorder %v2783, 2
      %vm2785 = vcmp.eq.s32.totalorder %v2783, 0
      %v2786 = vxor.u32 %v2780, 2147483648
      %v2787 = vsel %vm2785, %v2779, %v2786
      %vm2788 = vcmp.eq.s32.totalorder %v2783, 2
      %v2789 = vxor.u32 %v2779, 2147483648
      %v2790 = vsel %vm2788, %v2789, %v2780
      %v2791 = vsel %vm2784, %v2787, %v2790
      %v2792 = vsel %vm2781, nan, %v2791
      %v2793 = vand.u32 2147483647, %v1216
      %vm2794 = vcmp.le.f32.partialorder %v2793, 0.7853982
      %vm2795 = vcmp.lt.s32.totalorder %v1216, 0
      %v2796 = vand.u32 %v1216, 2139095040
      %v2797 = vshrl.u32 %v2796, 23
      %v2798 = vsub.s32 %v2797, 127
      %v2799 = vand.u32 2147483647, %v1216
      %v2800 = vand.u32 %v2799, 8388607
      %v2801 = vor.u32 %v2800, 8388608
      %v2802 = vsub.s32 0, %v2801
      %v2803 = vadd.s32 %v2798, 1
      %vm2804 = vcmp.gt.s32.totalorder %v2803, 0
      %v2805 = vsel %vm2804, %v2803, 0
      %v2806 = vshrl.u32 %v2805, 5
      %v2807 = vand.u32 %v2805, 31
      %v2808 = vsub.s32 32, %v2807
      %v2809 = vshrl.u32 683565275, %v2808
      %v2810 = vshll.u32 683565275, %v2807
      %v2811 = vshrl.u32 2475754826, %v2808
      %v2812 = vor.u32 %v2810, %v2811
      %v2813 = vshll.u32 2475754826, %v2807
      %v2814 = vshrl.u32 2131351028, %v2808
      %v2815 = vor.u32 %v2813, %v2814
      %v2816 = vshll.u32 2131351028, %v2807
      %v2817 = vshrl.u32 2102212464, %v2808
      %v2818 = vor.u32 %v2816, %v2817
      %v2819 = vshll.u32 2102212464, %v2807
      %v2820 = vshrl.u32 920167782, %v2808
      %v2821 = vor.u32 %v2819, %v2820
      %v2822 = vshll.u32 920167782, %v2807
      %v2823 = vshrl.u32 1326507024, %v2808
      %v2824 = vor.u32 %v2822, %v2823
      %vm2825 = vcmp.lt.s32.totalorder %v2806, 1
      %vm2826 = vcmp.lt.s32.totalorder %v2806, 2
      %vm2827 = vcmp.lt.s32.totalorder %v2806, 3
      %vm2828 = vcmp.lt.s32.totalorder %v2806, 4
      %v2829 = vsel %vm2825, %v2809, %v2812
      %v2830 = vsel %vm2828, %v2818, 2102212464
      %v2831 = vsel %vm2827, %v2815, %v2830
      %v2832 = vsel %vm2826, %v2829, %v2831
      %v2833 = vsel %vm2825, %v2812, %v2815
      %v2834 = vsel %vm2828, %v2821, 920167782
      %v2835 = vsel %vm2827, %v2818, %v2834
      %v2836 = vsel %vm2826, %v2833, %v2835
      %v2837 = vsel %vm2825, %v2815, %v2818
      %v2838 = vsel %vm2828, %v2824, 1326507024
      %v2839 = vsel %vm2827, %v2821, %v2838
      %v2840 = vsel %vm2826, %v2837, %v2839
      %v2841 = vshll.u32 %v2801, 8
      %v2842 = vmul.u32.u64.compose %v2841, %v2840
      %v2843 = vextract.low.u32 %v2842
      %v2844 = vextract.high.u32 %v2842
      %v2845 = vmul.u32.u64.compose %v2841, %v2836
      %v2846 = vextract.low.u32 %v2845
      %v2847 = vextract.high.u32 %v2845
      %v2848 = vmul.u32 %v2841, %v2832
      %v2849 = vadd.s32 %v2844, %v2846
      %vm2850 = vc.u32 %v2844, %v2846
      %v2851 = vadd.s32 %v2847, 1
      %v2852 = vsel %vm2850, %v2851, %v2847
      %v2853 = vadd.s32 %v2848, %v2852
      %v2854 = vadd.s32 %v2853, 536870912
      %v2855 = vshrl.u32 %v2854, 30
      %v2856 = vshll.u32 %v2855, 30
      %v2857 = vsub.s32 %v2853, %v2856
      %vm2858 = vcmp.lt.s32.totalorder %v2857, 0
      %v2859 = vsub.s32 0, %v2857
      %v2860 = vsel %vm2858, %v2859, %v2857
      %v2861 = vclz %v2860
      %v2862 = vsub.s32 %v2861, 2
      %vm2863 = vcmp.gt.s32.totalorder 0, %v2862
      %v2864 = vsel %vm2863, 0, %v2862
      %v2865 = vsub.s32 32, %v2864
      %v2866 = vshll.u32 %v2857, %v2864
      %v2867 = vshrl.u32 %v2849, %v2865
      %v2868 = vor.u32 %v2866, %v2867
      %v2869 = vsub.s32 4294967266, %v2864
      %v2870 = vadd.s32 %v2869, 127
      %v2871 = vshll.u32 %v2870, 23
      %v2872 = vor.u32 4788187, %v2871
      %v2873 = vand.u32 2147483647, %v2872
      %v2875 = vcvt.s32.f32 %v2868
      %v2876 = vmul.f32 %v2875, %v2873
      %v2877 = vxor.u32 %v2876, 2147483648
      %v2878 = vsel %vm2795, %v2877, %v2876
      %v2879 = vsub.s32 4, %v2855
      %v2880 = vsel %vm2795, %v2879, %v2855
      %v2881 = vsel %vm2794, %v1216, %v2878
      %v2882 = vsel %vm2794, 0, %v2880
      %v2883 = vcosq.f32.pop %v2881
      %v2884 = vsinq.f32.pop %v2881
      %vm2885 = vweird.f32 %v1216
      %v2886 = vadd.s32 %v2882, 3
      %v2887 = vand.u32 %v2886, 3
      %vm2888 = vcmp.lt.s32.totalorder %v2887, 2
      %vm2889 = vcmp.eq.s32.totalorder %v2887, 0
      %v2890 = vxor.u32 %v2884, 2147483648
      %v2891 = vsel %vm2889, %v2883, %v2890
      %vm2892 = vcmp.eq.s32.totalorder %v2887, 2
      %v2893 = vxor.u32 %v2883, 2147483648
      %v2894 = vsel %vm2892, %v2893, %v2884
      %v2895 = vsel %vm2888, %v2891, %v2894
      %v2896 = vsel %vm2885, nan, %v2895
      %v2897 = vand.u32 2147483647, %v1217
      %vm2898 = vcmp.le.f32.partialorder %v2897, 0.7853982
      %vm2899 = vcmp.lt.s32.totalorder %v1217, 0
      %v2900 = vand.u32 %v1217, 2139095040
      %v2901 = vshrl.u32 %v2900, 23
      %v2902 = vsub.s32 %v2901, 127
      %v2903 = vand.u32 2147483647, %v1217
      %v2904 = vand.u32 %v2903, 8388607
      %v2905 = vor.u32 %v2904, 8388608
      %v2906 = vsub.s32 0, %v2905
      %v2907 = vadd.s32 %v2902, 1
      %vm2908 = vcmp.gt.s32.totalorder %v2907, 0
      %v2909 = vsel %vm2908, %v2907, 0
      %v2910 = vshrl.u32 %v2909, 5
      %v2911 = vand.u32 %v2909, 31
      %v2912 = vsub.s32 32, %v2911
      %v2913 = vshrl.u32 683565275, %v2912
      %v2914 = vshll.u32 683565275, %v2911
      %v2915 = vshrl.u32 2475754826, %v2912
      %v2916 = vor.u32 %v2914, %v2915
      %v2917 = vshll.u32 2475754826, %v2911
      %v2918 = vshrl.u32 2131351028, %v2912
      %v2919 = vor.u32 %v2917, %v2918
      %v2920 = vshll.u32 2131351028, %v2911
      %v2921 = vshrl.u32 2102212464, %v2912
      %v2922 = vor.u32 %v2920, %v2921
      %v2923 = vshll.u32 2102212464, %v2911
      %v2924 = vshrl.u32 920167782, %v2912
      %v2925 = vor.u32 %v2923, %v2924
      %v2926 = vshll.u32 920167782, %v2911
      %v2927 = vshrl.u32 1326507024, %v2912
      %v2928 = vor.u32 %v2926, %v2927
      %vm2929 = vcmp.lt.s32.totalorder %v2910, 1
      %vm2930 = vcmp.lt.s32.totalorder %v2910, 2
      %vm2931 = vcmp.lt.s32.totalorder %v2910, 3
      %vm2932 = vcmp.lt.s32.totalorder %v2910, 4
      %v2933 = vsel %vm2929, %v2913, %v2916
      %v2934 = vsel %vm2932, %v2922, 2102212464
      %v2935 = vsel %vm2931, %v2919, %v2934
      %v2936 = vsel %vm2930, %v2933, %v2935
      %v2937 = vsel %vm2929, %v2916, %v2919
      %v2938 = vsel %vm2932, %v2925, 920167782
      %v2939 = vsel %vm2931, %v2922, %v2938
      %v2940 = vsel %vm2930, %v2937, %v2939
      %v2941 = vsel %vm2929, %v2919, %v2922
      %v2942 = vsel %vm2932, %v2928, 1326507024
      %v2943 = vsel %vm2931, %v2925, %v2942
      %v2944 = vsel %vm2930, %v2941, %v2943
      %v2945 = vshll.u32 %v2905, 8
      %v2946 = vmul.u32.u64.compose %v2945, %v2944
      %v2947 = vextract.low.u32 %v2946
      %v2948 = vextract.high.u32 %v2946
      %v2949 = vmul.u32.u64.compose %v2945, %v2940
      %v2950 = vextract.low.u32 %v2949
      %v2951 = vextract.high.u32 %v2949
      %v2952 = vmul.u32 %v2945, %v2936
      %v2953 = vadd.s32 %v2948, %v2950
      %vm2954 = vc.u32 %v2948, %v2950
      %v2955 = vadd.s32 %v2951, 1
      %v2956 = vsel %vm2954, %v2955, %v2951
      %v2957 = vadd.s32 %v2952, %v2956
      %v2958 = vadd.s32 %v2957, 536870912
      %v2959 = vshrl.u32 %v2958, 30
      %v2960 = vshll.u32 %v2959, 30
      %v2961 = vsub.s32 %v2957, %v2960
      %vm2962 = vcmp.lt.s32.totalorder %v2961, 0
      %v2963 = vsub.s32 0, %v2961
      %v2964 = vsel %vm2962, %v2963, %v2961
      %v2965 = vclz %v2964
      %v2966 = vsub.s32 %v2965, 2
      %vm2967 = vcmp.gt.s32.totalorder 0, %v2966
      %v2968 = vsel %vm2967, 0, %v2966
      %v2969 = vsub.s32 32, %v2968
      %v2970 = vshll.u32 %v2961, %v2968
      %v2971 = vshrl.u32 %v2953, %v2969
      %v2972 = vor.u32 %v2970, %v2971
      %v2973 = vsub.s32 4294967266, %v2968
      %v2974 = vadd.s32 %v2973, 127
      %v2975 = vshll.u32 %v2974, 23
      %v2976 = vor.u32 4788187, %v2975
      %v2977 = vand.u32 2147483647, %v2976
      %v2979 = vcvt.s32.f32 %v2972
      %v2980 = vmul.f32 %v2979, %v2977
      %v2981 = vxor.u32 %v2980, 2147483648
      %v2982 = vsel %vm2899, %v2981, %v2980
      %v2983 = vsub.s32 4, %v2959
      %v2984 = vsel %vm2899, %v2983, %v2959
      %v2985 = vsel %vm2898, %v1217, %v2982
      %v2986 = vsel %vm2898, 0, %v2984
      %v2987 = vcosq.f32.pop %v2985
      %v2988 = vsinq.f32.pop %v2985
      %vm2989 = vweird.f32 %v1217
      %v2990 = vadd.s32 %v2986, 3
      %v2991 = vand.u32 %v2990, 3
      %vm2992 = vcmp.lt.s32.totalorder %v2991, 2
      %vm2993 = vcmp.eq.s32.totalorder %v2991, 0
      %v2994 = vxor.u32 %v2988, 2147483648
      %v2995 = vsel %vm2993, %v2987, %v2994
      %vm2996 = vcmp.eq.s32.totalorder %v2991, 2
      %v2997 = vxor.u32 %v2987, 2147483648
      %v2998 = vsel %vm2996, %v2997, %v2988
      %v2999 = vsel %vm2992, %v2995, %v2998
      %v3000 = vsel %vm2989, nan, %v2999
      %v3001 = vand.u32 2147483647, %v1218
      %vm3002 = vcmp.le.f32.partialorder %v3001, 0.7853982
      %vm3003 = vcmp.lt.s32.totalorder %v1218, 0
      %v3004 = vand.u32 %v1218, 2139095040
      %v3005 = vshrl.u32 %v3004, 23
      %v3006 = vsub.s32 %v3005, 127
      %v3007 = vand.u32 2147483647, %v1218
      %v3008 = vand.u32 %v3007, 8388607
      %v3009 = vor.u32 %v3008, 8388608
      %v3010 = vsub.s32 0, %v3009
      %v3011 = vadd.s32 %v3006, 1
      %vm3012 = vcmp.gt.s32.totalorder %v3011, 0
      %v3013 = vsel %vm3012, %v3011, 0
      %v3014 = vshrl.u32 %v3013, 5
      %v3015 = vand.u32 %v3013, 31
      %v3016 = vsub.s32 32, %v3015
      %v3017 = vshrl.u32 683565275, %v3016
      %v3018 = vshll.u32 683565275, %v3015
      %v3019 = vshrl.u32 2475754826, %v3016
      %v3020 = vor.u32 %v3018, %v3019
      %v3021 = vshll.u32 2475754826, %v3015
      %v3022 = vshrl.u32 2131351028, %v3016
      %v3023 = vor.u32 %v3021, %v3022
      %v3024 = vshll.u32 2131351028, %v3015
      %v3025 = vshrl.u32 2102212464, %v3016
      %v3026 = vor.u32 %v3024, %v3025
      %v3027 = vshll.u32 2102212464, %v3015
      %v3028 = vshrl.u32 920167782, %v3016
      %v3029 = vor.u32 %v3027, %v3028
      %v3030 = vshll.u32 920167782, %v3015
      %v3031 = vshrl.u32 1326507024, %v3016
      %v3032 = vor.u32 %v3030, %v3031
      %vm3033 = vcmp.lt.s32.totalorder %v3014, 1
      %vm3034 = vcmp.lt.s32.totalorder %v3014, 2
      %vm3035 = vcmp.lt.s32.totalorder %v3014, 3
      %vm3036 = vcmp.lt.s32.totalorder %v3014, 4
      %v3037 = vsel %vm3033, %v3017, %v3020
      %v3038 = vsel %vm3036, %v3026, 2102212464
      %v3039 = vsel %vm3035, %v3023, %v3038
      %v3040 = vsel %vm3034, %v3037, %v3039
      %v3041 = vsel %vm3033, %v3020, %v3023
      %v3042 = vsel %vm3036, %v3029, 920167782
      %v3043 = vsel %vm3035, %v3026, %v3042
      %v3044 = vsel %vm3034, %v3041, %v3043
      %v3045 = vsel %vm3033, %v3023, %v3026
      %v3046 = vsel %vm3036, %v3032, 1326507024
      %v3047 = vsel %vm3035, %v3029, %v3046
      %v3048 = vsel %vm3034, %v3045, %v3047
      %v3049 = vshll.u32 %v3009, 8
      %v3050 = vmul.u32.u64.compose %v3049, %v3048
      %v3051 = vextract.low.u32 %v3050
      %v3052 = vextract.high.u32 %v3050
      %v3053 = vmul.u32.u64.compose %v3049, %v3044
      %v3054 = vextract.low.u32 %v3053
      %v3055 = vextract.high.u32 %v3053
      %v3056 = vmul.u32 %v3049, %v3040
      %v3057 = vadd.s32 %v3052, %v3054
      %vm3058 = vc.u32 %v3052, %v3054
      %v3059 = vadd.s32 %v3055, 1
      %v3060 = vsel %vm3058, %v3059, %v3055
      %v3061 = vadd.s32 %v3056, %v3060
      %v3062 = vadd.s32 %v3061, 536870912
      %v3063 = vshrl.u32 %v3062, 30
      %v3064 = vshll.u32 %v3063, 30
      %v3065 = vsub.s32 %v3061, %v3064
      %vm3066 = vcmp.lt.s32.totalorder %v3065, 0
      %v3067 = vsub.s32 0, %v3065
      %v3068 = vsel %vm3066, %v3067, %v3065
      %v3069 = vclz %v3068
      %v3070 = vsub.s32 %v3069, 2
      %vm3071 = vcmp.gt.s32.totalorder 0, %v3070
      %v3072 = vsel %vm3071, 0, %v3070
      %v3073 = vsub.s32 32, %v3072
      %v3074 = vshll.u32 %v3065, %v3072
      %v3075 = vshrl.u32 %v3057, %v3073
      %v3076 = vor.u32 %v3074, %v3075
      %v3077 = vsub.s32 4294967266, %v3072
      %v3078 = vadd.s32 %v3077, 127
      %v3079 = vshll.u32 %v3078, 23
      %v3080 = vor.u32 4788187, %v3079
      %v3081 = vand.u32 2147483647, %v3080
      %v3083 = vcvt.s32.f32 %v3076
      %v3084 = vmul.f32 %v3083, %v3081
      %v3085 = vxor.u32 %v3084, 2147483648
      %v3086 = vsel %vm3003, %v3085, %v3084
      %v3087 = vsub.s32 4, %v3063
      %v3088 = vsel %vm3003, %v3087, %v3063
      %v3089 = vsel %vm3002, %v1218, %v3086
      %v3090 = vsel %vm3002, 0, %v3088
      %v3091 = vcosq.f32.pop %v3089
      %v3092 = vsinq.f32.pop %v3089
      %vm3093 = vweird.f32 %v1218
      %v3094 = vadd.s32 %v3090, 3
      %v3095 = vand.u32 %v3094, 3
      %vm3096 = vcmp.lt.s32.totalorder %v3095, 2
      %vm3097 = vcmp.eq.s32.totalorder %v3095, 0
      %v3098 = vxor.u32 %v3092, 2147483648
      %v3099 = vsel %vm3097, %v3091, %v3098
      %vm3100 = vcmp.eq.s32.totalorder %v3095, 2
      %v3101 = vxor.u32 %v3091, 2147483648
      %v3102 = vsel %vm3100, %v3101, %v3092
      %v3103 = vsel %vm3096, %v3099, %v3102
      %v3104 = vsel %vm3093, nan, %v3103
      %v3105 = vand.u32 2147483647, %v1219
      %vm3106 = vcmp.le.f32.partialorder %v3105, 0.7853982
      %vm3107 = vcmp.lt.s32.totalorder %v1219, 0
      %v3108 = vand.u32 %v1219, 2139095040
      %v3109 = vshrl.u32 %v3108, 23
      %v3110 = vsub.s32 %v3109, 127
      %v3111 = vand.u32 2147483647, %v1219
      %v3112 = vand.u32 %v3111, 8388607
      %v3113 = vor.u32 %v3112, 8388608
      %v3114 = vsub.s32 0, %v3113
      %v3115 = vadd.s32 %v3110, 1
      %vm3116 = vcmp.gt.s32.totalorder %v3115, 0
      %v3117 = vsel %vm3116, %v3115, 0
      %v3118 = vshrl.u32 %v3117, 5
      %v3119 = vand.u32 %v3117, 31
      %v3120 = vsub.s32 32, %v3119
      %v3121 = vshrl.u32 683565275, %v3120
      %v3122 = vshll.u32 683565275, %v3119
      %v3123 = vshrl.u32 2475754826, %v3120
      %v3124 = vor.u32 %v3122, %v3123
      %v3125 = vshll.u32 2475754826, %v3119
      %v3126 = vshrl.u32 2131351028, %v3120
      %v3127 = vor.u32 %v3125, %v3126
      %v3128 = vshll.u32 2131351028, %v3119
      %v3129 = vshrl.u32 2102212464, %v3120
      %v3130 = vor.u32 %v3128, %v3129
      %v3131 = vshll.u32 2102212464, %v3119
      %v3132 = vshrl.u32 920167782, %v3120
      %v3133 = vor.u32 %v3131, %v3132
      %v3134 = vshll.u32 920167782, %v3119
      %v3135 = vshrl.u32 1326507024, %v3120
      %v3136 = vor.u32 %v3134, %v3135
      %vm3137 = vcmp.lt.s32.totalorder %v3118, 1
      %vm3138 = vcmp.lt.s32.totalorder %v3118, 2
      %vm3139 = vcmp.lt.s32.totalorder %v3118, 3
      %vm3140 = vcmp.lt.s32.totalorder %v3118, 4
      %v3141 = vsel %vm3137, %v3121, %v3124
      %v3142 = vsel %vm3140, %v3130, 2102212464
      %v3143 = vsel %vm3139, %v3127, %v3142
      %v3144 = vsel %vm3138, %v3141, %v3143
      %v3145 = vsel %vm3137, %v3124, %v3127
      %v3146 = vsel %vm3140, %v3133, 920167782
      %v3147 = vsel %vm3139, %v3130, %v3146
      %v3148 = vsel %vm3138, %v3145, %v3147
      %v3149 = vsel %vm3137, %v3127, %v3130
      %v3150 = vsel %vm3140, %v3136, 1326507024
      %v3151 = vsel %vm3139, %v3133, %v3150
      %v3152 = vsel %vm3138, %v3149, %v3151
      %v3153 = vshll.u32 %v3113, 8
      %v3154 = vmul.u32.u64.compose %v3153, %v3152
      %v3155 = vextract.low.u32 %v3154
      %v3156 = vextract.high.u32 %v3154
      %v3157 = vmul.u32.u64.compose %v3153, %v3148
      %v3158 = vextract.low.u32 %v3157
      %v3159 = vextract.high.u32 %v3157
      %v3160 = vmul.u32 %v3153, %v3144
      %v3161 = vadd.s32 %v3156, %v3158
      %vm3162 = vc.u32 %v3156, %v3158
      %v3163 = vadd.s32 %v3159, 1
      %v3164 = vsel %vm3162, %v3163, %v3159
      %v3165 = vadd.s32 %v3160, %v3164
      %v3166 = vadd.s32 %v3165, 536870912
      %v3167 = vshrl.u32 %v3166, 30
      %v3168 = vshll.u32 %v3167, 30
      %v3169 = vsub.s32 %v3165, %v3168
      %vm3170 = vcmp.lt.s32.totalorder %v3169, 0
      %v3171 = vsub.s32 0, %v3169
      %v3172 = vsel %vm3170, %v3171, %v3169
      %v3173 = vclz %v3172
      %v3174 = vsub.s32 %v3173, 2
      %vm3175 = vcmp.gt.s32.totalorder 0, %v3174
      %v3176 = vsel %vm3175, 0, %v3174
      %v3177 = vsub.s32 32, %v3176
      %v3178 = vshll.u32 %v3169, %v3176
      %v3179 = vshrl.u32 %v3161, %v3177
      %v3180 = vor.u32 %v3178, %v3179
      %v3181 = vsub.s32 4294967266, %v3176
      %v3182 = vadd.s32 %v3181, 127
      %v3183 = vshll.u32 %v3182, 23
      %v3184 = vor.u32 4788187, %v3183
      %v3185 = vand.u32 2147483647, %v3184
      %v3187 = vcvt.s32.f32 %v3180
      %v3188 = vmul.f32 %v3187, %v3185
      %v3189 = vxor.u32 %v3188, 2147483648
      %v3190 = vsel %vm3107, %v3189, %v3188
      %v3191 = vsub.s32 4, %v3167
      %v3192 = vsel %vm3107, %v3191, %v3167
      %v3193 = vsel %vm3106, %v1219, %v3190
      %v3194 = vsel %vm3106, 0, %v3192
      %v3195 = vcosq.f32.pop %v3193
      %v3196 = vsinq.f32.pop %v3193
      %vm3197 = vweird.f32 %v1219
      %v3198 = vadd.s32 %v3194, 3
      %v3199 = vand.u32 %v3198, 3
      %vm3200 = vcmp.lt.s32.totalorder %v3199, 2
      %vm3201 = vcmp.eq.s32.totalorder %v3199, 0
      %v3202 = vxor.u32 %v3196, 2147483648
      %v3203 = vsel %vm3201, %v3195, %v3202
      %vm3204 = vcmp.eq.s32.totalorder %v3199, 2
      %v3205 = vxor.u32 %v3195, 2147483648
      %v3206 = vsel %vm3204, %v3205, %v3196
      %v3207 = vsel %vm3200, %v3203, %v3206
      %v3208 = vsel %vm3197, nan, %v3207
      %v3209 = vand.u32 2147483647, %v1220
      %vm3210 = vcmp.le.f32.partialorder %v3209, 0.7853982
      %vm3211 = vcmp.lt.s32.totalorder %v1220, 0
      %v3212 = vand.u32 %v1220, 2139095040
      %v3213 = vshrl.u32 %v3212, 23
      %v3214 = vsub.s32 %v3213, 127
      %v3215 = vand.u32 2147483647, %v1220
      %v3216 = vand.u32 %v3215, 8388607
      %v3217 = vor.u32 %v3216, 8388608
      %v3218 = vsub.s32 0, %v3217
      %v3219 = vadd.s32 %v3214, 1
      %vm3220 = vcmp.gt.s32.totalorder %v3219, 0
      %v3221 = vsel %vm3220, %v3219, 0
      %v3222 = vshrl.u32 %v3221, 5
      %v3223 = vand.u32 %v3221, 31
      %v3224 = vsub.s32 32, %v3223
      %v3225 = vshrl.u32 683565275, %v3224
      %v3226 = vshll.u32 683565275, %v3223
      %v3227 = vshrl.u32 2475754826, %v3224
      %v3228 = vor.u32 %v3226, %v3227
      %v3229 = vshll.u32 2475754826, %v3223
      %v3230 = vshrl.u32 2131351028, %v3224
      %v3231 = vor.u32 %v3229, %v3230
      %v3232 = vshll.u32 2131351028, %v3223
      %v3233 = vshrl.u32 2102212464, %v3224
      %v3234 = vor.u32 %v3232, %v3233
      %v3235 = vshll.u32 2102212464, %v3223
      %v3236 = vshrl.u32 920167782, %v3224
      %v3237 = vor.u32 %v3235, %v3236
      %v3238 = vshll.u32 920167782, %v3223
      %v3239 = vshrl.u32 1326507024, %v3224
      %v3240 = vor.u32 %v3238, %v3239
      %vm3241 = vcmp.lt.s32.totalorder %v3222, 1
      %vm3242 = vcmp.lt.s32.totalorder %v3222, 2
      %vm3243 = vcmp.lt.s32.totalorder %v3222, 3
      %vm3244 = vcmp.lt.s32.totalorder %v3222, 4
      %v3245 = vsel %vm3241, %v3225, %v3228
      %v3246 = vsel %vm3244, %v3234, 2102212464
      %v3247 = vsel %vm3243, %v3231, %v3246
      %v3248 = vsel %vm3242, %v3245, %v3247
      %v3249 = vsel %vm3241, %v3228, %v3231
      %v3250 = vsel %vm3244, %v3237, 920167782
      %v3251 = vsel %vm3243, %v3234, %v3250
      %v3252 = vsel %vm3242, %v3249, %v3251
      %v3253 = vsel %vm3241, %v3231, %v3234
      %v3254 = vsel %vm3244, %v3240, 1326507024
      %v3255 = vsel %vm3243, %v3237, %v3254
      %v3256 = vsel %vm3242, %v3253, %v3255
      %v3257 = vshll.u32 %v3217, 8
      %v3258 = vmul.u32.u64.compose %v3257, %v3256
      %v3259 = vextract.low.u32 %v3258
      %v3260 = vextract.high.u32 %v3258
      %v3261 = vmul.u32.u64.compose %v3257, %v3252
      %v3262 = vextract.low.u32 %v3261
      %v3263 = vextract.high.u32 %v3261
      %v3264 = vmul.u32 %v3257, %v3248
      %v3265 = vadd.s32 %v3260, %v3262
      %vm3266 = vc.u32 %v3260, %v3262
      %v3267 = vadd.s32 %v3263, 1
      %v3268 = vsel %vm3266, %v3267, %v3263
      %v3269 = vadd.s32 %v3264, %v3268
      %v3270 = vadd.s32 %v3269, 536870912
      %v3271 = vshrl.u32 %v3270, 30
      %v3272 = vshll.u32 %v3271, 30
      %v3273 = vsub.s32 %v3269, %v3272
      %vm3274 = vcmp.lt.s32.totalorder %v3273, 0
      %v3275 = vsub.s32 0, %v3273
      %v3276 = vsel %vm3274, %v3275, %v3273
      %v3277 = vclz %v3276
      %v3278 = vsub.s32 %v3277, 2
      %vm3279 = vcmp.gt.s32.totalorder 0, %v3278
      %v3280 = vsel %vm3279, 0, %v3278
      %v3281 = vsub.s32 32, %v3280
      %v3282 = vshll.u32 %v3273, %v3280
      %v3283 = vshrl.u32 %v3265, %v3281
      %v3284 = vor.u32 %v3282, %v3283
      %v3285 = vsub.s32 4294967266, %v3280
      %v3286 = vadd.s32 %v3285, 127
      %v3287 = vshll.u32 %v3286, 23
      %v3288 = vor.u32 4788187, %v3287
      %v3289 = vand.u32 2147483647, %v3288
      %v3291 = vcvt.s32.f32 %v3284
      %v3292 = vmul.f32 %v3291, %v3289
      %v3293 = vxor.u32 %v3292, 2147483648
      %v3294 = vsel %vm3211, %v3293, %v3292
      %v3295 = vsub.s32 4, %v3271
      %v3296 = vsel %vm3211, %v3295, %v3271
      %v3297 = vsel %vm3210, %v1220, %v3294
      %v3298 = vsel %vm3210, 0, %v3296
      %v3299 = vcosq.f32.pop %v3297
      %v3300 = vsinq.f32.pop %v3297
      %vm3301 = vweird.f32 %v1220
      %v3302 = vadd.s32 %v3298, 3
      %v3303 = vand.u32 %v3302, 3
      %vm3304 = vcmp.lt.s32.totalorder %v3303, 2
      %vm3305 = vcmp.eq.s32.totalorder %v3303, 0
      %v3306 = vxor.u32 %v3300, 2147483648
      %v3307 = vsel %vm3305, %v3299, %v3306
      %vm3308 = vcmp.eq.s32.totalorder %v3303, 2
      %v3309 = vxor.u32 %v3299, 2147483648
      %v3310 = vsel %vm3308, %v3309, %v3300
      %v3311 = vsel %vm3304, %v3307, %v3310
      %v3312 = vsel %vm3301, nan, %v3311
      %v3313 = vand.u32 2147483647, %v1221
      %vm3314 = vcmp.le.f32.partialorder %v3313, 0.7853982
      %vm3315 = vcmp.lt.s32.totalorder %v1221, 0
      %v3316 = vand.u32 %v1221, 2139095040
      %v3317 = vshrl.u32 %v3316, 23
      %v3318 = vsub.s32 %v3317, 127
      %v3319 = vand.u32 2147483647, %v1221
      %v3320 = vand.u32 %v3319, 8388607
      %v3321 = vor.u32 %v3320, 8388608
      %v3322 = vsub.s32 0, %v3321
      %v3323 = vadd.s32 %v3318, 1
      %vm3324 = vcmp.gt.s32.totalorder %v3323, 0
      %v3325 = vsel %vm3324, %v3323, 0
      %v3326 = vshrl.u32 %v3325, 5
      %v3327 = vand.u32 %v3325, 31
      %v3328 = vsub.s32 32, %v3327
      %v3329 = vshrl.u32 683565275, %v3328
      %v3330 = vshll.u32 683565275, %v3327
      %v3331 = vshrl.u32 2475754826, %v3328
      %v3332 = vor.u32 %v3330, %v3331
      %v3333 = vshll.u32 2475754826, %v3327
      %v3334 = vshrl.u32 2131351028, %v3328
      %v3335 = vor.u32 %v3333, %v3334
      %v3336 = vshll.u32 2131351028, %v3327
      %v3337 = vshrl.u32 2102212464, %v3328
      %v3338 = vor.u32 %v3336, %v3337
      %v3339 = vshll.u32 2102212464, %v3327
      %v3340 = vshrl.u32 920167782, %v3328
      %v3341 = vor.u32 %v3339, %v3340
      %v3342 = vshll.u32 920167782, %v3327
      %v3343 = vshrl.u32 1326507024, %v3328
      %v3344 = vor.u32 %v3342, %v3343
      %vm3345 = vcmp.lt.s32.totalorder %v3326, 1
      %vm3346 = vcmp.lt.s32.totalorder %v3326, 2
      %vm3347 = vcmp.lt.s32.totalorder %v3326, 3
      %vm3348 = vcmp.lt.s32.totalorder %v3326, 4
      %v3349 = vsel %vm3345, %v3329, %v3332
      %v3350 = vsel %vm3348, %v3338, 2102212464
      %v3351 = vsel %vm3347, %v3335, %v3350
      %v3352 = vsel %vm3346, %v3349, %v3351
      %v3353 = vsel %vm3345, %v3332, %v3335
      %v3354 = vsel %vm3348, %v3341, 920167782
      %v3355 = vsel %vm3347, %v3338, %v3354
      %v3356 = vsel %vm3346, %v3353, %v3355
      %v3357 = vsel %vm3345, %v3335, %v3338
      %v3358 = vsel %vm3348, %v3344, 1326507024
      %v3359 = vsel %vm3347, %v3341, %v3358
      %v3360 = vsel %vm3346, %v3357, %v3359
      %v3361 = vshll.u32 %v3321, 8
      %v3362 = vmul.u32.u64.compose %v3361, %v3360
      %v3363 = vextract.low.u32 %v3362
      %v3364 = vextract.high.u32 %v3362
      %v3365 = vmul.u32.u64.compose %v3361, %v3356
      %v3366 = vextract.low.u32 %v3365
      %v3367 = vextract.high.u32 %v3365
      %v3368 = vmul.u32 %v3361, %v3352
      %v3369 = vadd.s32 %v3364, %v3366
      %vm3370 = vc.u32 %v3364, %v3366
      %v3371 = vadd.s32 %v3367, 1
      %v3372 = vsel %vm3370, %v3371, %v3367
      %v3373 = vadd.s32 %v3368, %v3372
      %v3374 = vadd.s32 %v3373, 536870912
      %v3375 = vshrl.u32 %v3374, 30
      %v3376 = vshll.u32 %v3375, 30
      %v3377 = vsub.s32 %v3373, %v3376
      %vm3378 = vcmp.lt.s32.totalorder %v3377, 0
      %v3379 = vsub.s32 0, %v3377
      %v3380 = vsel %vm3378, %v3379, %v3377
      %v3381 = vclz %v3380
      %v3382 = vsub.s32 %v3381, 2
      %vm3383 = vcmp.gt.s32.totalorder 0, %v3382
      %v3384 = vsel %vm3383, 0, %v3382
      %v3385 = vsub.s32 32, %v3384
      %v3386 = vshll.u32 %v3377, %v3384
      %v3387 = vshrl.u32 %v3369, %v3385
      %v3388 = vor.u32 %v3386, %v3387
      %v3389 = vsub.s32 4294967266, %v3384
      %v3390 = vadd.s32 %v3389, 127
      %v3391 = vshll.u32 %v3390, 23
      %v3392 = vor.u32 4788187, %v3391
      %v3393 = vand.u32 2147483647, %v3392
      %v3395 = vcvt.s32.f32 %v3388
      %v3396 = vmul.f32 %v3395, %v3393
      %v3397 = vxor.u32 %v3396, 2147483648
      %v3398 = vsel %vm3315, %v3397, %v3396
      %v3399 = vsub.s32 4, %v3375
      %v3400 = vsel %vm3315, %v3399, %v3375
      %v3401 = vsel %vm3314, %v1221, %v3398
      %v3402 = vsel %vm3314, 0, %v3400
      %v3403 = vcosq.f32.pop %v3401
      %v3404 = vsinq.f32.pop %v3401
      %vm3405 = vweird.f32 %v1221
      %v3406 = vadd.s32 %v3402, 3
      %v3407 = vand.u32 %v3406, 3
      %vm3408 = vcmp.lt.s32.totalorder %v3407, 2
      %vm3409 = vcmp.eq.s32.totalorder %v3407, 0
      %v3410 = vxor.u32 %v3404, 2147483648
      %v3411 = vsel %vm3409, %v3403, %v3410
      %vm3412 = vcmp.eq.s32.totalorder %v3407, 2
      %v3413 = vxor.u32 %v3403, 2147483648
      %v3414 = vsel %vm3412, %v3413, %v3404
      %v3415 = vsel %vm3408, %v3411, %v3414
      %v3416 = vsel %vm3405, nan, %v3415
      %v3417 = vand.u32 2147483647, %v1222
      %vm3418 = vcmp.le.f32.partialorder %v3417, 0.7853982
      %vm3419 = vcmp.lt.s32.totalorder %v1222, 0
      %v3420 = vand.u32 %v1222, 2139095040
      %v3421 = vshrl.u32 %v3420, 23
      %v3422 = vsub.s32 %v3421, 127
      %v3423 = vand.u32 2147483647, %v1222
      %v3424 = vand.u32 %v3423, 8388607
      %v3425 = vor.u32 %v3424, 8388608
      %v3426 = vsub.s32 0, %v3425
      %v3427 = vadd.s32 %v3422, 1
      %vm3428 = vcmp.gt.s32.totalorder %v3427, 0
      %v3429 = vsel %vm3428, %v3427, 0
      %v3430 = vshrl.u32 %v3429, 5
      %v3431 = vand.u32 %v3429, 31
      %v3432 = vsub.s32 32, %v3431
      %v3433 = vshrl.u32 683565275, %v3432
      %v3434 = vshll.u32 683565275, %v3431
      %v3435 = vshrl.u32 2475754826, %v3432
      %v3436 = vor.u32 %v3434, %v3435
      %v3437 = vshll.u32 2475754826, %v3431
      %v3438 = vshrl.u32 2131351028, %v3432
      %v3439 = vor.u32 %v3437, %v3438
      %v3440 = vshll.u32 2131351028, %v3431
      %v3441 = vshrl.u32 2102212464, %v3432
      %v3442 = vor.u32 %v3440, %v3441
      %v3443 = vshll.u32 2102212464, %v3431
      %v3444 = vshrl.u32 920167782, %v3432
      %v3445 = vor.u32 %v3443, %v3444
      %v3446 = vshll.u32 920167782, %v3431
      %v3447 = vshrl.u32 1326507024, %v3432
      %v3448 = vor.u32 %v3446, %v3447
      %vm3449 = vcmp.lt.s32.totalorder %v3430, 1
      %vm3450 = vcmp.lt.s32.totalorder %v3430, 2
      %vm3451 = vcmp.lt.s32.totalorder %v3430, 3
      %vm3452 = vcmp.lt.s32.totalorder %v3430, 4
      %v3453 = vsel %vm3449, %v3433, %v3436
      %v3454 = vsel %vm3452, %v3442, 2102212464
      %v3455 = vsel %vm3451, %v3439, %v3454
      %v3456 = vsel %vm3450, %v3453, %v3455
      %v3457 = vsel %vm3449, %v3436, %v3439
      %v3458 = vsel %vm3452, %v3445, 920167782
      %v3459 = vsel %vm3451, %v3442, %v3458
      %v3460 = vsel %vm3450, %v3457, %v3459
      %v3461 = vsel %vm3449, %v3439, %v3442
      %v3462 = vsel %vm3452, %v3448, 1326507024
      %v3463 = vsel %vm3451, %v3445, %v3462
      %v3464 = vsel %vm3450, %v3461, %v3463
      %v3465 = vshll.u32 %v3425, 8
      %v3466 = vmul.u32.u64.compose %v3465, %v3464
      %v3467 = vextract.low.u32 %v3466
      %v3468 = vextract.high.u32 %v3466
      %v3469 = vmul.u32.u64.compose %v3465, %v3460
      %v3470 = vextract.low.u32 %v3469
      %v3471 = vextract.high.u32 %v3469
      %v3472 = vmul.u32 %v3465, %v3456
      %v3473 = vadd.s32 %v3468, %v3470
      %vm3474 = vc.u32 %v3468, %v3470
      %v3475 = vadd.s32 %v3471, 1
      %v3476 = vsel %vm3474, %v3475, %v3471
      %v3477 = vadd.s32 %v3472, %v3476
      %v3478 = vadd.s32 %v3477, 536870912
      %v3479 = vshrl.u32 %v3478, 30
      %v3480 = vshll.u32 %v3479, 30
      %v3481 = vsub.s32 %v3477, %v3480
      %vm3482 = vcmp.lt.s32.totalorder %v3481, 0
      %v3483 = vsub.s32 0, %v3481
      %v3484 = vsel %vm3482, %v3483, %v3481
      %v3485 = vclz %v3484
      %v3486 = vsub.s32 %v3485, 2
      %vm3487 = vcmp.gt.s32.totalorder 0, %v3486
      %v3488 = vsel %vm3487, 0, %v3486
      %v3489 = vsub.s32 32, %v3488
      %v3490 = vshll.u32 %v3481, %v3488
      %v3491 = vshrl.u32 %v3473, %v3489
      %v3492 = vor.u32 %v3490, %v3491
      %v3493 = vsub.s32 4294967266, %v3488
      %v3494 = vadd.s32 %v3493, 127
      %v3495 = vshll.u32 %v3494, 23
      %v3496 = vor.u32 4788187, %v3495
      %v3497 = vand.u32 2147483647, %v3496
      %v3499 = vcvt.s32.f32 %v3492
      %v3500 = vmul.f32 %v3499, %v3497
      %v3501 = vxor.u32 %v3500, 2147483648
      %v3502 = vsel %vm3419, %v3501, %v3500
      %v3503 = vsub.s32 4, %v3479
      %v3504 = vsel %vm3419, %v3503, %v3479
      %v3505 = vsel %vm3418, %v1222, %v3502
      %v3506 = vsel %vm3418, 0, %v3504
      %v3507 = vcosq.f32.pop %v3505
      %v3508 = vsinq.f32.pop %v3505
      %vm3509 = vweird.f32 %v1222
      %v3510 = vadd.s32 %v3506, 3
      %v3511 = vand.u32 %v3510, 3
      %vm3512 = vcmp.lt.s32.totalorder %v3511, 2
      %vm3513 = vcmp.eq.s32.totalorder %v3511, 0
      %v3514 = vxor.u32 %v3508, 2147483648
      %v3515 = vsel %vm3513, %v3507, %v3514
      %vm3516 = vcmp.eq.s32.totalorder %v3511, 2
      %v3517 = vxor.u32 %v3507, 2147483648
      %v3518 = vsel %vm3516, %v3517, %v3508
      %v3519 = vsel %vm3512, %v3515, %v3518
      %v3520 = vsel %vm3509, nan, %v3519
      %v3521 = vand.u32 2147483647, %v1223
      %vm3522 = vcmp.le.f32.partialorder %v3521, 0.7853982
      %vm3523 = vcmp.lt.s32.totalorder %v1223, 0
      %v3524 = vand.u32 %v1223, 2139095040
      %v3525 = vshrl.u32 %v3524, 23
      %v3526 = vsub.s32 %v3525, 127
      %v3527 = vand.u32 2147483647, %v1223
      %v3528 = vand.u32 %v3527, 8388607
      %v3529 = vor.u32 %v3528, 8388608
      %v3530 = vsub.s32 0, %v3529
      %v3531 = vadd.s32 %v3526, 1
      %vm3532 = vcmp.gt.s32.totalorder %v3531, 0
      %v3533 = vsel %vm3532, %v3531, 0
      %v3534 = vshrl.u32 %v3533, 5
      %v3535 = vand.u32 %v3533, 31
      %v3536 = vsub.s32 32, %v3535
      %v3537 = vshrl.u32 683565275, %v3536
      %v3538 = vshll.u32 683565275, %v3535
      %v3539 = vshrl.u32 2475754826, %v3536
      %v3540 = vor.u32 %v3538, %v3539
      %v3541 = vshll.u32 2475754826, %v3535
      %v3542 = vshrl.u32 2131351028, %v3536
      %v3543 = vor.u32 %v3541, %v3542
      %v3544 = vshll.u32 2131351028, %v3535
      %v3545 = vshrl.u32 2102212464, %v3536
      %v3546 = vor.u32 %v3544, %v3545
      %v3547 = vshll.u32 2102212464, %v3535
      %v3548 = vshrl.u32 920167782, %v3536
      %v3549 = vor.u32 %v3547, %v3548
      %v3550 = vshll.u32 920167782, %v3535
      %v3551 = vshrl.u32 1326507024, %v3536
      %v3552 = vor.u32 %v3550, %v3551
      %vm3553 = vcmp.lt.s32.totalorder %v3534, 1
      %vm3554 = vcmp.lt.s32.totalorder %v3534, 2
      %vm3555 = vcmp.lt.s32.totalorder %v3534, 3
      %vm3556 = vcmp.lt.s32.totalorder %v3534, 4
      %v3557 = vsel %vm3553, %v3537, %v3540
      %v3558 = vsel %vm3556, %v3546, 2102212464
      %v3559 = vsel %vm3555, %v3543, %v3558
      %v3560 = vsel %vm3554, %v3557, %v3559
      %v3561 = vsel %vm3553, %v3540, %v3543
      %v3562 = vsel %vm3556, %v3549, 920167782
      %v3563 = vsel %vm3555, %v3546, %v3562
      %v3564 = vsel %vm3554, %v3561, %v3563
      %v3565 = vsel %vm3553, %v3543, %v3546
      %v3566 = vsel %vm3556, %v3552, 1326507024
      %v3567 = vsel %vm3555, %v3549, %v3566
      %v3568 = vsel %vm3554, %v3565, %v3567
      %v3569 = vshll.u32 %v3529, 8
      %v3570 = vmul.u32.u64.compose %v3569, %v3568
      %v3571 = vextract.low.u32 %v3570
      %v3572 = vextract.high.u32 %v3570
      %v3573 = vmul.u32.u64.compose %v3569, %v3564
      %v3574 = vextract.low.u32 %v3573
      %v3575 = vextract.high.u32 %v3573
      %v3576 = vmul.u32 %v3569, %v3560
      %v3577 = vadd.s32 %v3572, %v3574
      %vm3578 = vc.u32 %v3572, %v3574
      %v3579 = vadd.s32 %v3575, 1
      %v3580 = vsel %vm3578, %v3579, %v3575
      %v3581 = vadd.s32 %v3576, %v3580
      %v3582 = vadd.s32 %v3581, 536870912
      %v3583 = vshrl.u32 %v3582, 30
      %v3584 = vshll.u32 %v3583, 30
      %v3585 = vsub.s32 %v3581, %v3584
      %vm3586 = vcmp.lt.s32.totalorder %v3585, 0
      %v3587 = vsub.s32 0, %v3585
      %v3588 = vsel %vm3586, %v3587, %v3585
      %v3589 = vclz %v3588
      %v3590 = vsub.s32 %v3589, 2
      %vm3591 = vcmp.gt.s32.totalorder 0, %v3590
      %v3592 = vsel %vm3591, 0, %v3590
      %v3593 = vsub.s32 32, %v3592
      %v3594 = vshll.u32 %v3585, %v3592
      %v3595 = vshrl.u32 %v3577, %v3593
      %v3596 = vor.u32 %v3594, %v3595
      %v3597 = vsub.s32 4294967266, %v3592
      %v3598 = vadd.s32 %v3597, 127
      %v3599 = vshll.u32 %v3598, 23
      %v3600 = vor.u32 4788187, %v3599
      %v3601 = vand.u32 2147483647, %v3600
      %v3603 = vcvt.s32.f32 %v3596
      %v3604 = vmul.f32 %v3603, %v3601
      %v3605 = vxor.u32 %v3604, 2147483648
      %v3606 = vsel %vm3523, %v3605, %v3604
      %v3607 = vsub.s32 4, %v3583
      %v3608 = vsel %vm3523, %v3607, %v3583
      %v3609 = vsel %vm3522, %v1223, %v3606
      %v3610 = vsel %vm3522, 0, %v3608
      %v3611 = vcosq.f32.pop %v3609
      %v3612 = vsinq.f32.pop %v3609
      %vm3613 = vweird.f32 %v1223
      %v3614 = vadd.s32 %v3610, 3
      %v3615 = vand.u32 %v3614, 3
      %vm3616 = vcmp.lt.s32.totalorder %v3615, 2
      %vm3617 = vcmp.eq.s32.totalorder %v3615, 0
      %v3618 = vxor.u32 %v3612, 2147483648
      %v3619 = vsel %vm3617, %v3611, %v3618
      %vm3620 = vcmp.eq.s32.totalorder %v3615, 2
      %v3621 = vxor.u32 %v3611, 2147483648
      %v3622 = vsel %vm3620, %v3621, %v3612
      %v3623 = vsel %vm3616, %v3619, %v3622
      %v3624 = vsel %vm3613, nan, %v3623
      %v3625 = vand.u32 2147483647, %v1224
      %vm3626 = vcmp.le.f32.partialorder %v3625, 0.7853982
      %vm3627 = vcmp.lt.s32.totalorder %v1224, 0
      %v3628 = vand.u32 %v1224, 2139095040
      %v3629 = vshrl.u32 %v3628, 23
      %v3630 = vsub.s32 %v3629, 127
      %v3631 = vand.u32 2147483647, %v1224
      %v3632 = vand.u32 %v3631, 8388607
      %v3633 = vor.u32 %v3632, 8388608
      %v3634 = vsub.s32 0, %v3633
      %v3635 = vadd.s32 %v3630, 1
      %vm3636 = vcmp.gt.s32.totalorder %v3635, 0
      %v3637 = vsel %vm3636, %v3635, 0
      %v3638 = vshrl.u32 %v3637, 5
      %v3639 = vand.u32 %v3637, 31
      %v3640 = vsub.s32 32, %v3639
      %v3641 = vshrl.u32 683565275, %v3640
      %v3642 = vshll.u32 683565275, %v3639
      %v3643 = vshrl.u32 2475754826, %v3640
      %v3644 = vor.u32 %v3642, %v3643
      %v3645 = vshll.u32 2475754826, %v3639
      %v3646 = vshrl.u32 2131351028, %v3640
      %v3647 = vor.u32 %v3645, %v3646
      %v3648 = vshll.u32 2131351028, %v3639
      %v3649 = vshrl.u32 2102212464, %v3640
      %v3650 = vor.u32 %v3648, %v3649
      %v3651 = vshll.u32 2102212464, %v3639
      %v3652 = vshrl.u32 920167782, %v3640
      %v3653 = vor.u32 %v3651, %v3652
      %v3654 = vshll.u32 920167782, %v3639
      %v3655 = vshrl.u32 1326507024, %v3640
      %v3656 = vor.u32 %v3654, %v3655
      %vm3657 = vcmp.lt.s32.totalorder %v3638, 1
      %vm3658 = vcmp.lt.s32.totalorder %v3638, 2
      %vm3659 = vcmp.lt.s32.totalorder %v3638, 3
      %vm3660 = vcmp.lt.s32.totalorder %v3638, 4
      %v3661 = vsel %vm3657, %v3641, %v3644
      %v3662 = vsel %vm3660, %v3650, 2102212464
      %v3663 = vsel %vm3659, %v3647, %v3662
      %v3664 = vsel %vm3658, %v3661, %v3663
      %v3665 = vsel %vm3657, %v3644, %v3647
      %v3666 = vsel %vm3660, %v3653, 920167782
      %v3667 = vsel %vm3659, %v3650, %v3666
      %v3668 = vsel %vm3658, %v3665, %v3667
      %v3669 = vsel %vm3657, %v3647, %v3650
      %v3670 = vsel %vm3660, %v3656, 1326507024
      %v3671 = vsel %vm3659, %v3653, %v3670
      %v3672 = vsel %vm3658, %v3669, %v3671
      %v3673 = vshll.u32 %v3633, 8
      %v3674 = vmul.u32.u64.compose %v3673, %v3672
      %v3675 = vextract.low.u32 %v3674
      %v3676 = vextract.high.u32 %v3674
      %v3677 = vmul.u32.u64.compose %v3673, %v3668
      %v3678 = vextract.low.u32 %v3677
      %v3679 = vextract.high.u32 %v3677
      %v3680 = vmul.u32 %v3673, %v3664
      %v3681 = vadd.s32 %v3676, %v3678
      %vm3682 = vc.u32 %v3676, %v3678
      %v3683 = vadd.s32 %v3679, 1
      %v3684 = vsel %vm3682, %v3683, %v3679
      %v3685 = vadd.s32 %v3680, %v3684
      %v3686 = vadd.s32 %v3685, 536870912
      %v3687 = vshrl.u32 %v3686, 30
      %v3688 = vshll.u32 %v3687, 30
      %v3689 = vsub.s32 %v3685, %v3688
      %vm3690 = vcmp.lt.s32.totalorder %v3689, 0
      %v3691 = vsub.s32 0, %v3689
      %v3692 = vsel %vm3690, %v3691, %v3689
      %v3693 = vclz %v3692
      %v3694 = vsub.s32 %v3693, 2
      %vm3695 = vcmp.gt.s32.totalorder 0, %v3694
      %v3696 = vsel %vm3695, 0, %v3694
      %v3697 = vsub.s32 32, %v3696
      %v3698 = vshll.u32 %v3689, %v3696
      %v3699 = vshrl.u32 %v3681, %v3697
      %v3700 = vor.u32 %v3698, %v3699
      %v3701 = vsub.s32 4294967266, %v3696
      %v3702 = vadd.s32 %v3701, 127
      %v3703 = vshll.u32 %v3702, 23
      %v3704 = vor.u32 4788187, %v3703
      %v3705 = vand.u32 2147483647, %v3704
      %v3707 = vcvt.s32.f32 %v3700
      %v3708 = vmul.f32 %v3707, %v3705
      %v3709 = vxor.u32 %v3708, 2147483648
      %v3710 = vsel %vm3627, %v3709, %v3708
      %v3711 = vsub.s32 4, %v3687
      %v3712 = vsel %vm3627, %v3711, %v3687
      %v3713 = vsel %vm3626, %v1224, %v3710
      %v3714 = vsel %vm3626, 0, %v3712
      %v3715 = vcosq.f32.pop %v3713
      %v3716 = vsinq.f32.pop %v3713
      %vm3717 = vweird.f32 %v1224
      %v3718 = vadd.s32 %v3714, 3
      %v3719 = vand.u32 %v3718, 3
      %vm3720 = vcmp.lt.s32.totalorder %v3719, 2
      %vm3721 = vcmp.eq.s32.totalorder %v3719, 0
      %v3722 = vxor.u32 %v3716, 2147483648
      %v3723 = vsel %vm3721, %v3715, %v3722
      %vm3724 = vcmp.eq.s32.totalorder %v3719, 2
      %v3725 = vxor.u32 %v3715, 2147483648
      %v3726 = vsel %vm3724, %v3725, %v3716
      %v3727 = vsel %vm3720, %v3723, %v3726
      %v3728 = vsel %vm3717, nan, %v3727
      %v3729 = vand.u32 2147483647, %v1225
      %vm3730 = vcmp.le.f32.partialorder %v3729, 0.7853982
      %vm3731 = vcmp.lt.s32.totalorder %v1225, 0
      %v3732 = vand.u32 %v1225, 2139095040
      %v3733 = vshrl.u32 %v3732, 23
      %v3734 = vsub.s32 %v3733, 127
      %v3735 = vand.u32 2147483647, %v1225
      %v3736 = vand.u32 %v3735, 8388607
      %v3737 = vor.u32 %v3736, 8388608
      %v3738 = vsub.s32 0, %v3737
      %v3739 = vadd.s32 %v3734, 1
      %vm3740 = vcmp.gt.s32.totalorder %v3739, 0
      %v3741 = vsel %vm3740, %v3739, 0
      %v3742 = vshrl.u32 %v3741, 5
      %v3743 = vand.u32 %v3741, 31
      %v3744 = vsub.s32 32, %v3743
      %v3745 = vshrl.u32 683565275, %v3744
      %v3746 = vshll.u32 683565275, %v3743
      %v3747 = vshrl.u32 2475754826, %v3744
      %v3748 = vor.u32 %v3746, %v3747
      %v3749 = vshll.u32 2475754826, %v3743
      %v3750 = vshrl.u32 2131351028, %v3744
      %v3751 = vor.u32 %v3749, %v3750
      %v3752 = vshll.u32 2131351028, %v3743
      %v3753 = vshrl.u32 2102212464, %v3744
      %v3754 = vor.u32 %v3752, %v3753
      %v3755 = vshll.u32 2102212464, %v3743
      %v3756 = vshrl.u32 920167782, %v3744
      %v3757 = vor.u32 %v3755, %v3756
      %v3758 = vshll.u32 920167782, %v3743
      %v3759 = vshrl.u32 1326507024, %v3744
      %v3760 = vor.u32 %v3758, %v3759
      %vm3761 = vcmp.lt.s32.totalorder %v3742, 1
      %vm3762 = vcmp.lt.s32.totalorder %v3742, 2
      %vm3763 = vcmp.lt.s32.totalorder %v3742, 3
      %vm3764 = vcmp.lt.s32.totalorder %v3742, 4
      %v3765 = vsel %vm3761, %v3745, %v3748
      %v3766 = vsel %vm3764, %v3754, 2102212464
      %v3767 = vsel %vm3763, %v3751, %v3766
      %v3768 = vsel %vm3762, %v3765, %v3767
      %v3769 = vsel %vm3761, %v3748, %v3751
      %v3770 = vsel %vm3764, %v3757, 920167782
      %v3771 = vsel %vm3763, %v3754, %v3770
      %v3772 = vsel %vm3762, %v3769, %v3771
      %v3773 = vsel %vm3761, %v3751, %v3754
      %v3774 = vsel %vm3764, %v3760, 1326507024
      %v3775 = vsel %vm3763, %v3757, %v3774
      %v3776 = vsel %vm3762, %v3773, %v3775
      %v3777 = vshll.u32 %v3737, 8
      %v3778 = vmul.u32.u64.compose %v3777, %v3776
      %v3779 = vextract.low.u32 %v3778
      %v3780 = vextract.high.u32 %v3778
      %v3781 = vmul.u32.u64.compose %v3777, %v3772
      %v3782 = vextract.low.u32 %v3781
      %v3783 = vextract.high.u32 %v3781
      %v3784 = vmul.u32 %v3777, %v3768
      %v3785 = vadd.s32 %v3780, %v3782
      %vm3786 = vc.u32 %v3780, %v3782
      %v3787 = vadd.s32 %v3783, 1
      %v3788 = vsel %vm3786, %v3787, %v3783
      %v3789 = vadd.s32 %v3784, %v3788
      %v3790 = vadd.s32 %v3789, 536870912
      %v3791 = vshrl.u32 %v3790, 30
      %v3792 = vshll.u32 %v3791, 30
      %v3793 = vsub.s32 %v3789, %v3792
      %vm3794 = vcmp.lt.s32.totalorder %v3793, 0
      %v3795 = vsub.s32 0, %v3793
      %v3796 = vsel %vm3794, %v3795, %v3793
      %v3797 = vclz %v3796
      %v3798 = vsub.s32 %v3797, 2
      %vm3799 = vcmp.gt.s32.totalorder 0, %v3798
      %v3800 = vsel %vm3799, 0, %v3798
      %v3801 = vsub.s32 32, %v3800
      %v3802 = vshll.u32 %v3793, %v3800
      %v3803 = vshrl.u32 %v3785, %v3801
      %v3804 = vor.u32 %v3802, %v3803
      %v3805 = vsub.s32 4294967266, %v3800
      %v3806 = vadd.s32 %v3805, 127
      %v3807 = vshll.u32 %v3806, 23
      %v3808 = vor.u32 4788187, %v3807
      %v3809 = vand.u32 2147483647, %v3808
      %v3811 = vcvt.s32.f32 %v3804
      %v3812 = vmul.f32 %v3811, %v3809
      %v3813 = vxor.u32 %v3812, 2147483648
      %v3814 = vsel %vm3731, %v3813, %v3812
      %v3815 = vsub.s32 4, %v3791
      %v3816 = vsel %vm3731, %v3815, %v3791
      %v3817 = vsel %vm3730, %v1225, %v3814
      %v3818 = vsel %vm3730, 0, %v3816
      %v3819 = vcosq.f32.pop %v3817
      %v3820 = vsinq.f32.pop %v3817
      %vm3821 = vweird.f32 %v1225
      %v3822 = vadd.s32 %v3818, 3
      %v3823 = vand.u32 %v3822, 3
      %vm3824 = vcmp.lt.s32.totalorder %v3823, 2
      %vm3825 = vcmp.eq.s32.totalorder %v3823, 0
      %v3826 = vxor.u32 %v3820, 2147483648
      %v3827 = vsel %vm3825, %v3819, %v3826
      %vm3828 = vcmp.eq.s32.totalorder %v3823, 2
      %v3829 = vxor.u32 %v3819, 2147483648
      %v3830 = vsel %vm3828, %v3829, %v3820
      %v3831 = vsel %vm3824, %v3827, %v3830
      %v3832 = vsel %vm3821, nan, %v3831
      %v3833 = vand.u32 2147483647, %v1226
      %vm3834 = vcmp.le.f32.partialorder %v3833, 0.7853982
      %vm3835 = vcmp.lt.s32.totalorder %v1226, 0
      %v3836 = vand.u32 %v1226, 2139095040
      %v3837 = vshrl.u32 %v3836, 23
      %v3838 = vsub.s32 %v3837, 127
      %v3839 = vand.u32 2147483647, %v1226
      %v3840 = vand.u32 %v3839, 8388607
      %v3841 = vor.u32 %v3840, 8388608
      %v3842 = vsub.s32 0, %v3841
      %v3843 = vadd.s32 %v3838, 1
      %vm3844 = vcmp.gt.s32.totalorder %v3843, 0
      %v3845 = vsel %vm3844, %v3843, 0
      %v3846 = vshrl.u32 %v3845, 5
      %v3847 = vand.u32 %v3845, 31
      %v3848 = vsub.s32 32, %v3847
      %v3849 = vshrl.u32 683565275, %v3848
      %v3850 = vshll.u32 683565275, %v3847
      %v3851 = vshrl.u32 2475754826, %v3848
      %v3852 = vor.u32 %v3850, %v3851
      %v3853 = vshll.u32 2475754826, %v3847
      %v3854 = vshrl.u32 2131351028, %v3848
      %v3855 = vor.u32 %v3853, %v3854
      %v3856 = vshll.u32 2131351028, %v3847
      %v3857 = vshrl.u32 2102212464, %v3848
      %v3858 = vor.u32 %v3856, %v3857
      %v3859 = vshll.u32 2102212464, %v3847
      %v3860 = vshrl.u32 920167782, %v3848
      %v3861 = vor.u32 %v3859, %v3860
      %v3862 = vshll.u32 920167782, %v3847
      %v3863 = vshrl.u32 1326507024, %v3848
      %v3864 = vor.u32 %v3862, %v3863
      %vm3865 = vcmp.lt.s32.totalorder %v3846, 1
      %vm3866 = vcmp.lt.s32.totalorder %v3846, 2
      %vm3867 = vcmp.lt.s32.totalorder %v3846, 3
      %vm3868 = vcmp.lt.s32.totalorder %v3846, 4
      %v3869 = vsel %vm3865, %v3849, %v3852
      %v3870 = vsel %vm3868, %v3858, 2102212464
      %v3871 = vsel %vm3867, %v3855, %v3870
      %v3872 = vsel %vm3866, %v3869, %v3871
      %v3873 = vsel %vm3865, %v3852, %v3855
      %v3874 = vsel %vm3868, %v3861, 920167782
      %v3875 = vsel %vm3867, %v3858, %v3874
      %v3876 = vsel %vm3866, %v3873, %v3875
      %v3877 = vsel %vm3865, %v3855, %v3858
      %v3878 = vsel %vm3868, %v3864, 1326507024
      %v3879 = vsel %vm3867, %v3861, %v3878
      %v3880 = vsel %vm3866, %v3877, %v3879
      %v3881 = vshll.u32 %v3841, 8
      %v3882 = vmul.u32.u64.compose %v3881, %v3880
      %v3883 = vextract.low.u32 %v3882
      %v3884 = vextract.high.u32 %v3882
      %v3885 = vmul.u32.u64.compose %v3881, %v3876
      %v3886 = vextract.low.u32 %v3885
      %v3887 = vextract.high.u32 %v3885
      %v3888 = vmul.u32 %v3881, %v3872
      %v3889 = vadd.s32 %v3884, %v3886
      %vm3890 = vc.u32 %v3884, %v3886
      %v3891 = vadd.s32 %v3887, 1
      %v3892 = vsel %vm3890, %v3891, %v3887
      %v3893 = vadd.s32 %v3888, %v3892
      %v3894 = vadd.s32 %v3893, 536870912
      %v3895 = vshrl.u32 %v3894, 30
      %v3896 = vshll.u32 %v3895, 30
      %v3897 = vsub.s32 %v3893, %v3896
      %vm3898 = vcmp.lt.s32.totalorder %v3897, 0
      %v3899 = vsub.s32 0, %v3897
      %v3900 = vsel %vm3898, %v3899, %v3897
      %v3901 = vclz %v3900
      %v3902 = vsub.s32 %v3901, 2
      %vm3903 = vcmp.gt.s32.totalorder 0, %v3902
      %v3904 = vsel %vm3903, 0, %v3902
      %v3905 = vsub.s32 32, %v3904
      %v3906 = vshll.u32 %v3897, %v3904
      %v3907 = vshrl.u32 %v3889, %v3905
      %v3908 = vor.u32 %v3906, %v3907
      %v3909 = vsub.s32 4294967266, %v3904
      %v3910 = vadd.s32 %v3909, 127
      %v3911 = vshll.u32 %v3910, 23
      %v3912 = vor.u32 4788187, %v3911
      %v3913 = vand.u32 2147483647, %v3912
      %v3915 = vcvt.s32.f32 %v3908
      %v3916 = vmul.f32 %v3915, %v3913
      %v3917 = vxor.u32 %v3916, 2147483648
      %v3918 = vsel %vm3835, %v3917, %v3916
      %v3919 = vsub.s32 4, %v3895
      %v3920 = vsel %vm3835, %v3919, %v3895
      %v3921 = vsel %vm3834, %v1226, %v3918
      %v3922 = vsel %vm3834, 0, %v3920
      %v3923 = vcosq.f32.pop %v3921
      %v3924 = vsinq.f32.pop %v3921
      %vm3925 = vweird.f32 %v1226
      %v3926 = vadd.s32 %v3922, 3
      %v3927 = vand.u32 %v3926, 3
      %vm3928 = vcmp.lt.s32.totalorder %v3927, 2
      %vm3929 = vcmp.eq.s32.totalorder %v3927, 0
      %v3930 = vxor.u32 %v3924, 2147483648
      %v3931 = vsel %vm3929, %v3923, %v3930
      %vm3932 = vcmp.eq.s32.totalorder %v3927, 2
      %v3933 = vxor.u32 %v3923, 2147483648
      %v3934 = vsel %vm3932, %v3933, %v3924
      %v3935 = vsel %vm3928, %v3931, %v3934
      %v3936 = vsel %vm3925, nan, %v3935
      %v3937 = vand.u32 2147483647, %v1227
      %vm3938 = vcmp.le.f32.partialorder %v3937, 0.7853982
      %vm3939 = vcmp.lt.s32.totalorder %v1227, 0
      %v3940 = vand.u32 %v1227, 2139095040
      %v3941 = vshrl.u32 %v3940, 23
      %v3942 = vsub.s32 %v3941, 127
      %v3943 = vand.u32 2147483647, %v1227
      %v3944 = vand.u32 %v3943, 8388607
      %v3945 = vor.u32 %v3944, 8388608
      %v3946 = vsub.s32 0, %v3945
      %v3947 = vadd.s32 %v3942, 1
      %vm3948 = vcmp.gt.s32.totalorder %v3947, 0
      %v3949 = vsel %vm3948, %v3947, 0
      %v3950 = vshrl.u32 %v3949, 5
      %v3951 = vand.u32 %v3949, 31
      %v3952 = vsub.s32 32, %v3951
      %v3953 = vshrl.u32 683565275, %v3952
      %v3954 = vshll.u32 683565275, %v3951
      %v3955 = vshrl.u32 2475754826, %v3952
      %v3956 = vor.u32 %v3954, %v3955
      %v3957 = vshll.u32 2475754826, %v3951
      %v3958 = vshrl.u32 2131351028, %v3952
      %v3959 = vor.u32 %v3957, %v3958
      %v3960 = vshll.u32 2131351028, %v3951
      %v3961 = vshrl.u32 2102212464, %v3952
      %v3962 = vor.u32 %v3960, %v3961
      %v3963 = vshll.u32 2102212464, %v3951
      %v3964 = vshrl.u32 920167782, %v3952
      %v3965 = vor.u32 %v3963, %v3964
      %v3966 = vshll.u32 920167782, %v3951
      %v3967 = vshrl.u32 1326507024, %v3952
      %v3968 = vor.u32 %v3966, %v3967
      %vm3969 = vcmp.lt.s32.totalorder %v3950, 1
      %vm3970 = vcmp.lt.s32.totalorder %v3950, 2
      %vm3971 = vcmp.lt.s32.totalorder %v3950, 3
      %vm3972 = vcmp.lt.s32.totalorder %v3950, 4
      %v3973 = vsel %vm3969, %v3953, %v3956
      %v3974 = vsel %vm3972, %v3962, 2102212464
      %v3975 = vsel %vm3971, %v3959, %v3974
      %v3976 = vsel %vm3970, %v3973, %v3975
      %v3977 = vsel %vm3969, %v3956, %v3959
      %v3978 = vsel %vm3972, %v3965, 920167782
      %v3979 = vsel %vm3971, %v3962, %v3978
      %v3980 = vsel %vm3970, %v3977, %v3979
      %v3981 = vsel %vm3969, %v3959, %v3962
      %v3982 = vsel %vm3972, %v3968, 1326507024
      %v3983 = vsel %vm3971, %v3965, %v3982
      %v3984 = vsel %vm3970, %v3981, %v3983
      %v3985 = vshll.u32 %v3945, 8
      %v3986 = vmul.u32.u64.compose %v3985, %v3984
      %v3987 = vextract.low.u32 %v3986
      %v3988 = vextract.high.u32 %v3986
      %v3989 = vmul.u32.u64.compose %v3985, %v3980
      %v3990 = vextract.low.u32 %v3989
      %v3991 = vextract.high.u32 %v3989
      %v3992 = vmul.u32 %v3985, %v3976
      %v3993 = vadd.s32 %v3988, %v3990
      %vm3994 = vc.u32 %v3988, %v3990
      %v3995 = vadd.s32 %v3991, 1
      %v3996 = vsel %vm3994, %v3995, %v3991
      %v3997 = vadd.s32 %v3992, %v3996
      %v3998 = vadd.s32 %v3997, 536870912
      %v3999 = vshrl.u32 %v3998, 30
      %v4000 = vshll.u32 %v3999, 30
      %v4001 = vsub.s32 %v3997, %v4000
      %vm4002 = vcmp.lt.s32.totalorder %v4001, 0
      %v4003 = vsub.s32 0, %v4001
      %v4004 = vsel %vm4002, %v4003, %v4001
      %v4005 = vclz %v4004
      %v4006 = vsub.s32 %v4005, 2
      %vm4007 = vcmp.gt.s32.totalorder 0, %v4006
      %v4008 = vsel %vm4007, 0, %v4006
      %v4009 = vsub.s32 32, %v4008
      %v4010 = vshll.u32 %v4001, %v4008
      %v4011 = vshrl.u32 %v3993, %v4009
      %v4012 = vor.u32 %v4010, %v4011
      %v4013 = vsub.s32 4294967266, %v4008
      %v4014 = vadd.s32 %v4013, 127
      %v4015 = vshll.u32 %v4014, 23
      %v4016 = vor.u32 4788187, %v4015
      %v4017 = vand.u32 2147483647, %v4016
      %v4019 = vcvt.s32.f32 %v4012
      %v4020 = vmul.f32 %v4019, %v4017
      %v4021 = vxor.u32 %v4020, 2147483648
      %v4022 = vsel %vm3939, %v4021, %v4020
      %v4023 = vsub.s32 4, %v3999
      %v4024 = vsel %vm3939, %v4023, %v3999
      %v4025 = vsel %vm3938, %v1227, %v4022
      %v4026 = vsel %vm3938, 0, %v4024
      %v4027 = vcosq.f32.pop %v4025
      %v4028 = vsinq.f32.pop %v4025
      %vm4029 = vweird.f32 %v1227
      %v4030 = vadd.s32 %v4026, 3
      %v4031 = vand.u32 %v4030, 3
      %vm4032 = vcmp.lt.s32.totalorder %v4031, 2
      %vm4033 = vcmp.eq.s32.totalorder %v4031, 0
      %v4034 = vxor.u32 %v4028, 2147483648
      %v4035 = vsel %vm4033, %v4027, %v4034
      %vm4036 = vcmp.eq.s32.totalorder %v4031, 2
      %v4037 = vxor.u32 %v4027, 2147483648
      %v4038 = vsel %vm4036, %v4037, %v4028
      %v4039 = vsel %vm4032, %v4035, %v4038
      %v4040 = vsel %vm4029, nan, %v4039
      %v4041 = vand.u32 2147483647, %v1228
      %vm4042 = vcmp.le.f32.partialorder %v4041, 0.7853982
      %vm4043 = vcmp.lt.s32.totalorder %v1228, 0
      %v4044 = vand.u32 %v1228, 2139095040
      %v4045 = vshrl.u32 %v4044, 23
      %v4046 = vsub.s32 %v4045, 127
      %v4047 = vand.u32 2147483647, %v1228
      %v4048 = vand.u32 %v4047, 8388607
      %v4049 = vor.u32 %v4048, 8388608
      %v4050 = vsub.s32 0, %v4049
      %v4051 = vadd.s32 %v4046, 1
      %vm4052 = vcmp.gt.s32.totalorder %v4051, 0
      %v4053 = vsel %vm4052, %v4051, 0
      %v4054 = vshrl.u32 %v4053, 5
      %v4055 = vand.u32 %v4053, 31
      %v4056 = vsub.s32 32, %v4055
      %v4057 = vshrl.u32 683565275, %v4056
      %v4058 = vshll.u32 683565275, %v4055
      %v4059 = vshrl.u32 2475754826, %v4056
      %v4060 = vor.u32 %v4058, %v4059
      %v4061 = vshll.u32 2475754826, %v4055
      %v4062 = vshrl.u32 2131351028, %v4056
      %v4063 = vor.u32 %v4061, %v4062
      %v4064 = vshll.u32 2131351028, %v4055
      %v4065 = vshrl.u32 2102212464, %v4056
      %v4066 = vor.u32 %v4064, %v4065
      %v4067 = vshll.u32 2102212464, %v4055
      %v4068 = vshrl.u32 920167782, %v4056
      %v4069 = vor.u32 %v4067, %v4068
      %v4070 = vshll.u32 920167782, %v4055
      %v4071 = vshrl.u32 1326507024, %v4056
      %v4072 = vor.u32 %v4070, %v4071
      %vm4073 = vcmp.lt.s32.totalorder %v4054, 1
      %vm4074 = vcmp.lt.s32.totalorder %v4054, 2
      %vm4075 = vcmp.lt.s32.totalorder %v4054, 3
      %vm4076 = vcmp.lt.s32.totalorder %v4054, 4
      %v4077 = vsel %vm4073, %v4057, %v4060
      %v4078 = vsel %vm4076, %v4066, 2102212464
      %v4079 = vsel %vm4075, %v4063, %v4078
      %v4080 = vsel %vm4074, %v4077, %v4079
      %v4081 = vsel %vm4073, %v4060, %v4063
      %v4082 = vsel %vm4076, %v4069, 920167782
      %v4083 = vsel %vm4075, %v4066, %v4082
      %v4084 = vsel %vm4074, %v4081, %v4083
      %v4085 = vsel %vm4073, %v4063, %v4066
      %v4086 = vsel %vm4076, %v4072, 1326507024
      %v4087 = vsel %vm4075, %v4069, %v4086
      %v4088 = vsel %vm4074, %v4085, %v4087
      %v4089 = vshll.u32 %v4049, 8
      %v4090 = vmul.u32.u64.compose %v4089, %v4088
      %v4091 = vextract.low.u32 %v4090
      %v4092 = vextract.high.u32 %v4090
      %v4093 = vmul.u32.u64.compose %v4089, %v4084
      %v4094 = vextract.low.u32 %v4093
      %v4095 = vextract.high.u32 %v4093
      %v4096 = vmul.u32 %v4089, %v4080
      %v4097 = vadd.s32 %v4092, %v4094
      %vm4098 = vc.u32 %v4092, %v4094
      %v4099 = vadd.s32 %v4095, 1
      %v4100 = vsel %vm4098, %v4099, %v4095
      %v4101 = vadd.s32 %v4096, %v4100
      %v4102 = vadd.s32 %v4101, 536870912
      %v4103 = vshrl.u32 %v4102, 30
      %v4104 = vshll.u32 %v4103, 30
      %v4105 = vsub.s32 %v4101, %v4104
      %vm4106 = vcmp.lt.s32.totalorder %v4105, 0
      %v4107 = vsub.s32 0, %v4105
      %v4108 = vsel %vm4106, %v4107, %v4105
      %v4109 = vclz %v4108
      %v4110 = vsub.s32 %v4109, 2
      %vm4111 = vcmp.gt.s32.totalorder 0, %v4110
      %v4112 = vsel %vm4111, 0, %v4110
      %v4113 = vsub.s32 32, %v4112
      %v4114 = vshll.u32 %v4105, %v4112
      %v4115 = vshrl.u32 %v4097, %v4113
      %v4116 = vor.u32 %v4114, %v4115
      %v4117 = vsub.s32 4294967266, %v4112
      %v4118 = vadd.s32 %v4117, 127
      %v4119 = vshll.u32 %v4118, 23
      %v4120 = vor.u32 4788187, %v4119
      %v4121 = vand.u32 2147483647, %v4120
      %v4123 = vcvt.s32.f32 %v4116
      %v4124 = vmul.f32 %v4123, %v4121
      %v4125 = vxor.u32 %v4124, 2147483648
      %v4126 = vsel %vm4043, %v4125, %v4124
      %v4127 = vsub.s32 4, %v4103
      %v4128 = vsel %vm4043, %v4127, %v4103
      %v4129 = vsel %vm4042, %v1228, %v4126
      %v4130 = vsel %vm4042, 0, %v4128
      %v4131 = vcosq.f32.pop %v4129
      %v4132 = vsinq.f32.pop %v4129
      %vm4133 = vweird.f32 %v1228
      %v4134 = vadd.s32 %v4130, 3
      %v4135 = vand.u32 %v4134, 3
      %vm4136 = vcmp.lt.s32.totalorder %v4135, 2
      %vm4137 = vcmp.eq.s32.totalorder %v4135, 0
      %v4138 = vxor.u32 %v4132, 2147483648
      %v4139 = vsel %vm4137, %v4131, %v4138
      %vm4140 = vcmp.eq.s32.totalorder %v4135, 2
      %v4141 = vxor.u32 %v4131, 2147483648
      %v4142 = vsel %vm4140, %v4141, %v4132
      %v4143 = vsel %vm4136, %v4139, %v4142
      %v4144 = vsel %vm4133, nan, %v4143
      %v4145 = vand.u32 2147483647, %v1229
      %vm4146 = vcmp.le.f32.partialorder %v4145, 0.7853982
      %vm4147 = vcmp.lt.s32.totalorder %v1229, 0
      %v4148 = vand.u32 %v1229, 2139095040
      %v4149 = vshrl.u32 %v4148, 23
      %v4150 = vsub.s32 %v4149, 127
      %v4151 = vand.u32 2147483647, %v1229
      %v4152 = vand.u32 %v4151, 8388607
      %v4153 = vor.u32 %v4152, 8388608
      %v4154 = vsub.s32 0, %v4153
      %v4155 = vadd.s32 %v4150, 1
      %vm4156 = vcmp.gt.s32.totalorder %v4155, 0
      %v4157 = vsel %vm4156, %v4155, 0
      %v4158 = vshrl.u32 %v4157, 5
      %v4159 = vand.u32 %v4157, 31
      %v4160 = vsub.s32 32, %v4159
      %v4161 = vshrl.u32 683565275, %v4160
      %v4162 = vshll.u32 683565275, %v4159
      %v4163 = vshrl.u32 2475754826, %v4160
      %v4164 = vor.u32 %v4162, %v4163
      %v4165 = vshll.u32 2475754826, %v4159
      %v4166 = vshrl.u32 2131351028, %v4160
      %v4167 = vor.u32 %v4165, %v4166
      %v4168 = vshll.u32 2131351028, %v4159
      %v4169 = vshrl.u32 2102212464, %v4160
      %v4170 = vor.u32 %v4168, %v4169
      %v4171 = vshll.u32 2102212464, %v4159
      %v4172 = vshrl.u32 920167782, %v4160
      %v4173 = vor.u32 %v4171, %v4172
      %v4174 = vshll.u32 920167782, %v4159
      %v4175 = vshrl.u32 1326507024, %v4160
      %v4176 = vor.u32 %v4174, %v4175
      %vm4177 = vcmp.lt.s32.totalorder %v4158, 1
      %vm4178 = vcmp.lt.s32.totalorder %v4158, 2
      %vm4179 = vcmp.lt.s32.totalorder %v4158, 3
      %vm4180 = vcmp.lt.s32.totalorder %v4158, 4
      %v4181 = vsel %vm4177, %v4161, %v4164
      %v4182 = vsel %vm4180, %v4170, 2102212464
      %v4183 = vsel %vm4179, %v4167, %v4182
      %v4184 = vsel %vm4178, %v4181, %v4183
      %v4185 = vsel %vm4177, %v4164, %v4167
      %v4186 = vsel %vm4180, %v4173, 920167782
      %v4187 = vsel %vm4179, %v4170, %v4186
      %v4188 = vsel %vm4178, %v4185, %v4187
      %v4189 = vsel %vm4177, %v4167, %v4170
      %v4190 = vsel %vm4180, %v4176, 1326507024
      %v4191 = vsel %vm4179, %v4173, %v4190
      %v4192 = vsel %vm4178, %v4189, %v4191
      %v4193 = vshll.u32 %v4153, 8
      %v4194 = vmul.u32.u64.compose %v4193, %v4192
      %v4195 = vextract.low.u32 %v4194
      %v4196 = vextract.high.u32 %v4194
      %v4197 = vmul.u32.u64.compose %v4193, %v4188
      %v4198 = vextract.low.u32 %v4197
      %v4199 = vextract.high.u32 %v4197
      %v4200 = vmul.u32 %v4193, %v4184
      %v4201 = vadd.s32 %v4196, %v4198
      %vm4202 = vc.u32 %v4196, %v4198
      %v4203 = vadd.s32 %v4199, 1
      %v4204 = vsel %vm4202, %v4203, %v4199
      %v4205 = vadd.s32 %v4200, %v4204
      %v4206 = vadd.s32 %v4205, 536870912
      %v4207 = vshrl.u32 %v4206, 30
      %v4208 = vshll.u32 %v4207, 30
      %v4209 = vsub.s32 %v4205, %v4208
      %vm4210 = vcmp.lt.s32.totalorder %v4209, 0
      %v4211 = vsub.s32 0, %v4209
      %v4212 = vsel %vm4210, %v4211, %v4209
      %v4213 = vclz %v4212
      %v4214 = vsub.s32 %v4213, 2
      %vm4215 = vcmp.gt.s32.totalorder 0, %v4214
      %v4216 = vsel %vm4215, 0, %v4214
      %v4217 = vsub.s32 32, %v4216
      %v4218 = vshll.u32 %v4209, %v4216
      %v4219 = vshrl.u32 %v4201, %v4217
      %v4220 = vor.u32 %v4218, %v4219
      %v4221 = vsub.s32 4294967266, %v4216
      %v4222 = vadd.s32 %v4221, 127
      %v4223 = vshll.u32 %v4222, 23
      %v4224 = vor.u32 4788187, %v4223
      %v4225 = vand.u32 2147483647, %v4224
      %v4227 = vcvt.s32.f32 %v4220
      %v4228 = vmul.f32 %v4227, %v4225
      %v4229 = vxor.u32 %v4228, 2147483648
      %v4230 = vsel %vm4147, %v4229, %v4228
      %v4231 = vsub.s32 4, %v4207
      %v4232 = vsel %vm4147, %v4231, %v4207
      %v4233 = vsel %vm4146, %v1229, %v4230
      %v4234 = vsel %vm4146, 0, %v4232
      %v4235 = vcosq.f32.pop %v4233
      %v4236 = vsinq.f32.pop %v4233
      %vm4237 = vweird.f32 %v1229
      %v4238 = vadd.s32 %v4234, 3
      %v4239 = vand.u32 %v4238, 3
      %vm4240 = vcmp.lt.s32.totalorder %v4239, 2
      %vm4241 = vcmp.eq.s32.totalorder %v4239, 0
      %v4242 = vxor.u32 %v4236, 2147483648
      %v4243 = vsel %vm4241, %v4235, %v4242
      %vm4244 = vcmp.eq.s32.totalorder %v4239, 2
      %v4245 = vxor.u32 %v4235, 2147483648
      %v4246 = vsel %vm4244, %v4245, %v4236
      %v4247 = vsel %vm4240, %v4243, %v4246
      %v4248 = vsel %vm4237, nan, %v4247
      %v4249 = vand.u32 2147483647, %v1230
      %vm4250 = vcmp.le.f32.partialorder %v4249, 0.7853982
      %vm4251 = vcmp.lt.s32.totalorder %v1230, 0
      %v4252 = vand.u32 %v1230, 2139095040
      %v4253 = vshrl.u32 %v4252, 23
      %v4254 = vsub.s32 %v4253, 127
      %v4255 = vand.u32 2147483647, %v1230
      %v4256 = vand.u32 %v4255, 8388607
      %v4257 = vor.u32 %v4256, 8388608
      %v4258 = vsub.s32 0, %v4257
      %v4259 = vadd.s32 %v4254, 1
      %vm4260 = vcmp.gt.s32.totalorder %v4259, 0
      %v4261 = vsel %vm4260, %v4259, 0
      %v4262 = vshrl.u32 %v4261, 5
      %v4263 = vand.u32 %v4261, 31
      %v4264 = vsub.s32 32, %v4263
      %v4265 = vshrl.u32 683565275, %v4264
      %v4266 = vshll.u32 683565275, %v4263
      %v4267 = vshrl.u32 2475754826, %v4264
      %v4268 = vor.u32 %v4266, %v4267
      %v4269 = vshll.u32 2475754826, %v4263
      %v4270 = vshrl.u32 2131351028, %v4264
      %v4271 = vor.u32 %v4269, %v4270
      %v4272 = vshll.u32 2131351028, %v4263
      %v4273 = vshrl.u32 2102212464, %v4264
      %v4274 = vor.u32 %v4272, %v4273
      %v4275 = vshll.u32 2102212464, %v4263
      %v4276 = vshrl.u32 920167782, %v4264
      %v4277 = vor.u32 %v4275, %v4276
      %v4278 = vshll.u32 920167782, %v4263
      %v4279 = vshrl.u32 1326507024, %v4264
      %v4280 = vor.u32 %v4278, %v4279
      %vm4281 = vcmp.lt.s32.totalorder %v4262, 1
      %vm4282 = vcmp.lt.s32.totalorder %v4262, 2
      %vm4283 = vcmp.lt.s32.totalorder %v4262, 3
      %vm4284 = vcmp.lt.s32.totalorder %v4262, 4
      %v4285 = vsel %vm4281, %v4265, %v4268
      %v4286 = vsel %vm4284, %v4274, 2102212464
      %v4287 = vsel %vm4283, %v4271, %v4286
      %v4288 = vsel %vm4282, %v4285, %v4287
      %v4289 = vsel %vm4281, %v4268, %v4271
      %v4290 = vsel %vm4284, %v4277, 920167782
      %v4291 = vsel %vm4283, %v4274, %v4290
      %v4292 = vsel %vm4282, %v4289, %v4291
      %v4293 = vsel %vm4281, %v4271, %v4274
      %v4294 = vsel %vm4284, %v4280, 1326507024
      %v4295 = vsel %vm4283, %v4277, %v4294
      %v4296 = vsel %vm4282, %v4293, %v4295
      %v4297 = vshll.u32 %v4257, 8
      %v4298 = vmul.u32.u64.compose %v4297, %v4296
      %v4299 = vextract.low.u32 %v4298
      %v4300 = vextract.high.u32 %v4298
      %v4301 = vmul.u32.u64.compose %v4297, %v4292
      %v4302 = vextract.low.u32 %v4301
      %v4303 = vextract.high.u32 %v4301
      %v4304 = vmul.u32 %v4297, %v4288
      %v4305 = vadd.s32 %v4300, %v4302
      %vm4306 = vc.u32 %v4300, %v4302
      %v4307 = vadd.s32 %v4303, 1
      %v4308 = vsel %vm4306, %v4307, %v4303
      %v4309 = vadd.s32 %v4304, %v4308
      %v4310 = vadd.s32 %v4309, 536870912
      %v4311 = vshrl.u32 %v4310, 30
      %v4312 = vshll.u32 %v4311, 30
      %v4313 = vsub.s32 %v4309, %v4312
      %vm4314 = vcmp.lt.s32.totalorder %v4313, 0
      %v4315 = vsub.s32 0, %v4313
      %v4316 = vsel %vm4314, %v4315, %v4313
      %v4317 = vclz %v4316
      %v4318 = vsub.s32 %v4317, 2
      %vm4319 = vcmp.gt.s32.totalorder 0, %v4318
      %v4320 = vsel %vm4319, 0, %v4318
      %v4321 = vsub.s32 32, %v4320
      %v4322 = vshll.u32 %v4313, %v4320
      %v4323 = vshrl.u32 %v4305, %v4321
      %v4324 = vor.u32 %v4322, %v4323
      %v4325 = vsub.s32 4294967266, %v4320
      %v4326 = vadd.s32 %v4325, 127
      %v4327 = vshll.u32 %v4326, 23
      %v4328 = vor.u32 4788187, %v4327
      %v4329 = vand.u32 2147483647, %v4328
      %v4331 = vcvt.s32.f32 %v4324
      %v4332 = vmul.f32 %v4331, %v4329
      %v4333 = vxor.u32 %v4332, 2147483648
      %v4334 = vsel %vm4251, %v4333, %v4332
      %v4335 = vsub.s32 4, %v4311
      %v4336 = vsel %vm4251, %v4335, %v4311
      %v4337 = vsel %vm4250, %v1230, %v4334
      %v4338 = vsel %vm4250, 0, %v4336
      %v4339 = vcosq.f32.pop %v4337
      %v4340 = vsinq.f32.pop %v4337
      %vm4341 = vweird.f32 %v1230
      %v4342 = vadd.s32 %v4338, 3
      %v4343 = vand.u32 %v4342, 3
      %vm4344 = vcmp.lt.s32.totalorder %v4343, 2
      %vm4345 = vcmp.eq.s32.totalorder %v4343, 0
      %v4346 = vxor.u32 %v4340, 2147483648
      %v4347 = vsel %vm4345, %v4339, %v4346
      %vm4348 = vcmp.eq.s32.totalorder %v4343, 2
      %v4349 = vxor.u32 %v4339, 2147483648
      %v4350 = vsel %vm4348, %v4349, %v4340
      %v4351 = vsel %vm4344, %v4347, %v4350
      %v4352 = vsel %vm4341, nan, %v4351
      %v4353 = vand.u32 2147483647, %v1231
      %vm4354 = vcmp.le.f32.partialorder %v4353, 0.7853982
      %vm4355 = vcmp.lt.s32.totalorder %v1231, 0
      %v4356 = vand.u32 %v1231, 2139095040
      %v4357 = vshrl.u32 %v4356, 23
      %v4358 = vsub.s32 %v4357, 127
      %v4359 = vand.u32 2147483647, %v1231
      %v4360 = vand.u32 %v4359, 8388607
      %v4361 = vor.u32 %v4360, 8388608
      %v4362 = vsub.s32 0, %v4361
      %v4363 = vadd.s32 %v4358, 1
      %vm4364 = vcmp.gt.s32.totalorder %v4363, 0
      %v4365 = vsel %vm4364, %v4363, 0
      %v4366 = vshrl.u32 %v4365, 5
      %v4367 = vand.u32 %v4365, 31
      %v4368 = vsub.s32 32, %v4367
      %v4369 = vshrl.u32 683565275, %v4368
      %v4370 = vshll.u32 683565275, %v4367
      %v4371 = vshrl.u32 2475754826, %v4368
      %v4372 = vor.u32 %v4370, %v4371
      %v4373 = vshll.u32 2475754826, %v4367
      %v4374 = vshrl.u32 2131351028, %v4368
      %v4375 = vor.u32 %v4373, %v4374
      %v4376 = vshll.u32 2131351028, %v4367
      %v4377 = vshrl.u32 2102212464, %v4368
      %v4378 = vor.u32 %v4376, %v4377
      %v4379 = vshll.u32 2102212464, %v4367
      %v4380 = vshrl.u32 920167782, %v4368
      %v4381 = vor.u32 %v4379, %v4380
      %v4382 = vshll.u32 920167782, %v4367
      %v4383 = vshrl.u32 1326507024, %v4368
      %v4384 = vor.u32 %v4382, %v4383
      %vm4385 = vcmp.lt.s32.totalorder %v4366, 1
      %vm4386 = vcmp.lt.s32.totalorder %v4366, 2
      %vm4387 = vcmp.lt.s32.totalorder %v4366, 3
      %vm4388 = vcmp.lt.s32.totalorder %v4366, 4
      %v4389 = vsel %vm4385, %v4369, %v4372
      %v4390 = vsel %vm4388, %v4378, 2102212464
      %v4391 = vsel %vm4387, %v4375, %v4390
      %v4392 = vsel %vm4386, %v4389, %v4391
      %v4393 = vsel %vm4385, %v4372, %v4375
      %v4394 = vsel %vm4388, %v4381, 920167782
      %v4395 = vsel %vm4387, %v4378, %v4394
      %v4396 = vsel %vm4386, %v4393, %v4395
      %v4397 = vsel %vm4385, %v4375, %v4378
      %v4398 = vsel %vm4388, %v4384, 1326507024
      %v4399 = vsel %vm4387, %v4381, %v4398
      %v4400 = vsel %vm4386, %v4397, %v4399
      %v4401 = vshll.u32 %v4361, 8
      %v4402 = vmul.u32.u64.compose %v4401, %v4400
      %v4403 = vextract.low.u32 %v4402
      %v4404 = vextract.high.u32 %v4402
      %v4405 = vmul.u32.u64.compose %v4401, %v4396
      %v4406 = vextract.low.u32 %v4405
      %v4407 = vextract.high.u32 %v4405
      %v4408 = vmul.u32 %v4401, %v4392
      %v4409 = vadd.s32 %v4404, %v4406
      %vm4410 = vc.u32 %v4404, %v4406
      %v4411 = vadd.s32 %v4407, 1
      %v4412 = vsel %vm4410, %v4411, %v4407
      %v4413 = vadd.s32 %v4408, %v4412
      %v4414 = vadd.s32 %v4413, 536870912
      %v4415 = vshrl.u32 %v4414, 30
      %v4416 = vshll.u32 %v4415, 30
      %v4417 = vsub.s32 %v4413, %v4416
      %vm4418 = vcmp.lt.s32.totalorder %v4417, 0
      %v4419 = vsub.s32 0, %v4417
      %v4420 = vsel %vm4418, %v4419, %v4417
      %v4421 = vclz %v4420
      %v4422 = vsub.s32 %v4421, 2
      %vm4423 = vcmp.gt.s32.totalorder 0, %v4422
      %v4424 = vsel %vm4423, 0, %v4422
      %v4425 = vsub.s32 32, %v4424
      %v4426 = vshll.u32 %v4417, %v4424
      %v4427 = vshrl.u32 %v4409, %v4425
      %v4428 = vor.u32 %v4426, %v4427
      %v4429 = vsub.s32 4294967266, %v4424
      %v4430 = vadd.s32 %v4429, 127
      %v4431 = vshll.u32 %v4430, 23
      %v4432 = vor.u32 4788187, %v4431
      %v4433 = vand.u32 2147483647, %v4432
      %v4435 = vcvt.s32.f32 %v4428
      %v4436 = vmul.f32 %v4435, %v4433
      %v4437 = vxor.u32 %v4436, 2147483648
      %v4438 = vsel %vm4355, %v4437, %v4436
      %v4439 = vsub.s32 4, %v4415
      %v4440 = vsel %vm4355, %v4439, %v4415
      %v4441 = vsel %vm4354, %v1231, %v4438
      %v4442 = vsel %vm4354, 0, %v4440
      %v4443 = vcosq.f32.pop %v4441
      %v4444 = vsinq.f32.pop %v4441
      %vm4445 = vweird.f32 %v1231
      %v4446 = vadd.s32 %v4442, 3
      %v4447 = vand.u32 %v4446, 3
      %vm4448 = vcmp.lt.s32.totalorder %v4447, 2
      %vm4449 = vcmp.eq.s32.totalorder %v4447, 0
      %v4450 = vxor.u32 %v4444, 2147483648
      %v4451 = vsel %vm4449, %v4443, %v4450
      %vm4452 = vcmp.eq.s32.totalorder %v4447, 2
      %v4453 = vxor.u32 %v4443, 2147483648
      %v4454 = vsel %vm4452, %v4453, %v4444
      %v4455 = vsel %vm4448, %v4451, %v4454
      %v4456 = vsel %vm4445, nan, %v4455
      %v4457 = vand.u32 2147483647, %v1232
      %vm4458 = vcmp.le.f32.partialorder %v4457, 0.7853982
      %vm4459 = vcmp.lt.s32.totalorder %v1232, 0
      %v4460 = vand.u32 %v1232, 2139095040
      %v4461 = vshrl.u32 %v4460, 23
      %v4462 = vsub.s32 %v4461, 127
      %v4463 = vand.u32 2147483647, %v1232
      %v4464 = vand.u32 %v4463, 8388607
      %v4465 = vor.u32 %v4464, 8388608
      %v4466 = vsub.s32 0, %v4465
      %v4467 = vadd.s32 %v4462, 1
      %vm4468 = vcmp.gt.s32.totalorder %v4467, 0
      %v4469 = vsel %vm4468, %v4467, 0
      %v4470 = vshrl.u32 %v4469, 5
      %v4471 = vand.u32 %v4469, 31
      %v4472 = vsub.s32 32, %v4471
      %v4473 = vshrl.u32 683565275, %v4472
      %v4474 = vshll.u32 683565275, %v4471
      %v4475 = vshrl.u32 2475754826, %v4472
      %v4476 = vor.u32 %v4474, %v4475
      %v4477 = vshll.u32 2475754826, %v4471
      %v4478 = vshrl.u32 2131351028, %v4472
      %v4479 = vor.u32 %v4477, %v4478
      %v4480 = vshll.u32 2131351028, %v4471
      %v4481 = vshrl.u32 2102212464, %v4472
      %v4482 = vor.u32 %v4480, %v4481
      %v4483 = vshll.u32 2102212464, %v4471
      %v4484 = vshrl.u32 920167782, %v4472
      %v4485 = vor.u32 %v4483, %v4484
      %v4486 = vshll.u32 920167782, %v4471
      %v4487 = vshrl.u32 1326507024, %v4472
      %v4488 = vor.u32 %v4486, %v4487
      %vm4489 = vcmp.lt.s32.totalorder %v4470, 1
      %vm4490 = vcmp.lt.s32.totalorder %v4470, 2
      %vm4491 = vcmp.lt.s32.totalorder %v4470, 3
      %vm4492 = vcmp.lt.s32.totalorder %v4470, 4
      %v4493 = vsel %vm4489, %v4473, %v4476
      %v4494 = vsel %vm4492, %v4482, 2102212464
      %v4495 = vsel %vm4491, %v4479, %v4494
      %v4496 = vsel %vm4490, %v4493, %v4495
      %v4497 = vsel %vm4489, %v4476, %v4479
      %v4498 = vsel %vm4492, %v4485, 920167782
      %v4499 = vsel %vm4491, %v4482, %v4498
      %v4500 = vsel %vm4490, %v4497, %v4499
      %v4501 = vsel %vm4489, %v4479, %v4482
      %v4502 = vsel %vm4492, %v4488, 1326507024
      %v4503 = vsel %vm4491, %v4485, %v4502
      %v4504 = vsel %vm4490, %v4501, %v4503
      %v4505 = vshll.u32 %v4465, 8
      %v4506 = vmul.u32.u64.compose %v4505, %v4504
      %v4507 = vextract.low.u32 %v4506
      %v4508 = vextract.high.u32 %v4506
      %v4509 = vmul.u32.u64.compose %v4505, %v4500
      %v4510 = vextract.low.u32 %v4509
      %v4511 = vextract.high.u32 %v4509
      %v4512 = vmul.u32 %v4505, %v4496
      %v4513 = vadd.s32 %v4508, %v4510
      %vm4514 = vc.u32 %v4508, %v4510
      %v4515 = vadd.s32 %v4511, 1
      %v4516 = vsel %vm4514, %v4515, %v4511
      %v4517 = vadd.s32 %v4512, %v4516
      %v4518 = vadd.s32 %v4517, 536870912
      %v4519 = vshrl.u32 %v4518, 30
      %v4520 = vshll.u32 %v4519, 30
      %v4521 = vsub.s32 %v4517, %v4520
      %vm4522 = vcmp.lt.s32.totalorder %v4521, 0
      %v4523 = vsub.s32 0, %v4521
      %v4524 = vsel %vm4522, %v4523, %v4521
      %v4525 = vclz %v4524
      %v4526 = vsub.s32 %v4525, 2
      %vm4527 = vcmp.gt.s32.totalorder 0, %v4526
      %v4528 = vsel %vm4527, 0, %v4526
      %v4529 = vsub.s32 32, %v4528
      %v4530 = vshll.u32 %v4521, %v4528
      %v4531 = vshrl.u32 %v4513, %v4529
      %v4532 = vor.u32 %v4530, %v4531
      %v4533 = vsub.s32 4294967266, %v4528
      %v4534 = vadd.s32 %v4533, 127
      %v4535 = vshll.u32 %v4534, 23
      %v4536 = vor.u32 4788187, %v4535
      %v4537 = vand.u32 2147483647, %v4536
      %v4539 = vcvt.s32.f32 %v4532
      %v4540 = vmul.f32 %v4539, %v4537
      %v4541 = vxor.u32 %v4540, 2147483648
      %v4542 = vsel %vm4459, %v4541, %v4540
      %v4543 = vsub.s32 4, %v4519
      %v4544 = vsel %vm4459, %v4543, %v4519
      %v4545 = vsel %vm4458, %v1232, %v4542
      %v4546 = vsel %vm4458, 0, %v4544
      %v4547 = vcosq.f32.pop %v4545
      %v4548 = vsinq.f32.pop %v4545
      %vm4549 = vweird.f32 %v1232
      %v4550 = vadd.s32 %v4546, 3
      %v4551 = vand.u32 %v4550, 3
      %vm4552 = vcmp.lt.s32.totalorder %v4551, 2
      %vm4553 = vcmp.eq.s32.totalorder %v4551, 0
      %v4554 = vxor.u32 %v4548, 2147483648
      %v4555 = vsel %vm4553, %v4547, %v4554
      %vm4556 = vcmp.eq.s32.totalorder %v4551, 2
      %v4557 = vxor.u32 %v4547, 2147483648
      %v4558 = vsel %vm4556, %v4557, %v4548
      %v4559 = vsel %vm4552, %v4555, %v4558
      %v4560 = vsel %vm4549, nan, %v4559
      %v4561 = vld [vmem:[%s7] sm:$0xff]
      %v4562 = vld [vmem:[%s7 + $0x8] sm:$0xff]
      %v4563 = vld [vmem:[%s7 + $0x10] sm:$0xff]
      %v4564 = vld [vmem:[%s7 + $0x18] sm:$0xff]
      %v4565 = vld [vmem:[%s7 + $0x20] sm:$0xff]
      %v4566 = vld [vmem:[%s7 + $0x28] sm:$0xff]
      %v4567 = vld [vmem:[%s7 + $0x30] sm:$0xff]
      %v4568 = vld [vmem:[%s7 + $0x38] sm:$0xff]
      %v4569 = vlaneseq
      %v4570 = vshrl.u32 %v4569, 7
      %v4571 = vsub.s32 0, %v4570
      %v4572 = vrot.slane %v581, %v4571
      %vm4573 = vcmask 261120
      %v4575 = vsel %vm4573, %v1336, 0
      %v4578 = vsel %vm4573, %v1440, 0
      %v4581 = vsel %vm4573, %v1544, 0
      %v4584 = vsel %vm4573, %v1648, 0
      %v4587 = vsel %vm4573, %v1752, 0
      %v4590 = vsel %vm4573, %v1856, 0
      %v4593 = vsel %vm4573, %v1960, 0
      %v4596 = vsel %vm4573, %v2064, 0
      %v4599 = vsel %vm4573, %v2168, 0
      %v4602 = vsel %vm4573, %v2272, 0
      %v4605 = vsel %vm4573, %v2376, 0
      %v4608 = vsel %vm4573, %v2480, 0
      %v4611 = vsel %vm4573, %v2584, 0
      %v4614 = vsel %vm4573, %v2688, 0
      %v4617 = vsel %vm4573, %v2792, 0
      %v4620 = vsel %vm4573, %v2896, 0
      %v4623 = vsel %vm4573, %v3000, 0
      %v4626 = vsel %vm4573, %v3104, 0
      %v4629 = vsel %vm4573, %v3208, 0
      %v4632 = vsel %vm4573, %v3312, 0
      %v4635 = vsel %vm4573, %v3416, 0
      %v4638 = vsel %vm4573, %v3520, 0
      %v4641 = vsel %vm4573, %v3624, 0
      %v4644 = vsel %vm4573, %v3728, 0
      %v4647 = vsel %vm4573, %v3832, 0
      %v4650 = vsel %vm4573, %v3936, 0
      %v4653 = vsel %vm4573, %v4040, 0
      %v4656 = vsel %vm4573, %v4144, 0
      %v4659 = vsel %vm4573, %v4248, 0
      %v4662 = vsel %vm4573, %v4352, 0
      %v4665 = vsel %vm4573, %v4456, 0
      %v4668 = vsel %vm4573, %v4560, 0
      %4670 = vmatprep.subr.mxu0 0.0
      %4671 = vmatpush1.msra.mxu0 %v4561
      %4672 = vmatprep.subr.mxu0 0.0
      %4673 = vmatpush1.msra.mxu0 %v4562
      %4674 = vmatprep.subr.mxu0 0.0
      %4675 = vmatpush1.msra.mxu0 %v4563
      %4676 = vmatprep.subr.mxu0 0.0
      %4677 = vmatpush1.msra.mxu0 %v4564
      %4678 = vmatprep.subr.mxu0 0.0
      %4679 = vmatpush1.msra.mxu0 0.0
      %4680 = vmatprep.subr.mxu0 0.0
      %4681 = vmatpush1.msra.mxu0 0.0
      %4682 = vmatprep.subr.mxu0 0.0
      %4683 = vmatpush1.msra.mxu0 0.0
      %4684 = vmatprep.subr.mxu0 0.0
      %4685 = vmatpush1.msra.mxu0 0.0
      %4686 = vmatprep.subr.mxu0 0.0
      %4687 = vmatpush1.msra.mxu0 0.0
      %4688 = vmatprep.subr.mxu0 0.0
      %4689 = vmatpush1.msra.mxu0 0.0
      %4690 = vmatprep.subr.mxu0 0.0
      %4691 = vmatpush1.msra.mxu0 0.0
      %4692 = vmatprep.subr.mxu0 0.0
      %4693 = vmatpush1.msra.mxu0 0.0
      %4694 = vmatprep.subr.mxu0 0.0
      %4695 = vmatpush1.msra.mxu0 0.0
      %4696 = vmatprep.subr.mxu0 0.0
      %4697 = vmatpush1.msra.mxu0 0.0
      %4698 = vmatprep.subr.mxu0 0.0
      %4699 = vmatpush1.msra.mxu0 0.0
      %4700 = vmatprep.subr.mxu0 0.0
      %4701 = vmatpush1.msra.mxu0 0.0
      %4702 = vmatprep.subr.mxu0 0.0
      %4703 = vmatpush1.msra.mxu0 0.0
      %4704 = vmatprep.subr.mxu0 0.0
      %4705 = vmatpush1.msra.mxu0 0.0
      %4706 = vmatprep.subr.mxu0 0.0
      %4707 = vmatpush1.msra.mxu0 0.0
      %4708 = vmatprep.subr.mxu0 0.0
      %4709 = vmatpush1.msra.mxu0 0.0
      %4710 = vmatprep.subr.mxu0 0.0
      %4711 = vmatpush1.msra.mxu0 0.0
      %4712 = vmatprep.subr.mxu0 0.0
      %4713 = vmatpush1.msra.mxu0 0.0
      %4714 = vmatprep.subr.mxu0 0.0
      %4715 = vmatpush1.msra.mxu0 0.0
      %4716 = vmatprep.subr.mxu0 0.0
      %4717 = vmatpush1.msra.mxu0 0.0
      %4718 = vmatprep.subr.mxu0 0.0
      %4719 = vmatpush1.msra.mxu0 0.0
      %4720 = vmatprep.subr.mxu0 0.0
      %4721 = vmatpush1.msra.mxu0 0.0
      %4722 = vmatprep.subr.mxu0 0.0
      %4723 = vmatpush1.msra.mxu0 0.0
      %4724 = vmatprep.subr.mxu0 0.0
      %4725 = vmatpush1.msra.mxu0 0.0
      %4726 = vmatprep.subr.mxu0 0.0
      %4727 = vmatpush1.msra.mxu0 0.0
      %4728 = vmatprep.subr.mxu0 0.0
      %4729 = vmatpush1.msra.mxu0 0.0
      %4730 = vmatprep.subr.mxu0 0.0
      %4731 = vmatpush1.msra.mxu0 0.0
      %4732 = vmatprep.subr.mxu0 0.0
      %4733 = vmatpush1.msra.mxu0 0.0
      %4734 = vmatprep.mubr.f32.mxu0 0.0
      %4735 = vmatmul.mubr.f32.gmra.mrb[0].mxu0 %v4575
      %v4736 = vpop.f32.mrb[0].mxu0
      %v4737 = vadd.f32 %v4572, %v4736
      %v4738 = vpop.f32.mrb[0].mxu0
      %4739 = vmatprep.mubr.f32.mxu0 0.0
      %4740 = vmatmul.mubr.f32.gmra.mrb[0].mxu0 %v4578
      %v4741 = vpop.f32.mrb[0].mxu0
      %v4742 = vadd.f32 %v4572, %v4741
      %v4743 = vpop.f32.mrb[0].mxu0
      %4744 = vmatprep.mubr.f32.mxu0 0.0
      %4745 = vmatmul.mubr.f32.gmra.mrb[0].mxu0 %v4581
      %v4746 = vpop.f32.mrb[0].mxu0
      %v4747 = vadd.f32 %v4572, %v4746
      %v4748 = vpop.f32.mrb[0].mxu0
      %4749 = vmatprep.mubr.f32.mxu0 0.0
      %4750 = vmatmul.mubr.f32.gmra.mrb[0].mxu0 %v4584
      %v4751 = vpop.f32.mrb[0].mxu0
      %v4752 = vadd.f32 %v4572, %v4751
      %v4753 = vpop.f32.mrb[0].mxu0
      %4754 = vmatprep.mubr.f32.mxu0 0.0
      %4755 = vmatmul.mubr.f32.gmra.mrb[0].mxu0 %v4587
      %v4756 = vpop.f32.mrb[0].mxu0
      %v4757 = vadd.f32 %v4572, %v4756
      %v4758 = vpop.f32.mrb[0].mxu0
      %4759 = vmatprep.mubr.f32.mxu0 0.0
      %4760 = vmatmul.mubr.f32.gmra.mrb[0].mxu0 %v4590
      %v4761 = vpop.f32.mrb[0].mxu0
      %v4762 = vadd.f32 %v4572, %v4761
      %v4763 = vpop.f32.mrb[0].mxu0
      %4764 = vmatprep.mubr.f32.mxu0 0.0
      %4765 = vmatmul.mubr.f32.gmra.mrb[0].mxu0 %v4593
      %v4766 = vpop.f32.mrb[0].mxu0
      %v4767 = vadd.f32 %v4572, %v4766
      %v4768 = vpop.f32.mrb[0].mxu0
      %4769 = vmatprep.mubr.f32.mxu0 0.0
      %4770 = vmatmul.mubr.f32.gmra.mrb[0].mxu0 %v4596
      %v4771 = vpop.f32.mrb[0].mxu0
      %v4772 = vadd.f32 %v4572, %v4771
      %v4773 = vpop.f32.mrb[0].mxu0
      %4774 = vmatprep.mubr.f32.mxu0 0.0
      %4775 = vmatmul.mubr.f32.gmra.mrb[0].mxu0 %v4599
      %v4776 = vpop.f32.mrb[0].mxu0
      %v4777 = vadd.f32 %v4572, %v4776
      %v4778 = vpop.f32.mrb[0].mxu0
      %4779 = vmatprep.mubr.f32.mxu0 0.0
      %4780 = vmatmul.mubr.f32.gmra.mrb[0].mxu0 %v4602
      %v4781 = vpop.f32.mrb[0].mxu0
      %v4782 = vadd.f32 %v4572, %v4781
      %v4783 = vpop.f32.mrb[0].mxu0
      %4784 = vmatprep.mubr.f32.mxu0 0.0
      %4785 = vmatmul.mubr.f32.gmra.mrb[0].mxu0 %v4605
      %v4786 = vpop.f32.mrb[0].mxu0
      %v4787 = vadd.f32 %v4572, %v4786
      %v4788 = vpop.f32.mrb[0].mxu0
      %4789 = vmatprep.mubr.f32.mxu0 0.0
      %4790 = vmatmul.mubr.f32.gmra.mrb[0].mxu0 %v4608
      %v4791 = vpop.f32.mrb[0].mxu0
      %v4792 = vadd.f32 %v4572, %v4791
      %v4793 = vpop.f32.mrb[0].mxu0
      %4794 = vmatprep.mubr.f32.mxu0 0.0
      %4795 = vmatmul.mubr.f32.gmra.mrb[0].mxu0 %v4611
      %v4796 = vpop.f32.mrb[0].mxu0
      %v4797 = vadd.f32 %v4572, %v4796
      %v4798 = vpop.f32.mrb[0].mxu0
      %4799 = vmatprep.mubr.f32.mxu0 0.0
      %4800 = vmatmul.mubr.f32.gmra.mrb[0].mxu0 %v4614
      %v4801 = vpop.f32.mrb[0].mxu0
      %v4802 = vadd.f32 %v4572, %v4801
      %v4803 = vpop.f32.mrb[0].mxu0
      %4804 = vmatprep.mubr.f32.mxu0 0.0
      %4805 = vmatmul.mubr.f32.gmra.mrb[0].mxu0 %v4617
      %v4806 = vpop.f32.mrb[0].mxu0
      %v4807 = vadd.f32 %v4572, %v4806
      %v4808 = vpop.f32.mrb[0].mxu0
      %4809 = vmatprep.mubr.f32.mxu0 0.0
      %4810 = vmatmul.mubr.f32.gmra.mrb[0].mxu0 %v4620
      %v4811 = vpop.f32.mrb[0].mxu0
      %v4812 = vadd.f32 %v4572, %v4811
      %v4813 = vpop.f32.mrb[0].mxu0
      %4814 = vmatprep.mubr.f32.mxu0 0.0
      %4815 = vmatmul.mubr.f32.gmra.mrb[0].mxu0 %v4623
      %v4816 = vpop.f32.mrb[0].mxu0
      %v4817 = vadd.f32 %v4572, %v4816
      %v4818 = vpop.f32.mrb[0].mxu0
      %4819 = vmatprep.mubr.f32.mxu0 0.0
      %4820 = vmatmul.mubr.f32.gmra.mrb[0].mxu0 %v4626
      %v4821 = vpop.f32.mrb[0].mxu0
      %v4822 = vadd.f32 %v4572, %v4821
      %v4823 = vpop.f32.mrb[0].mxu0
      %4824 = vmatprep.mubr.f32.mxu0 0.0
      %4825 = vmatmul.mubr.f32.gmra.mrb[0].mxu0 %v4629
      %v4826 = vpop.f32.mrb[0].mxu0
      %v4827 = vadd.f32 %v4572, %v4826
      %v4828 = vpop.f32.mrb[0].mxu0
      %4829 = vmatprep.mubr.f32.mxu0 0.0
      %4830 = vmatmul.mubr.f32.gmra.mrb[0].mxu0 %v4632
      %v4831 = vpop.f32.mrb[0].mxu0
      %v4832 = vadd.f32 %v4572, %v4831
      %v4833 = vpop.f32.mrb[0].mxu0
      %4834 = vmatprep.mubr.f32.mxu0 0.0
      %4835 = vmatmul.mubr.f32.gmra.mrb[0].mxu0 %v4635
      %v4836 = vpop.f32.mrb[0].mxu0
      %v4837 = vadd.f32 %v4572, %v4836
      %v4838 = vpop.f32.mrb[0].mxu0
      %4839 = vmatprep.mubr.f32.mxu0 0.0
      %4840 = vmatmul.mubr.f32.gmra.mrb[0].mxu0 %v4638
      %v4841 = vpop.f32.mrb[0].mxu0
      %v4842 = vadd.f32 %v4572, %v4841
      %v4843 = vpop.f32.mrb[0].mxu0
      %4844 = vmatprep.mubr.f32.mxu0 0.0
      %4845 = vmatmul.mubr.f32.gmra.mrb[0].mxu0 %v4641
      %v4846 = vpop.f32.mrb[0].mxu0
      %v4847 = vadd.f32 %v4572, %v4846
      %v4848 = vpop.f32.mrb[0].mxu0
      %4849 = vmatprep.mubr.f32.mxu0 0.0
      %4850 = vmatmul.mubr.f32.gmra.mrb[0].mxu0 %v4644
      %v4851 = vpop.f32.mrb[0].mxu0
      %v4852 = vadd.f32 %v4572, %v4851
      %v4853 = vpop.f32.mrb[0].mxu0
      %4854 = vmatprep.mubr.f32.mxu0 0.0
      %4855 = vmatmul.mubr.f32.gmra.mrb[0].mxu0 %v4647
      %v4856 = vpop.f32.mrb[0].mxu0
      %v4857 = vadd.f32 %v4572, %v4856
      %v4858 = vpop.f32.mrb[0].mxu0
      %4859 = vmatprep.mubr.f32.mxu0 0.0
      %4860 = vmatmul.mubr.f32.gmra.mrb[0].mxu0 %v4650
      %v4861 = vpop.f32.mrb[0].mxu0
      %v4862 = vadd.f32 %v4572, %v4861
      %v4863 = vpop.f32.mrb[0].mxu0
      %4864 = vmatprep.mubr.f32.mxu0 0.0
      %4865 = vmatmul.mubr.f32.gmra.mrb[0].mxu0 %v4653
      %v4866 = vpop.f32.mrb[0].mxu0
      %v4867 = vadd.f32 %v4572, %v4866
      %v4868 = vpop.f32.mrb[0].mxu0
      %4869 = vmatprep.mubr.f32.mxu0 0.0
      %4870 = vmatmul.mubr.f32.gmra.mrb[0].mxu0 %v4656
      %v4871 = vpop.f32.mrb[0].mxu0
      %v4872 = vadd.f32 %v4572, %v4871
      %v4873 = vpop.f32.mrb[0].mxu0
      %4874 = vmatprep.mubr.f32.mxu0 0.0
      %4875 = vmatmul.mubr.f32.gmra.mrb[0].mxu0 %v4659
      %v4876 = vpop.f32.mrb[0].mxu0
      %v4877 = vadd.f32 %v4572, %v4876
      %v4878 = vpop.f32.mrb[0].mxu0
      %4879 = vmatprep.mubr.f32.mxu0 0.0
      %4880 = vmatmul.mubr.f32.gmra.mrb[0].mxu0 %v4662
      %v4881 = vpop.f32.mrb[0].mxu0
      %v4882 = vadd.f32 %v4572, %v4881
      %v4883 = vpop.f32.mrb[0].mxu0
      %4884 = vmatprep.mubr.f32.mxu0 0.0
      %4885 = vmatmul.mubr.f32.gmra.mrb[0].mxu0 %v4665
      %v4886 = vpop.f32.mrb[0].mxu0
      %v4887 = vadd.f32 %v4572, %v4886
      %v4888 = vpop.f32.mrb[0].mxu0
      %4889 = vmatprep.mubr.f32.mxu0 0.0
      %4890 = vmatmul.mubr.f32.gmra.mrb[0].mxu0 %v4668
      %v4891 = vpop.f32.mrb[0].mxu0
      %v4892 = vadd.f32 %v4572, %v4891
      %v4893 = vpop.f32.mrb[0].mxu0
      %4894 = vdwg.mxu0
      %v4895 = vmul.f32 %v4737, 0.5
      %v4896 = vmul.f32 %v4742, 0.5
      %v4897 = vmul.f32 %v4747, 0.5
      %v4898 = vmul.f32 %v4752, 0.5
      %v4899 = vmul.f32 %v4757, 0.5
      %v4900 = vmul.f32 %v4762, 0.5
      %v4901 = vmul.f32 %v4767, 0.5
      %v4902 = vmul.f32 %v4772, 0.5
      %v4903 = vmul.f32 %v4777, 0.5
      %v4904 = vmul.f32 %v4782, 0.5
      %v4905 = vmul.f32 %v4787, 0.5
      %v4906 = vmul.f32 %v4792, 0.5
      %v4907 = vmul.f32 %v4797, 0.5
      %v4908 = vmul.f32 %v4802, 0.5
      %v4909 = vmul.f32 %v4807, 0.5
      %v4910 = vmul.f32 %v4812, 0.5
      %v4911 = vmul.f32 %v4817, 0.5
      %v4912 = vmul.f32 %v4822, 0.5
      %v4913 = vmul.f32 %v4827, 0.5
      %v4914 = vmul.f32 %v4832, 0.5
      %v4915 = vmul.f32 %v4837, 0.5
      %v4916 = vmul.f32 %v4842, 0.5
      %v4917 = vmul.f32 %v4847, 0.5
      %v4918 = vmul.f32 %v4852, 0.5
      %v4919 = vmul.f32 %v4857, 0.5
      %v4920 = vmul.f32 %v4862, 0.5
      %v4921 = vmul.f32 %v4867, 0.5
      %v4922 = vmul.f32 %v4872, 0.5
      %v4923 = vmul.f32 %v4877, 0.5
      %v4924 = vmul.f32 %v4882, 0.5
      %v4925 = vmul.f32 %v4887, 0.5
      %v4926 = vmul.f32 %v4892, 0.5
      %v4927 = vmul.f32 %v4737, 0.70710677
      %v4928 = vmul.f32 %v4742, 0.70710677
      %v4929 = vmul.f32 %v4747, 0.70710677
      %v4930 = vmul.f32 %v4752, 0.70710677
      %v4931 = vmul.f32 %v4757, 0.70710677
      %v4932 = vmul.f32 %v4762, 0.70710677
      %v4933 = vmul.f32 %v4767, 0.70710677
      %v4934 = vmul.f32 %v4772, 0.70710677
      %v4935 = vmul.f32 %v4777, 0.70710677
      %v4936 = vmul.f32 %v4782, 0.70710677
      %v4937 = vmul.f32 %v4787, 0.70710677
      %v4938 = vmul.f32 %v4792, 0.70710677
      %v4939 = vmul.f32 %v4797, 0.70710677
      %v4940 = vmul.f32 %v4802, 0.70710677
      %v4941 = vmul.f32 %v4807, 0.70710677
      %v4942 = vmul.f32 %v4812, 0.70710677
      %v4943 = vmul.f32 %v4817, 0.70710677
      %v4944 = vmul.f32 %v4822, 0.70710677
      %v4945 = vmul.f32 %v4827, 0.70710677
      %v4946 = vmul.f32 %v4832, 0.70710677
      %v4947 = vmul.f32 %v4837, 0.70710677
      %v4948 = vmul.f32 %v4842, 0.70710677
      %v4949 = vmul.f32 %v4847, 0.70710677
      %v4950 = vmul.f32 %v4852, 0.70710677
      %v4951 = vmul.f32 %v4857, 0.70710677
      %v4952 = vmul.f32 %v4862, 0.70710677
      %v4953 = vmul.f32 %v4867, 0.70710677
      %v4954 = vmul.f32 %v4872, 0.70710677
      %v4955 = vmul.f32 %v4877, 0.70710677
      %v4956 = vmul.f32 %v4882, 0.70710677
      %v4957 = vmul.f32 %v4887, 0.70710677
      %v4958 = vmul.f32 %v4892, 0.70710677
      %v4959 = verf.f32.pop %v4927
      %v4960 = verf.f32.pop %v4928
      %v4961 = verf.f32.pop %v4929
      %v4962 = verf.f32.pop %v4930
      %v4963 = verf.f32.pop %v4931
      %v4964 = verf.f32.pop %v4932
      %v4965 = verf.f32.pop %v4933
      %v4966 = verf.f32.pop %v4934
      %v4967 = verf.f32.pop %v4935
      %v4968 = verf.f32.pop %v4936
      %v4969 = verf.f32.pop %v4937
      %v4970 = verf.f32.pop %v4938
      %v4971 = verf.f32.pop %v4939
      %v4972 = verf.f32.pop %v4940
      %v4973 = verf.f32.pop %v4941
      %v4974 = verf.f32.pop %v4942
      %v4975 = verf.f32.pop %v4943
      %v4976 = verf.f32.pop %v4944
      %v4977 = verf.f32.pop %v4945
      %v4978 = verf.f32.pop %v4946
      %v4979 = verf.f32.pop %v4947
      %v4980 = verf.f32.pop %v4948
      %v4981 = verf.f32.pop %v4949
      %v4982 = verf.f32.pop %v4950
      %v4983 = verf.f32.pop %v4951
      %v4984 = verf.f32.pop %v4952
      %v4985 = verf.f32.pop %v4953
      %v4986 = verf.f32.pop %v4954
      %v4987 = verf.f32.pop %v4955
      %v4988 = verf.f32.pop %v4956
      %v4989 = verf.f32.pop %v4957
      %v4990 = verf.f32.pop %v4958
      %v4991 = vadd.f32 %v4959, 1.0
      %v4992 = vadd.f32 %v4960, 1.0
      %v4993 = vadd.f32 %v4961, 1.0
      %v4994 = vadd.f32 %v4962, 1.0
      %v4995 = vadd.f32 %v4963, 1.0
      %v4996 = vadd.f32 %v4964, 1.0
      %v4997 = vadd.f32 %v4965, 1.0
      %v4998 = vadd.f32 %v4966, 1.0
      %v4999 = vadd.f32 %v4967, 1.0
      %v5000 = vadd.f32 %v4968, 1.0
      %v5001 = vadd.f32 %v4969, 1.0
      %v5002 = vadd.f32 %v4970, 1.0
      %v5003 = vadd.f32 %v4971, 1.0
      %v5004 = vadd.f32 %v4972, 1.0
      %v5005 = vadd.f32 %v4973, 1.0
      %v5006 = vadd.f32 %v4974, 1.0
      %v5007 = vadd.f32 %v4975, 1.0
      %v5008 = vadd.f32 %v4976, 1.0
      %v5009 = vadd.f32 %v4977, 1.0
      %v5010 = vadd.f32 %v4978, 1.0
      %v5011 = vadd.f32 %v4979, 1.0
      %v5012 = vadd.f32 %v4980, 1.0
      %v5013 = vadd.f32 %v4981, 1.0
      %v5014 = vadd.f32 %v4982, 1.0
      %v5015 = vadd.f32 %v4983, 1.0
      %v5016 = vadd.f32 %v4984, 1.0
      %v5017 = vadd.f32 %v4985, 1.0
      %v5018 = vadd.f32 %v4986, 1.0
      %v5019 = vadd.f32 %v4987, 1.0
      %v5020 = vadd.f32 %v4988, 1.0
      %v5021 = vadd.f32 %v4989, 1.0
      %v5022 = vadd.f32 %v4990, 1.0
      %v5023 = vmul.f32 %v4895, %v4991
      %v5024 = vmul.f32 %v4896, %v4992
      %v5025 = vmul.f32 %v4897, %v4993
      %v5026 = vmul.f32 %v4898, %v4994
      %v5027 = vmul.f32 %v4899, %v4995
      %v5028 = vmul.f32 %v4900, %v4996
      %v5029 = vmul.f32 %v4901, %v4997
      %v5030 = vmul.f32 %v4902, %v4998
      %v5031 = vmul.f32 %v4903, %v4999
      %v5032 = vmul.f32 %v4904, %v5000
      %v5033 = vmul.f32 %v4905, %v5001
      %v5034 = vmul.f32 %v4906, %v5002
      %v5035 = vmul.f32 %v4907, %v5003
      %v5036 = vmul.f32 %v4908, %v5004
      %v5037 = vmul.f32 %v4909, %v5005
      %v5038 = vmul.f32 %v4910, %v5006
      %v5039 = vmul.f32 %v4911, %v5007
      %v5040 = vmul.f32 %v4912, %v5008
      %v5041 = vmul.f32 %v4913, %v5009
      %v5042 = vmul.f32 %v4914, %v5010
      %v5043 = vmul.f32 %v4915, %v5011
      %v5044 = vmul.f32 %v4916, %v5012
      %v5045 = vmul.f32 %v4917, %v5013
      %v5046 = vmul.f32 %v4918, %v5014
      %v5047 = vmul.f32 %v4919, %v5015
      %v5048 = vmul.f32 %v4920, %v5016
      %v5049 = vmul.f32 %v4921, %v5017
      %v5050 = vmul.f32 %v4922, %v5018
      %v5051 = vmul.f32 %v4923, %v5019
      %v5052 = vmul.f32 %v4924, %v5020
      %v5053 = vmul.f32 %v4925, %v5021
      %v5054 = vmul.f32 %v4926, %v5022
      %v5055 = vlaneseq
      %v5056 = vshrl.u32 %v5055, 7
      %v5057 = vsub.s32 0, %v5056
      %v5058 = vrot.slane %v582, %v5057
      %v5060 = vsel %vm4573, %v5023, 0
      %v5063 = vsel %vm4573, %v5024, 0
      %v5066 = vsel %vm4573, %v5025, 0
      %v5069 = vsel %vm4573, %v5026, 0
      %v5072 = vsel %vm4573, %v5027, 0
      %v5075 = vsel %vm4573, %v5028, 0
      %v5078 = vsel %vm4573, %v5029, 0
      %v5081 = vsel %vm4573, %v5030, 0
      %v5084 = vsel %vm4573, %v5031, 0
      %v5087 = vsel %vm4573, %v5032, 0
      %v5090 = vsel %vm4573, %v5033, 0
      %v5093 = vsel %vm4573, %v5034, 0
      %v5096 = vsel %vm4573, %v5035, 0
      %v5099 = vsel %vm4573, %v5036, 0
      %v5102 = vsel %vm4573, %v5037, 0
      %v5105 = vsel %vm4573, %v5038, 0
      %v5108 = vsel %vm4573, %v5039, 0
      %v5111 = vsel %vm4573, %v5040, 0
      %v5114 = vsel %vm4573, %v5041, 0
      %v5117 = vsel %vm4573, %v5042, 0
      %v5120 = vsel %vm4573, %v5043, 0
      %v5123 = vsel %vm4573, %v5044, 0
      %v5126 = vsel %vm4573, %v5045, 0
      %v5129 = vsel %vm4573, %v5046, 0
      %v5132 = vsel %vm4573, %v5047, 0
      %v5135 = vsel %vm4573, %v5048, 0
      %v5138 = vsel %vm4573, %v5049, 0
      %v5141 = vsel %vm4573, %v5050, 0
      %v5144 = vsel %vm4573, %v5051, 0
      %v5147 = vsel %vm4573, %v5052, 0
      %v5150 = vsel %vm4573, %v5053, 0
      %v5153 = vsel %vm4573, %v5054, 0
      %5155 = vmatprep.subr.mxu0 0.0
      %5156 = vmatpush1.msra.mxu0 %v4565
      %5157 = vmatprep.subr.mxu0 0.0
      %5158 = vmatpush1.msra.mxu0 %v4566
      %5159 = vmatprep.subr.mxu0 0.0
      %5160 = vmatpush1.msra.mxu0 %v4567
      %5161 = vmatprep.subr.mxu0 0.0
      %5162 = vmatpush1.msra.mxu0 %v4568
      %5163 = vmatprep.subr.mxu0 0.0
      %5164 = vmatpush1.msra.mxu0 0.0
      %5165 = vmatprep.subr.mxu0 0.0
      %5166 = vmatpush1.msra.mxu0 0.0
      %5167 = vmatprep.subr.mxu0 0.0
      %5168 = vmatpush1.msra.mxu0 0.0
      %5169 = vmatprep.subr.mxu0 0.0
      %5170 = vmatpush1.msra.mxu0 0.0
      %5171 = vmatprep.subr.mxu0 0.0
      %5172 = vmatpush1.msra.mxu0 0.0
      %5173 = vmatprep.subr.mxu0 0.0
      %5174 = vmatpush1.msra.mxu0 0.0
      %5175 = vmatprep.subr.mxu0 0.0
      %5176 = vmatpush1.msra.mxu0 0.0
      %5177 = vmatprep.subr.mxu0 0.0
      %5178 = vmatpush1.msra.mxu0 0.0
      %5179 = vmatprep.subr.mxu0 0.0
      %5180 = vmatpush1.msra.mxu0 0.0
      %5181 = vmatprep.subr.mxu0 0.0
      %5182 = vmatpush1.msra.mxu0 0.0
      %5183 = vmatprep.subr.mxu0 0.0
      %5184 = vmatpush1.msra.mxu0 0.0
      %5185 = vmatprep.subr.mxu0 0.0
      %5186 = vmatpush1.msra.mxu0 0.0
      %5187 = vmatprep.subr.mxu0 0.0
      %5188 = vmatpush1.msra.mxu0 0.0
      %5189 = vmatprep.subr.mxu0 0.0
      %5190 = vmatpush1.msra.mxu0 0.0
      %5191 = vmatprep.subr.mxu0 0.0
      %5192 = vmatpush1.msra.mxu0 0.0
      %5193 = vmatprep.subr.mxu0 0.0
      %5194 = vmatpush1.msra.mxu0 0.0
      %5195 = vmatprep.subr.mxu0 0.0
      %5196 = vmatpush1.msra.mxu0 0.0
      %5197 = vmatprep.subr.mxu0 0.0
      %5198 = vmatpush1.msra.mxu0 0.0
      %5199 = vmatprep.subr.mxu0 0.0
      %5200 = vmatpush1.msra.mxu0 0.0
      %5201 = vmatprep.subr.mxu0 0.0
      %5202 = vmatpush1.msra.mxu0 0.0
      %5203 = vmatprep.subr.mxu0 0.0
      %5204 = vmatpush1.msra.mxu0 0.0
      %5205 = vmatprep.subr.mxu0 0.0
      %5206 = vmatpush1.msra.mxu0 0.0
      %5207 = vmatprep.subr.mxu0 0.0
      %5208 = vmatpush1.msra.mxu0 0.0
      %5209 = vmatprep.subr.mxu0 0.0
      %5210 = vmatpush1.msra.mxu0 0.0
      %5211 = vmatprep.subr.mxu0 0.0
      %5212 = vmatpush1.msra.mxu0 0.0
      %5213 = vmatprep.subr.mxu0 0.0
      %5214 = vmatpush1.msra.mxu0 0.0
      %5215 = vmatprep.subr.mxu0 0.0
      %5216 = vmatpush1.msra.mxu0 0.0
      %5217 = vmatprep.subr.mxu0 0.0
      %5218 = vmatpush1.msra.mxu0 0.0
      %5219 = vmatprep.mubr.f32.mxu0 0.0
      %5220 = vmatmul.mubr.f32.gmra.mrb[0].mxu0 %v5060
      %v5221 = vpop.f32.mrb[0].mxu0
      %v5222 = vadd.f32 %v5058, %v5221
      %v5223 = vpop.f32.mrb[0].mxu0
      %5224 = vmatprep.mubr.f32.mxu0 0.0
      %5225 = vmatmul.mubr.f32.gmra.mrb[0].mxu0 %v5063
      %v5226 = vpop.f32.mrb[0].mxu0
      %v5227 = vadd.f32 %v5058, %v5226
      %v5228 = vpop.f32.mrb[0].mxu0
      %5229 = vmatprep.mubr.f32.mxu0 0.0
      %5230 = vmatmul.mubr.f32.gmra.mrb[0].mxu0 %v5066
      %v5231 = vpop.f32.mrb[0].mxu0
      %v5232 = vadd.f32 %v5058, %v5231
      %v5233 = vpop.f32.mrb[0].mxu0
      %5234 = vmatprep.mubr.f32.mxu0 0.0
      %5235 = vmatmul.mubr.f32.gmra.mrb[0].mxu0 %v5069
      %v5236 = vpop.f32.mrb[0].mxu0
      %v5237 = vadd.f32 %v5058, %v5236
      %v5238 = vpop.f32.mrb[0].mxu0
      %5239 = vmatprep.mubr.f32.mxu0 0.0
      %5240 = vmatmul.mubr.f32.gmra.mrb[0].mxu0 %v5072
      %v5241 = vpop.f32.mrb[0].mxu0
      %v5242 = vadd.f32 %v5058, %v5241
      %v5243 = vpop.f32.mrb[0].mxu0
      %5244 = vmatprep.mubr.f32.mxu0 0.0
      %5245 = vmatmul.mubr.f32.gmra.mrb[0].mxu0 %v5075
      %v5246 = vpop.f32.mrb[0].mxu0
      %v5247 = vadd.f32 %v5058, %v5246
      %v5248 = vpop.f32.mrb[0].mxu0
      %5249 = vmatprep.mubr.f32.mxu0 0.0
      %5250 = vmatmul.mubr.f32.gmra.mrb[0].mxu0 %v5078
      %v5251 = vpop.f32.mrb[0].mxu0
      %v5252 = vadd.f32 %v5058, %v5251
      %v5253 = vpop.f32.mrb[0].mxu0
      %5254 = vmatprep.mubr.f32.mxu0 0.0
      %5255 = vmatmul.mubr.f32.gmra.mrb[0].mxu0 %v5081
      %v5256 = vpop.f32.mrb[0].mxu0
      %v5257 = vadd.f32 %v5058, %v5256
      %v5258 = vpop.f32.mrb[0].mxu0
      %5259 = vmatprep.mubr.f32.mxu0 0.0
      %5260 = vmatmul.mubr.f32.gmra.mrb[0].mxu0 %v5084
      %v5261 = vpop.f32.mrb[0].mxu0
      %v5262 = vadd.f32 %v5058, %v5261
      %v5263 = vpop.f32.mrb[0].mxu0
      %5264 = vmatprep.mubr.f32.mxu0 0.0
      %5265 = vmatmul.mubr.f32.gmra.mrb[0].mxu0 %v5087
      %v5266 = vpop.f32.mrb[0].mxu0
      %v5267 = vadd.f32 %v5058, %v5266
      %v5268 = vpop.f32.mrb[0].mxu0
      %5269 = vmatprep.mubr.f32.mxu0 0.0
      %5270 = vmatmul.mubr.f32.gmra.mrb[0].mxu0 %v5090
      %v5271 = vpop.f32.mrb[0].mxu0
      %v5272 = vadd.f32 %v5058, %v5271
      %v5273 = vpop.f32.mrb[0].mxu0
      %5274 = vmatprep.mubr.f32.mxu0 0.0
      %5275 = vmatmul.mubr.f32.gmra.mrb[0].mxu0 %v5093
      %v5276 = vpop.f32.mrb[0].mxu0
      %v5277 = vadd.f32 %v5058, %v5276
      %v5278 = vpop.f32.mrb[0].mxu0
      %5279 = vmatprep.mubr.f32.mxu0 0.0
      %5280 = vmatmul.mubr.f32.gmra.mrb[0].mxu0 %v5096
      %v5281 = vpop.f32.mrb[0].mxu0
      %v5282 = vadd.f32 %v5058, %v5281
      %v5283 = vpop.f32.mrb[0].mxu0
      %5284 = vmatprep.mubr.f32.mxu0 0.0
      %5285 = vmatmul.mubr.f32.gmra.mrb[0].mxu0 %v5099
      %v5286 = vpop.f32.mrb[0].mxu0
      %v5287 = vadd.f32 %v5058, %v5286
      %v5288 = vpop.f32.mrb[0].mxu0
      %5289 = vmatprep.mubr.f32.mxu0 0.0
      %5290 = vmatmul.mubr.f32.gmra.mrb[0].mxu0 %v5102
      %v5291 = vpop.f32.mrb[0].mxu0
      %v5292 = vadd.f32 %v5058, %v5291
      %v5293 = vpop.f32.mrb[0].mxu0
      %5294 = vmatprep.mubr.f32.mxu0 0.0
      %5295 = vmatmul.mubr.f32.gmra.mrb[0].mxu0 %v5105
      %v5296 = vpop.f32.mrb[0].mxu0
      %v5297 = vadd.f32 %v5058, %v5296
      %v5298 = vpop.f32.mrb[0].mxu0
      %5299 = vmatprep.mubr.f32.mxu0 0.0
      %5300 = vmatmul.mubr.f32.gmra.mrb[0].mxu0 %v5108
      %v5301 = vpop.f32.mrb[0].mxu0
      %v5302 = vadd.f32 %v5058, %v5301
      %v5303 = vpop.f32.mrb[0].mxu0
      %5304 = vmatprep.mubr.f32.mxu0 0.0
      %5305 = vmatmul.mubr.f32.gmra.mrb[0].mxu0 %v5111
      %v5306 = vpop.f32.mrb[0].mxu0
      %v5307 = vadd.f32 %v5058, %v5306
      %v5308 = vpop.f32.mrb[0].mxu0
      %5309 = vmatprep.mubr.f32.mxu0 0.0
      %5310 = vmatmul.mubr.f32.gmra.mrb[0].mxu0 %v5114
      %v5311 = vpop.f32.mrb[0].mxu0
      %v5312 = vadd.f32 %v5058, %v5311
      %v5313 = vpop.f32.mrb[0].mxu0
      %5314 = vmatprep.mubr.f32.mxu0 0.0
      %5315 = vmatmul.mubr.f32.gmra.mrb[0].mxu0 %v5117
      %v5316 = vpop.f32.mrb[0].mxu0
      %v5317 = vadd.f32 %v5058, %v5316
      %v5318 = vpop.f32.mrb[0].mxu0
      %5319 = vmatprep.mubr.f32.mxu0 0.0
      %5320 = vmatmul.mubr.f32.gmra.mrb[0].mxu0 %v5120
      %v5321 = vpop.f32.mrb[0].mxu0
      %v5322 = vadd.f32 %v5058, %v5321
      %v5323 = vpop.f32.mrb[0].mxu0
      %5324 = vmatprep.mubr.f32.mxu0 0.0
      %5325 = vmatmul.mubr.f32.gmra.mrb[0].mxu0 %v5123
      %v5326 = vpop.f32.mrb[0].mxu0
      %v5327 = vadd.f32 %v5058, %v5326
      %v5328 = vpop.f32.mrb[0].mxu0
      %5329 = vmatprep.mubr.f32.mxu0 0.0
      %5330 = vmatmul.mubr.f32.gmra.mrb[0].mxu0 %v5126
      %v5331 = vpop.f32.mrb[0].mxu0
      %v5332 = vadd.f32 %v5058, %v5331
      %v5333 = vpop.f32.mrb[0].mxu0
      %5334 = vmatprep.mubr.f32.mxu0 0.0
      %5335 = vmatmul.mubr.f32.gmra.mrb[0].mxu0 %v5129
      %v5336 = vpop.f32.mrb[0].mxu0
      %v5337 = vadd.f32 %v5058, %v5336
      %v5338 = vpop.f32.mrb[0].mxu0
      %5339 = vmatprep.mubr.f32.mxu0 0.0
      %5340 = vmatmul.mubr.f32.gmra.mrb[0].mxu0 %v5132
      %v5341 = vpop.f32.mrb[0].mxu0
      %v5342 = vadd.f32 %v5058, %v5341
      %v5343 = vpop.f32.mrb[0].mxu0
      %5344 = vmatprep.mubr.f32.mxu0 0.0
      %5345 = vmatmul.mubr.f32.gmra.mrb[0].mxu0 %v5135
      %v5346 = vpop.f32.mrb[0].mxu0
      %v5347 = vadd.f32 %v5058, %v5346
      %v5348 = vpop.f32.mrb[0].mxu0
      %5349 = vmatprep.mubr.f32.mxu0 0.0
      %5350 = vmatmul.mubr.f32.gmra.mrb[0].mxu0 %v5138
      %v5351 = vpop.f32.mrb[0].mxu0
      %v5352 = vadd.f32 %v5058, %v5351
      %v5353 = vpop.f32.mrb[0].mxu0
      %5354 = vmatprep.mubr.f32.mxu0 0.0
      %5355 = vmatmul.mubr.f32.gmra.mrb[0].mxu0 %v5141
      %v5356 = vpop.f32.mrb[0].mxu0
      %v5357 = vadd.f32 %v5058, %v5356
      %v5358 = vpop.f32.mrb[0].mxu0
      %5359 = vmatprep.mubr.f32.mxu0 0.0
      %5360 = vmatmul.mubr.f32.gmra.mrb[0].mxu0 %v5144
      %v5361 = vpop.f32.mrb[0].mxu0
      %v5362 = vadd.f32 %v5058, %v5361
      %v5363 = vpop.f32.mrb[0].mxu0
      %5364 = vmatprep.mubr.f32.mxu0 0.0
      %5365 = vmatmul.mubr.f32.gmra.mrb[0].mxu0 %v5147
      %v5366 = vpop.f32.mrb[0].mxu0
      %v5367 = vadd.f32 %v5058, %v5366
      %v5368 = vpop.f32.mrb[0].mxu0
      %5369 = vmatprep.mubr.f32.mxu0 0.0
      %5370 = vmatmul.mubr.f32.gmra.mrb[0].mxu0 %v5150
      %v5371 = vpop.f32.mrb[0].mxu0
      %v5372 = vadd.f32 %v5058, %v5371
      %v5373 = vpop.f32.mrb[0].mxu0
      %5374 = vmatprep.mubr.f32.mxu0 0.0
      %5375 = vmatmul.mubr.f32.gmra.mrb[0].mxu0 %v5153
      %v5376 = vpop.f32.mrb[0].mxu0
      %v5377 = vadd.f32 %v5058, %v5376
      %v5378 = vpop.f32.mrb[0].mxu0
      %5379 = vdwg.mxu0
      %v5380 = vxor.u32 %v5222, 2147483648
      %v5381 = vxor.u32 %v5227, 2147483648
      %v5382 = vxor.u32 %v5232, 2147483648
      %v5383 = vxor.u32 %v5237, 2147483648
      %v5384 = vxor.u32 %v5242, 2147483648
      %v5385 = vxor.u32 %v5247, 2147483648
      %v5386 = vxor.u32 %v5252, 2147483648
      %v5387 = vxor.u32 %v5257, 2147483648
      %v5388 = vxor.u32 %v5262, 2147483648
      %v5389 = vxor.u32 %v5267, 2147483648
      %v5390 = vxor.u32 %v5272, 2147483648
      %v5391 = vxor.u32 %v5277, 2147483648
      %v5392 = vxor.u32 %v5282, 2147483648
      %v5393 = vxor.u32 %v5287, 2147483648
      %v5394 = vxor.u32 %v5292, 2147483648
      %v5395 = vxor.u32 %v5297, 2147483648
      %v5396 = vxor.u32 %v5302, 2147483648
      %v5397 = vxor.u32 %v5307, 2147483648
      %v5398 = vxor.u32 %v5312, 2147483648
      %v5399 = vxor.u32 %v5317, 2147483648
      %v5400 = vxor.u32 %v5322, 2147483648
      %v5401 = vxor.u32 %v5327, 2147483648
      %v5402 = vxor.u32 %v5332, 2147483648
      %v5403 = vxor.u32 %v5337, 2147483648
      %v5404 = vxor.u32 %v5342, 2147483648
      %v5405 = vxor.u32 %v5347, 2147483648
      %v5406 = vxor.u32 %v5352, 2147483648
      %v5407 = vxor.u32 %v5357, 2147483648
      %v5408 = vxor.u32 %v5362, 2147483648
      %v5409 = vxor.u32 %v5367, 2147483648
      %v5410 = vxor.u32 %v5372, 2147483648
      %v5411 = vxor.u32 %v5377, 2147483648
      %v5412 = vmul.f32 %v5380, 1.442695
      %v5413 = vpow.pop %v5412
      %v5414 = vmul.f32 %v5381, 1.442695
      %v5415 = vpow.pop %v5414
      %v5416 = vmul.f32 %v5382, 1.442695
      %v5417 = vpow.pop %v5416
      %v5418 = vmul.f32 %v5383, 1.442695
      %v5419 = vpow.pop %v5418
      %v5420 = vmul.f32 %v5384, 1.442695
      %v5421 = vpow.pop %v5420
      %v5422 = vmul.f32 %v5385, 1.442695
      %v5423 = vpow.pop %v5422
      %v5424 = vmul.f32 %v5386, 1.442695
      %v5425 = vpow.pop %v5424
      %v5426 = vmul.f32 %v5387, 1.442695
      %v5427 = vpow.pop %v5426
      %v5428 = vmul.f32 %v5388, 1.442695
      %v5429 = vpow.pop %v5428
      %v5430 = vmul.f32 %v5389, 1.442695
      %v5431 = vpow.pop %v5430
      %v5432 = vmul.f32 %v5390, 1.442695
      %v5433 = vpow.pop %v5432
      %v5434 = vmul.f32 %v5391, 1.442695
      %v5435 = vpow.pop %v5434
      %v5436 = vmul.f32 %v5392, 1.442695
      %v5437 = vpow.pop %v5436
      %v5438 = vmul.f32 %v5393, 1.442695
      %v5439 = vpow.pop %v5438
      %v5440 = vmul.f32 %v5394, 1.442695
      %v5441 = vpow.pop %v5440
      %v5442 = vmul.f32 %v5395, 1.442695
      %v5443 = vpow.pop %v5442
      %v5444 = vmul.f32 %v5396, 1.442695
      %v5445 = vpow.pop %v5444
      %v5446 = vmul.f32 %v5397, 1.442695
      %v5447 = vpow.pop %v5446
      %v5448 = vmul.f32 %v5398, 1.442695
      %v5449 = vpow.pop %v5448
      %v5450 = vmul.f32 %v5399, 1.442695
      %v5451 = vpow.pop %v5450
      %v5452 = vmul.f32 %v5400, 1.442695
      %v5453 = vpow.pop %v5452
      %v5454 = vmul.f32 %v5401, 1.442695
      %v5455 = vpow.pop %v5454
      %v5456 = vmul.f32 %v5402, 1.442695
      %v5457 = vpow.pop %v5456
      %v5458 = vmul.f32 %v5403, 1.442695
      %v5459 = vpow.pop %v5458
      %v5460 = vmul.f32 %v5404, 1.442695
      %v5461 = vpow.pop %v5460
      %v5462 = vmul.f32 %v5405, 1.442695
      %v5463 = vpow.pop %v5462
      %v5464 = vmul.f32 %v5406, 1.442695
      %v5465 = vpow.pop %v5464
      %v5466 = vmul.f32 %v5407, 1.442695
      %v5467 = vpow.pop %v5466
      %v5468 = vmul.f32 %v5408, 1.442695
      %v5469 = vpow.pop %v5468
      %v5470 = vmul.f32 %v5409, 1.442695
      %v5471 = vpow.pop %v5470
      %v5472 = vmul.f32 %v5410, 1.442695
      %v5473 = vpow.pop %v5472
      %v5474 = vmul.f32 %v5411, 1.442695
      %v5475 = vpow.pop %v5474
      %v5476 = vadd.f32 %v5413, 1.0
      %v5477 = vadd.f32 %v5415, 1.0
      %v5478 = vadd.f32 %v5417, 1.0
      %v5479 = vadd.f32 %v5419, 1.0
      %v5480 = vadd.f32 %v5421, 1.0
      %v5481 = vadd.f32 %v5423, 1.0
      %v5482 = vadd.f32 %v5425, 1.0
      %v5483 = vadd.f32 %v5427, 1.0
      %v5484 = vadd.f32 %v5429, 1.0
      %v5485 = vadd.f32 %v5431, 1.0
      %v5486 = vadd.f32 %v5433, 1.0
      %v5487 = vadd.f32 %v5435, 1.0
      %v5488 = vadd.f32 %v5437, 1.0
      %v5489 = vadd.f32 %v5439, 1.0
      %v5490 = vadd.f32 %v5441, 1.0
      %v5491 = vadd.f32 %v5443, 1.0
      %v5492 = vadd.f32 %v5445, 1.0
      %v5493 = vadd.f32 %v5447, 1.0
      %v5494 = vadd.f32 %v5449, 1.0
      %v5495 = vadd.f32 %v5451, 1.0
      %v5496 = vadd.f32 %v5453, 1.0
      %v5497 = vadd.f32 %v5455, 1.0
      %v5498 = vadd.f32 %v5457, 1.0
      %v5499 = vadd.f32 %v5459, 1.0
      %v5500 = vadd.f32 %v5461, 1.0
      %v5501 = vadd.f32 %v5463, 1.0
      %v5502 = vadd.f32 %v5465, 1.0
      %v5503 = vadd.f32 %v5467, 1.0
      %v5504 = vadd.f32 %v5469, 1.0
      %v5505 = vadd.f32 %v5471, 1.0
      %v5506 = vadd.f32 %v5473, 1.0
      %v5507 = vadd.f32 %v5475, 1.0
      %v5508 = vrcp.pop %v5476
      %v5509 = vmul.f32 1.0, %v5508
      %v5510 = vrcp.pop %v5477
      %v5511 = vmul.f32 1.0, %v5510
      %v5512 = vrcp.pop %v5478
      %v5513 = vmul.f32 1.0, %v5512
      %v5514 = vrcp.pop %v5479
      %v5515 = vmul.f32 1.0, %v5514
      %v5516 = vrcp.pop %v5480
      %v5517 = vmul.f32 1.0, %v5516
      %v5518 = vrcp.pop %v5481
      %v5519 = vmul.f32 1.0, %v5518
      %v5520 = vrcp.pop %v5482
      %v5521 = vmul.f32 1.0, %v5520
      %v5522 = vrcp.pop %v5483
      %v5523 = vmul.f32 1.0, %v5522
      %v5524 = vrcp.pop %v5484
      %v5525 = vmul.f32 1.0, %v5524
      %v5526 = vrcp.pop %v5485
      %v5527 = vmul.f32 1.0, %v5526
      %v5528 = vrcp.pop %v5486
      %v5529 = vmul.f32 1.0, %v5528
      %v5530 = vrcp.pop %v5487
      %v5531 = vmul.f32 1.0, %v5530
      %v5532 = vrcp.pop %v5488
      %v5533 = vmul.f32 1.0, %v5532
      %v5534 = vrcp.pop %v5489
      %v5535 = vmul.f32 1.0, %v5534
      %v5536 = vrcp.pop %v5490
      %v5537 = vmul.f32 1.0, %v5536
      %v5538 = vrcp.pop %v5491
      %v5539 = vmul.f32 1.0, %v5538
      %v5540 = vrcp.pop %v5492
      %v5541 = vmul.f32 1.0, %v5540
      %v5542 = vrcp.pop %v5493
      %v5543 = vmul.f32 1.0, %v5542
      %v5544 = vrcp.pop %v5494
      %v5545 = vmul.f32 1.0, %v5544
      %v5546 = vrcp.pop %v5495
      %v5547 = vmul.f32 1.0, %v5546
      %v5548 = vrcp.pop %v5496
      %v5549 = vmul.f32 1.0, %v5548
      %v5550 = vrcp.pop %v5497
      %v5551 = vmul.f32 1.0, %v5550
      %v5552 = vrcp.pop %v5498
      %v5553 = vmul.f32 1.0, %v5552
      %v5554 = vrcp.pop %v5499
      %v5555 = vmul.f32 1.0, %v5554
      %v5556 = vrcp.pop %v5500
      %v5557 = vmul.f32 1.0, %v5556
      %v5558 = vrcp.pop %v5501
      %v5559 = vmul.f32 1.0, %v5558
      %v5560 = vrcp.pop %v5502
      %v5561 = vmul.f32 1.0, %v5560
      %v5562 = vrcp.pop %v5503
      %v5563 = vmul.f32 1.0, %v5562
      %v5564 = vrcp.pop %v5504
      %v5565 = vmul.f32 1.0, %v5564
      %v5566 = vrcp.pop %v5505
      %v5567 = vmul.f32 1.0, %v5566
      %v5568 = vrcp.pop %v5506
      %v5569 = vmul.f32 1.0, %v5568
      %v5570 = vrcp.pop %v5507
      %v5571 = vmul.f32 1.0, %v5570
      %v5572 = vmul.f32 %v5222, %v5509
      %v5573 = vmul.f32 %v5227, %v5511
      %v5574 = vmul.f32 %v5232, %v5513
      %v5575 = vmul.f32 %v5237, %v5515
      %v5576 = vmul.f32 %v5242, %v5517
      %v5577 = vmul.f32 %v5247, %v5519
      %v5578 = vmul.f32 %v5252, %v5521
      %v5579 = vmul.f32 %v5257, %v5523
      %v5580 = vmul.f32 %v5262, %v5525
      %v5581 = vmul.f32 %v5267, %v5527
      %v5582 = vmul.f32 %v5272, %v5529
      %v5583 = vmul.f32 %v5277, %v5531
      %v5584 = vmul.f32 %v5282, %v5533
      %v5585 = vmul.f32 %v5287, %v5535
      %v5586 = vmul.f32 %v5292, %v5537
      %v5587 = vmul.f32 %v5297, %v5539
      %v5588 = vmul.f32 %v5302, %v5541
      %v5589 = vmul.f32 %v5307, %v5543
      %v5590 = vmul.f32 %v5312, %v5545
      %v5591 = vmul.f32 %v5317, %v5547
      %v5592 = vmul.f32 %v5322, %v5549
      %v5593 = vmul.f32 %v5327, %v5551
      %v5594 = vmul.f32 %v5332, %v5553
      %v5595 = vmul.f32 %v5337, %v5555
      %v5596 = vmul.f32 %v5342, %v5557
      %v5597 = vmul.f32 %v5347, %v5559
      %v5598 = vmul.f32 %v5352, %v5561
      %v5599 = vmul.f32 %v5357, %v5563
      %v5600 = vmul.f32 %v5362, %v5565
      %v5601 = vmul.f32 %v5367, %v5567
      %v5602 = vmul.f32 %v5372, %v5569
      %v5603 = vmul.f32 %v5377, %v5571
      %v5604 = vld [vmem:[%s5] sm:$0xff]
      %v5605 = vld [vmem:[%s5 + $0x8] sm:$0xff]
      %v5606 = vld [vmem:[%s5 + $0x10] sm:$0xff]
      %v5607 = vld [vmem:[%s5 + $0x18] sm:$0xff]
      %v5608 = vld [vmem:[%s6] sm:$0x1]
      %v5610 = vlaneseq
      %v5611 = vshrl.u32 %v5610, 7
      %v5612 = vsub.s32 0, %v5611
      %v5613 = vrot.slane %v5608, %v5612
      %v5616 = vsel %vm4573, %v5572, 0
      %v5619 = vsel %vm4573, %v5573, 0
      %v5622 = vsel %vm4573, %v5574, 0
      %v5625 = vsel %vm4573, %v5575, 0
      %v5628 = vsel %vm4573, %v5576, 0
      %v5631 = vsel %vm4573, %v5577, 0
      %v5634 = vsel %vm4573, %v5578, 0
      %v5637 = vsel %vm4573, %v5579, 0
      %v5640 = vsel %vm4573, %v5580, 0
      %v5643 = vsel %vm4573, %v5581, 0
      %v5646 = vsel %vm4573, %v5582, 0
      %v5649 = vsel %vm4573, %v5583, 0
      %v5652 = vsel %vm4573, %v5584, 0
      %v5655 = vsel %vm4573, %v5585, 0
      %v5658 = vsel %vm4573, %v5586, 0
      %v5661 = vsel %vm4573, %v5587, 0
      %v5664 = vsel %vm4573, %v5588, 0
      %v5667 = vsel %vm4573, %v5589, 0
      %v5670 = vsel %vm4573, %v5590, 0
      %v5673 = vsel %vm4573, %v5591, 0
      %v5676 = vsel %vm4573, %v5592, 0
      %v5679 = vsel %vm4573, %v5593, 0
      %v5682 = vsel %vm4573, %v5594, 0
      %v5685 = vsel %vm4573, %v5595, 0
      %v5688 = vsel %vm4573, %v5596, 0
      %v5691 = vsel %vm4573, %v5597, 0
      %v5694 = vsel %vm4573, %v5598, 0
      %v5697 = vsel %vm4573, %v5599, 0
      %v5700 = vsel %vm4573, %v5600, 0
      %v5703 = vsel %vm4573, %v5601, 0
      %v5706 = vsel %vm4573, %v5602, 0
      %v5709 = vsel %vm4573, %v5603, 0
      %5711 = vmatprep.subr.mxu0 0.0
      %5712 = vmatpush1.msra.mxu0 %v5604
      %5713 = vmatprep.subr.mxu0 0.0
      %5714 = vmatpush1.msra.mxu0 %v5605
      %5715 = vmatprep.subr.mxu0 0.0
      %5716 = vmatpush1.msra.mxu0 %v5606
      %5717 = vmatprep.subr.mxu0 0.0
      %5718 = vmatpush1.msra.mxu0 %v5607
      %5719 = vmatprep.subr.mxu0 0.0
      %5720 = vmatpush1.msra.mxu0 0.0
      %5721 = vmatprep.subr.mxu0 0.0
      %5722 = vmatpush1.msra.mxu0 0.0
      %5723 = vmatprep.subr.mxu0 0.0
      %5724 = vmatpush1.msra.mxu0 0.0
      %5725 = vmatprep.subr.mxu0 0.0
      %5726 = vmatpush1.msra.mxu0 0.0
      %5727 = vmatprep.subr.mxu0 0.0
      %5728 = vmatpush1.msra.mxu0 0.0
      %5729 = vmatprep.subr.mxu0 0.0
      %5730 = vmatpush1.msra.mxu0 0.0
      %5731 = vmatprep.subr.mxu0 0.0
      %5732 = vmatpush1.msra.mxu0 0.0
      %5733 = vmatprep.subr.mxu0 0.0
      %5734 = vmatpush1.msra.mxu0 0.0
      %5735 = vmatprep.subr.mxu0 0.0
      %5736 = vmatpush1.msra.mxu0 0.0
      %5737 = vmatprep.subr.mxu0 0.0
      %5738 = vmatpush1.msra.mxu0 0.0
      %5739 = vmatprep.subr.mxu0 0.0
      %5740 = vmatpush1.msra.mxu0 0.0
      %5741 = vmatprep.subr.mxu0 0.0
      %5742 = vmatpush1.msra.mxu0 0.0
      %5743 = vmatprep.subr.mxu0 0.0
      %5744 = vmatpush1.msra.mxu0 0.0
      %5745 = vmatprep.subr.mxu0 0.0
      %5746 = vmatpush1.msra.mxu0 0.0
      %5747 = vmatprep.subr.mxu0 0.0
      %5748 = vmatpush1.msra.mxu0 0.0
      %5749 = vmatprep.subr.mxu0 0.0
      %5750 = vmatpush1.msra.mxu0 0.0
      %5751 = vmatprep.subr.mxu0 0.0
      %5752 = vmatpush1.msra.mxu0 0.0
      %5753 = vmatprep.subr.mxu0 0.0
      %5754 = vmatpush1.msra.mxu0 0.0
      %5755 = vmatprep.subr.mxu0 0.0
      %5756 = vmatpush1.msra.mxu0 0.0
      %5757 = vmatprep.subr.mxu0 0.0
      %5758 = vmatpush1.msra.mxu0 0.0
      %5759 = vmatprep.subr.mxu0 0.0
      %5760 = vmatpush1.msra.mxu0 0.0
      %5761 = vmatprep.subr.mxu0 0.0
      %5762 = vmatpush1.msra.mxu0 0.0
      %5763 = vmatprep.subr.mxu0 0.0
      %5764 = vmatpush1.msra.mxu0 0.0
      %5765 = vmatprep.subr.mxu0 0.0
      %5766 = vmatpush1.msra.mxu0 0.0
      %5767 = vmatprep.subr.mxu0 0.0
      %5768 = vmatpush1.msra.mxu0 0.0
      %5769 = vmatprep.subr.mxu0 0.0
      %5770 = vmatpush1.msra.mxu0 0.0
      %5771 = vmatprep.subr.mxu0 0.0
      %5772 = vmatpush1.msra.mxu0 0.0
      %5773 = vmatprep.subr.mxu0 0.0
      %5774 = vmatpush1.msra.mxu0 0.0
      %5775 = vmatprep.mubr.f32.mxu0 0.0
      %5776 = vmatmul.mubr.f32.gmra.mrb[0].mxu0 %v5616
      %v5777 = vpop.f32.mrb[0].mxu0
      %v5778 = vadd.f32 %v5613, %v5777
      %v5779 = vpop.f32.mrb[0].mxu0
      %5780 = vmatprep.mubr.f32.mxu0 0.0
      %5781 = vmatmul.mubr.f32.gmra.mrb[0].mxu0 %v5619
      %v5782 = vpop.f32.mrb[0].mxu0
      %v5783 = vadd.f32 %v5613, %v5782
      %v5784 = vpop.f32.mrb[0].mxu0
      %5785 = vmatprep.mubr.f32.mxu0 0.0
      %5786 = vmatmul.mubr.f32.gmra.mrb[0].mxu0 %v5622
      %v5787 = vpop.f32.mrb[0].mxu0
      %v5788 = vadd.f32 %v5613, %v5787
      %v5789 = vpop.f32.mrb[0].mxu0
      %5790 = vmatprep.mubr.f32.mxu0 0.0
      %5791 = vmatmul.mubr.f32.gmra.mrb[0].mxu0 %v5625
      %v5792 = vpop.f32.mrb[0].mxu0
      %v5793 = vadd.f32 %v5613, %v5792
      %v5794 = vpop.f32.mrb[0].mxu0
      %5795 = vmatprep.mubr.f32.mxu0 0.0
      %5796 = vmatmul.mubr.f32.gmra.mrb[0].mxu0 %v5628
      %v5797 = vpop.f32.mrb[0].mxu0
      %v5798 = vadd.f32 %v5613, %v5797
      %v5799 = vpop.f32.mrb[0].mxu0
      %5800 = vmatprep.mubr.f32.mxu0 0.0
      %5801 = vmatmul.mubr.f32.gmra.mrb[0].mxu0 %v5631
      %v5802 = vpop.f32.mrb[0].mxu0
      %v5803 = vadd.f32 %v5613, %v5802
      %v5804 = vpop.f32.mrb[0].mxu0
      %5805 = vmatprep.mubr.f32.mxu0 0.0
      %5806 = vmatmul.mubr.f32.gmra.mrb[0].mxu0 %v5634
      %v5807 = vpop.f32.mrb[0].mxu0
      %v5808 = vadd.f32 %v5613, %v5807
      %v5809 = vpop.f32.mrb[0].mxu0
      %5810 = vmatprep.mubr.f32.mxu0 0.0
      %5811 = vmatmul.mubr.f32.gmra.mrb[0].mxu0 %v5637
      %v5812 = vpop.f32.mrb[0].mxu0
      %v5813 = vadd.f32 %v5613, %v5812
      %v5814 = vpop.f32.mrb[0].mxu0
      %5815 = vmatprep.mubr.f32.mxu0 0.0
      %5816 = vmatmul.mubr.f32.gmra.mrb[0].mxu0 %v5640
      %v5817 = vpop.f32.mrb[0].mxu0
      %v5818 = vadd.f32 %v5613, %v5817
      %v5819 = vpop.f32.mrb[0].mxu0
      %5820 = vmatprep.mubr.f32.mxu0 0.0
      %5821 = vmatmul.mubr.f32.gmra.mrb[0].mxu0 %v5643
      %v5822 = vpop.f32.mrb[0].mxu0
      %v5823 = vadd.f32 %v5613, %v5822
      %v5824 = vpop.f32.mrb[0].mxu0
      %5825 = vmatprep.mubr.f32.mxu0 0.0
      %5826 = vmatmul.mubr.f32.gmra.mrb[0].mxu0 %v5646
      %v5827 = vpop.f32.mrb[0].mxu0
      %v5828 = vadd.f32 %v5613, %v5827
      %v5829 = vpop.f32.mrb[0].mxu0
      %5830 = vmatprep.mubr.f32.mxu0 0.0
      %5831 = vmatmul.mubr.f32.gmra.mrb[0].mxu0 %v5649
      %v5832 = vpop.f32.mrb[0].mxu0
      %v5833 = vadd.f32 %v5613, %v5832
      %v5834 = vpop.f32.mrb[0].mxu0
      %5835 = vmatprep.mubr.f32.mxu0 0.0
      %5836 = vmatmul.mubr.f32.gmra.mrb[0].mxu0 %v5652
      %v5837 = vpop.f32.mrb[0].mxu0
      %v5838 = vadd.f32 %v5613, %v5837
      %v5839 = vpop.f32.mrb[0].mxu0
      %5840 = vmatprep.mubr.f32.mxu0 0.0
      %5841 = vmatmul.mubr.f32.gmra.mrb[0].mxu0 %v5655
      %v5842 = vpop.f32.mrb[0].mxu0
      %v5843 = vadd.f32 %v5613, %v5842
      %v5844 = vpop.f32.mrb[0].mxu0
      %5845 = vmatprep.mubr.f32.mxu0 0.0
      %5846 = vmatmul.mubr.f32.gmra.mrb[0].mxu0 %v5658
      %v5847 = vpop.f32.mrb[0].mxu0
      %v5848 = vadd.f32 %v5613, %v5847
      %v5849 = vpop.f32.mrb[0].mxu0
      %5850 = vmatprep.mubr.f32.mxu0 0.0
      %5851 = vmatmul.mubr.f32.gmra.mrb[0].mxu0 %v5661
      %v5852 = vpop.f32.mrb[0].mxu0
      %v5853 = vadd.f32 %v5613, %v5852
      %v5854 = vpop.f32.mrb[0].mxu0
      %5855 = vmatprep.mubr.f32.mxu0 0.0
      %5856 = vmatmul.mubr.f32.gmra.mrb[0].mxu0 %v5664
      %v5857 = vpop.f32.mrb[0].mxu0
      %v5858 = vadd.f32 %v5613, %v5857
      %v5859 = vpop.f32.mrb[0].mxu0
      %5860 = vmatprep.mubr.f32.mxu0 0.0
      %5861 = vmatmul.mubr.f32.gmra.mrb[0].mxu0 %v5667
      %v5862 = vpop.f32.mrb[0].mxu0
      %v5863 = vadd.f32 %v5613, %v5862
      %v5864 = vpop.f32.mrb[0].mxu0
      %5865 = vmatprep.mubr.f32.mxu0 0.0
      %5866 = vmatmul.mubr.f32.gmra.mrb[0].mxu0 %v5670
      %v5867 = vpop.f32.mrb[0].mxu0
      %v5868 = vadd.f32 %v5613, %v5867
      %v5869 = vpop.f32.mrb[0].mxu0
      %5870 = vmatprep.mubr.f32.mxu0 0.0
      %5871 = vmatmul.mubr.f32.gmra.mrb[0].mxu0 %v5673
      %v5872 = vpop.f32.mrb[0].mxu0
      %v5873 = vadd.f32 %v5613, %v5872
      %v5874 = vpop.f32.mrb[0].mxu0
      %5875 = vmatprep.mubr.f32.mxu0 0.0
      %5876 = vmatmul.mubr.f32.gmra.mrb[0].mxu0 %v5676
      %v5877 = vpop.f32.mrb[0].mxu0
      %v5878 = vadd.f32 %v5613, %v5877
      %v5879 = vpop.f32.mrb[0].mxu0
      %5880 = vmatprep.mubr.f32.mxu0 0.0
      %5881 = vmatmul.mubr.f32.gmra.mrb[0].mxu0 %v5679
      %v5882 = vpop.f32.mrb[0].mxu0
      %v5883 = vadd.f32 %v5613, %v5882
      %v5884 = vpop.f32.mrb[0].mxu0
      %5885 = vmatprep.mubr.f32.mxu0 0.0
      %5886 = vmatmul.mubr.f32.gmra.mrb[0].mxu0 %v5682
      %v5887 = vpop.f32.mrb[0].mxu0
      %v5888 = vadd.f32 %v5613, %v5887
      %v5889 = vpop.f32.mrb[0].mxu0
      %5890 = vmatprep.mubr.f32.mxu0 0.0
      %5891 = vmatmul.mubr.f32.gmra.mrb[0].mxu0 %v5685
      %v5892 = vpop.f32.mrb[0].mxu0
      %v5893 = vadd.f32 %v5613, %v5892
      %v5894 = vpop.f32.mrb[0].mxu0
      %5895 = vmatprep.mubr.f32.mxu0 0.0
      %5896 = vmatmul.mubr.f32.gmra.mrb[0].mxu0 %v5688
      %v5897 = vpop.f32.mrb[0].mxu0
      %v5898 = vadd.f32 %v5613, %v5897
      %v5899 = vpop.f32.mrb[0].mxu0
      %5900 = vmatprep.mubr.f32.mxu0 0.0
      %5901 = vmatmul.mubr.f32.gmra.mrb[0].mxu0 %v5691
      %v5902 = vpop.f32.mrb[0].mxu0
      %v5903 = vadd.f32 %v5613, %v5902
      %v5904 = vpop.f32.mrb[0].mxu0
      %5905 = vmatprep.mubr.f32.mxu0 0.0
      %5906 = vmatmul.mubr.f32.gmra.mrb[0].mxu0 %v5694
      %v5907 = vpop.f32.mrb[0].mxu0
      %v5908 = vadd.f32 %v5613, %v5907
      %v5909 = vpop.f32.mrb[0].mxu0
      %5910 = vmatprep.mubr.f32.mxu0 0.0
      %5911 = vmatmul.mubr.f32.gmra.mrb[0].mxu0 %v5697
      %v5912 = vpop.f32.mrb[0].mxu0
      %v5913 = vadd.f32 %v5613, %v5912
      %v5914 = vpop.f32.mrb[0].mxu0
      %5915 = vmatprep.mubr.f32.mxu0 0.0
      %5916 = vmatmul.mubr.f32.gmra.mrb[0].mxu0 %v5700
      %v5917 = vpop.f32.mrb[0].mxu0
      %v5918 = vadd.f32 %v5613, %v5917
      %v5919 = vpop.f32.mrb[0].mxu0
      %5920 = vmatprep.mubr.f32.mxu0 0.0
      %5921 = vmatmul.mubr.f32.gmra.mrb[0].mxu0 %v5703
      %v5922 = vpop.f32.mrb[0].mxu0
      %v5923 = vadd.f32 %v5613, %v5922
      %v5924 = vpop.f32.mrb[0].mxu0
      %5925 = vmatprep.mubr.f32.mxu0 0.0
      %5926 = vmatmul.mubr.f32.gmra.mrb[0].mxu0 %v5706
      %v5927 = vpop.f32.mrb[0].mxu0
      %v5928 = vadd.f32 %v5613, %v5927
      %v5929 = vpop.f32.mrb[0].mxu0
      %5930 = vmatprep.mubr.f32.mxu0 0.0
      %5931 = vmatmul.mubr.f32.gmra.mrb[0].mxu0 %v5709
      %v5932 = vpop.f32.mrb[0].mxu0
      %v5933 = vadd.f32 %v5613, %v5932
      %v5934 = vpop.f32.mrb[0].mxu0
      %5935 = vdwg.mxu0
      %v5936 = vmul.f32 %v5778, %v969
      %v5937 = vmul.f32 %v5783, %v970
      %v5938 = vmul.f32 %v5788, %v971
      %v5939 = vmul.f32 %v5793, %v972
      %v5940 = vmul.f32 %v5798, %v973
      %v5941 = vmul.f32 %v5803, %v974
      %v5942 = vmul.f32 %v5808, %v975
      %v5943 = vmul.f32 %v5813, %v976
      %v5944 = vmul.f32 %v5818, %v977
      %v5945 = vmul.f32 %v5823, %v978
      %v5946 = vmul.f32 %v5828, %v979
      %v5947 = vmul.f32 %v5833, %v980
      %v5948 = vmul.f32 %v5838, %v981
      %v5949 = vmul.f32 %v5843, %v982
      %v5950 = vmul.f32 %v5848, %v983
      %v5951 = vmul.f32 %v5853, %v984
      %v5952 = vmul.f32 %v5858, %v985
      %v5953 = vmul.f32 %v5863, %v986
      %v5954 = vmul.f32 %v5868, %v987
      %v5955 = vmul.f32 %v5873, %v988
      %v5956 = vmul.f32 %v5878, %v989
      %v5957 = vmul.f32 %v5883, %v990
      %v5958 = vmul.f32 %v5888, %v991
      %v5959 = vmul.f32 %v5893, %v992
      %v5960 = vmul.f32 %v5898, %v993
      %v5961 = vmul.f32 %v5903, %v994
      %v5962 = vmul.f32 %v5908, %v995
      %v5963 = vmul.f32 %v5913, %v996
      %v5964 = vmul.f32 %v5918, %v997
      %v5965 = vmul.f32 %v5923, %v998
      %v5966 = vmul.f32 %v5928, %v999
      %v5967 = vmul.f32 %v5933, %v1000
      %6000 = vrot.lane.b32.xlu0 %v5778, 96
      %v6001 = vpop.permute.xlu0 %6000
      %6002 = vrot.lane.b32.xlu0 %v5783, 96
      %v6003 = vpop.permute.xlu0 %6002
      %6004 = vrot.lane.b32.xlu0 %v5788, 96
      %v6005 = vpop.permute.xlu0 %6004
      %6006 = vrot.lane.b32.xlu0 %v5793, 96
      %v6007 = vpop.permute.xlu0 %6006
      %6008 = vrot.lane.b32.xlu0 %v5798, 96
      %v6009 = vpop.permute.xlu0 %6008
      %6010 = vrot.lane.b32.xlu0 %v5803, 96
      %v6011 = vpop.permute.xlu0 %6010
      %6012 = vrot.lane.b32.xlu0 %v5808, 96
      %v6013 = vpop.permute.xlu0 %6012
      %6014 = vrot.lane.b32.xlu0 %v5813, 96
      %v6015 = vpop.permute.xlu0 %6014
      %6016 = vrot.lane.b32.xlu0 %v5818, 96
      %v6017 = vpop.permute.xlu0 %6016
      %6018 = vrot.lane.b32.xlu0 %v5823, 96
      %v6019 = vpop.permute.xlu0 %6018
      %6020 = vrot.lane.b32.xlu0 %v5828, 96
      %v6021 = vpop.permute.xlu0 %6020
      %6022 = vrot.lane.b32.xlu0 %v5833, 96
      %v6023 = vpop.permute.xlu0 %6022
      %6024 = vrot.lane.b32.xlu0 %v5838, 96
      %v6025 = vpop.permute.xlu0 %6024
      %6026 = vrot.lane.b32.xlu0 %v5843, 96
      %v6027 = vpop.permute.xlu0 %6026
      %6028 = vrot.lane.b32.xlu0 %v5848, 96
      %v6029 = vpop.permute.xlu0 %6028
      %6030 = vrot.lane.b32.xlu0 %v5853, 96
      %v6031 = vpop.permute.xlu0 %6030
      %6032 = vrot.lane.b32.xlu0 %v5858, 96
      %v6033 = vpop.permute.xlu0 %6032
      %6034 = vrot.lane.b32.xlu0 %v5863, 96
      %v6035 = vpop.permute.xlu0 %6034
      %6036 = vrot.lane.b32.xlu0 %v5868, 96
      %v6037 = vpop.permute.xlu0 %6036
      %6038 = vrot.lane.b32.xlu0 %v5873, 96
      %v6039 = vpop.permute.xlu0 %6038
      %6040 = vrot.lane.b32.xlu0 %v5878, 96
      %v6041 = vpop.permute.xlu0 %6040
      %6042 = vrot.lane.b32.xlu0 %v5883, 96
      %v6043 = vpop.permute.xlu0 %6042
      %6044 = vrot.lane.b32.xlu0 %v5888, 96
      %v6045 = vpop.permute.xlu0 %6044
      %6046 = vrot.lane.b32.xlu0 %v5893, 96
      %v6047 = vpop.permute.xlu0 %6046
      %6048 = vrot.lane.b32.xlu0 %v5898, 96
      %v6049 = vpop.permute.xlu0 %6048
      %6050 = vrot.lane.b32.xlu0 %v5903, 96
      %v6051 = vpop.permute.xlu0 %6050
      %6052 = vrot.lane.b32.xlu0 %v5908, 96
      %v6053 = vpop.permute.xlu0 %6052
      %6054 = vrot.lane.b32.xlu0 %v5913, 96
      %v6055 = vpop.permute.xlu0 %6054
      %6056 = vrot.lane.b32.xlu0 %v5918, 96
      %v6057 = vpop.permute.xlu0 %6056
      %6058 = vrot.lane.b32.xlu0 %v5923, 96
      %v6059 = vpop.permute.xlu0 %6058
      %6060 = vrot.lane.b32.xlu0 %v5928, 96
      %v6061 = vpop.permute.xlu0 %6060
      %6062 = vrot.lane.b32.xlu0 %v5933, 96
      %v6063 = vpop.permute.xlu0 %6062
      %v6096 = vadd.f32 %v5936, %v6001
      %v6097 = vadd.f32 %v5937, %v6003
      %v6098 = vadd.f32 %v5938, %v6005
      %v6099 = vadd.f32 %v5939, %v6007
      %v6100 = vadd.f32 %v5940, %v6009
      %v6101 = vadd.f32 %v5941, %v6011
      %v6102 = vadd.f32 %v5942, %v6013
      %v6103 = vadd.f32 %v5943, %v6015
      %v6104 = vadd.f32 %v5944, %v6017
      %v6105 = vadd.f32 %v5945, %v6019
      %v6106 = vadd.f32 %v5946, %v6021
      %v6107 = vadd.f32 %v5947, %v6023
      %v6108 = vadd.f32 %v5948, %v6025
      %v6109 = vadd.f32 %v5949, %v6027
      %v6110 = vadd.f32 %v5950, %v6029
      %v6111 = vadd.f32 %v5951, %v6031
      %v6112 = vadd.f32 %v5952, %v6033
      %v6113 = vadd.f32 %v5953, %v6035
      %v6114 = vadd.f32 %v5954, %v6037
      %v6115 = vadd.f32 %v5955, %v6039
      %v6116 = vadd.f32 %v5956, %v6041
      %v6117 = vadd.f32 %v5957, %v6043
      %v6118 = vadd.f32 %v5958, %v6045
      %v6119 = vadd.f32 %v5959, %v6047
      %v6120 = vadd.f32 %v5960, %v6049
      %v6121 = vadd.f32 %v5961, %v6051
      %v6122 = vadd.f32 %v5962, %v6053
      %v6123 = vadd.f32 %v5963, %v6055
      %v6124 = vadd.f32 %v5964, %v6057
      %v6125 = vadd.f32 %v5965, %v6059
      %v6126 = vadd.f32 %v5966, %v6061
      %v6127 = vadd.f32 %v5967, %v6063
      %6160 = vrot.lane.b32.xlu0 %v6096, 64
      %v6161 = vpop.permute.xlu0 %6160
      %6162 = vrot.lane.b32.xlu0 %v6097, 64
      %v6163 = vpop.permute.xlu0 %6162
      %6164 = vrot.lane.b32.xlu0 %v6098, 64
      %v6165 = vpop.permute.xlu0 %6164
      %6166 = vrot.lane.b32.xlu0 %v6099, 64
      %v6167 = vpop.permute.xlu0 %6166
      %6168 = vrot.lane.b32.xlu0 %v6100, 64
      %v6169 = vpop.permute.xlu0 %6168
      %6170 = vrot.lane.b32.xlu0 %v6101, 64
      %v6171 = vpop.permute.xlu0 %6170
      %6172 = vrot.lane.b32.xlu0 %v6102, 64
      %v6173 = vpop.permute.xlu0 %6172
      %6174 = vrot.lane.b32.xlu0 %v6103, 64
      %v6175 = vpop.permute.xlu0 %6174
      %6176 = vrot.lane.b32.xlu0 %v6104, 64
      %v6177 = vpop.permute.xlu0 %6176
      %6178 = vrot.lane.b32.xlu0 %v6105, 64
      %v6179 = vpop.permute.xlu0 %6178
      %6180 = vrot.lane.b32.xlu0 %v6106, 64
      %v6181 = vpop.permute.xlu0 %6180
      %6182 = vrot.lane.b32.xlu0 %v6107, 64
      %v6183 = vpop.permute.xlu0 %6182
      %6184 = vrot.lane.b32.xlu0 %v6108, 64
      %v6185 = vpop.permute.xlu0 %6184
      %6186 = vrot.lane.b32.xlu0 %v6109, 64
      %v6187 = vpop.permute.xlu0 %6186
      %6188 = vrot.lane.b32.xlu0 %v6110, 64
      %v6189 = vpop.permute.xlu0 %6188
      %6190 = vrot.lane.b32.xlu0 %v6111, 64
      %v6191 = vpop.permute.xlu0 %6190
      %6192 = vrot.lane.b32.xlu0 %v6112, 64
      %v6193 = vpop.permute.xlu0 %6192
      %6194 = vrot.lane.b32.xlu0 %v6113, 64
      %v6195 = vpop.permute.xlu0 %6194
      %6196 = vrot.lane.b32.xlu0 %v6114, 64
      %v6197 = vpop.permute.xlu0 %6196
      %6198 = vrot.lane.b32.xlu0 %v6115, 64
      %v6199 = vpop.permute.xlu0 %6198
      %6200 = vrot.lane.b32.xlu0 %v6116, 64
      %v6201 = vpop.permute.xlu0 %6200
      %6202 = vrot.lane.b32.xlu0 %v6117, 64
      %v6203 = vpop.permute.xlu0 %6202
      %6204 = vrot.lane.b32.xlu0 %v6118, 64
      %v6205 = vpop.permute.xlu0 %6204
      %6206 = vrot.lane.b32.xlu0 %v6119, 64
      %v6207 = vpop.permute.xlu0 %6206
      %6208 = vrot.lane.b32.xlu0 %v6120, 64
      %v6209 = vpop.permute.xlu0 %6208
      %6210 = vrot.lane.b32.xlu0 %v6121, 64
      %v6211 = vpop.permute.xlu0 %6210
      %6212 = vrot.lane.b32.xlu0 %v6122, 64
      %v6213 = vpop.permute.xlu0 %6212
      %6214 = vrot.lane.b32.xlu0 %v6123, 64
      %v6215 = vpop.permute.xlu0 %6214
      %6216 = vrot.lane.b32.xlu0 %v6124, 64
      %v6217 = vpop.permute.xlu0 %6216
      %6218 = vrot.lane.b32.xlu0 %v6125, 64
      %v6219 = vpop.permute.xlu0 %6218
      %6220 = vrot.lane.b32.xlu0 %v6126, 64
      %v6221 = vpop.permute.xlu0 %6220
      %6222 = vrot.lane.b32.xlu0 %v6127, 64
      %v6223 = vpop.permute.xlu0 %6222
      %v6256 = vmul.f32 %v5778, %v6161
      %v6257 = vmul.f32 %v5783, %v6163
      %v6258 = vmul.f32 %v5788, %v6165
      %v6259 = vmul.f32 %v5793, %v6167
      %v6260 = vmul.f32 %v5798, %v6169
      %v6261 = vmul.f32 %v5803, %v6171
      %v6262 = vmul.f32 %v5808, %v6173
      %v6263 = vmul.f32 %v5813, %v6175
      %v6264 = vmul.f32 %v5818, %v6177
      %v6265 = vmul.f32 %v5823, %v6179
      %v6266 = vmul.f32 %v5828, %v6181
      %v6267 = vmul.f32 %v5833, %v6183
      %v6268 = vmul.f32 %v5838, %v6185
      %v6269 = vmul.f32 %v5843, %v6187
      %v6270 = vmul.f32 %v5848, %v6189
      %v6271 = vmul.f32 %v5853, %v6191
      %v6272 = vmul.f32 %v5858, %v6193
      %v6273 = vmul.f32 %v5863, %v6195
      %v6274 = vmul.f32 %v5868, %v6197
      %v6275 = vmul.f32 %v5873, %v6199
      %v6276 = vmul.f32 %v5878, %v6201
      %v6277 = vmul.f32 %v5883, %v6203
      %v6278 = vmul.f32 %v5888, %v6205
      %v6279 = vmul.f32 %v5893, %v6207
      %v6280 = vmul.f32 %v5898, %v6209
      %v6281 = vmul.f32 %v5903, %v6211
      %v6282 = vmul.f32 %v5908, %v6213
      %v6283 = vmul.f32 %v5913, %v6215
      %v6284 = vmul.f32 %v5918, %v6217
      %v6285 = vmul.f32 %v5923, %v6219
      %v6286 = vmul.f32 %v5928, %v6221
      %v6287 = vmul.f32 %v5933, %v6223
      %v6288 = vadd.f32 %v6256, %v6001
      %v6289 = vadd.f32 %v6257, %v6003
      %v6290 = vadd.f32 %v6258, %v6005
      %v6291 = vadd.f32 %v6259, %v6007
      %v6292 = vadd.f32 %v6260, %v6009
      %v6293 = vadd.f32 %v6261, %v6011
      %v6294 = vadd.f32 %v6262, %v6013
      %v6295 = vadd.f32 %v6263, %v6015
      %v6296 = vadd.f32 %v6264, %v6017
      %v6297 = vadd.f32 %v6265, %v6019
      %v6298 = vadd.f32 %v6266, %v6021
      %v6299 = vadd.f32 %v6267, %v6023
      %v6300 = vadd.f32 %v6268, %v6025
      %v6301 = vadd.f32 %v6269, %v6027
      %v6302 = vadd.f32 %v6270, %v6029
      %v6303 = vadd.f32 %v6271, %v6031
      %v6304 = vadd.f32 %v6272, %v6033
      %v6305 = vadd.f32 %v6273, %v6035
      %v6306 = vadd.f32 %v6274, %v6037
      %v6307 = vadd.f32 %v6275, %v6039
      %v6308 = vadd.f32 %v6276, %v6041
      %v6309 = vadd.f32 %v6277, %v6043
      %v6310 = vadd.f32 %v6278, %v6045
      %v6311 = vadd.f32 %v6279, %v6047
      %v6312 = vadd.f32 %v6280, %v6049
      %v6313 = vadd.f32 %v6281, %v6051
      %v6314 = vadd.f32 %v6282, %v6053
      %v6315 = vadd.f32 %v6283, %v6055
      %v6316 = vadd.f32 %v6284, %v6057
      %v6317 = vadd.f32 %v6285, %v6059
      %v6318 = vadd.f32 %v6286, %v6061
      %v6319 = vadd.f32 %v6287, %v6063
      %6352 = vrot.lane.b32.xlu0 %v6288, 64
      %v6353 = vpop.permute.xlu0 %6352
      %6354 = vrot.lane.b32.xlu0 %v6289, 64
      %v6355 = vpop.permute.xlu0 %6354
      %6356 = vrot.lane.b32.xlu0 %v6290, 64
      %v6357 = vpop.permute.xlu0 %6356
      %6358 = vrot.lane.b32.xlu0 %v6291, 64
      %v6359 = vpop.permute.xlu0 %6358
      %6360 = vrot.lane.b32.xlu0 %v6292, 64
      %v6361 = vpop.permute.xlu0 %6360
      %6362 = vrot.lane.b32.xlu0 %v6293, 64
      %v6363 = vpop.permute.xlu0 %6362
      %6364 = vrot.lane.b32.xlu0 %v6294, 64
      %v6365 = vpop.permute.xlu0 %6364
      %6366 = vrot.lane.b32.xlu0 %v6295, 64
      %v6367 = vpop.permute.xlu0 %6366
      %6368 = vrot.lane.b32.xlu0 %v6296, 64
      %v6369 = vpop.permute.xlu0 %6368
      %6370 = vrot.lane.b32.xlu0 %v6297, 64
      %v6371 = vpop.permute.xlu0 %6370
      %6372 = vrot.lane.b32.xlu0 %v6298, 64
      %v6373 = vpop.permute.xlu0 %6372
      %6374 = vrot.lane.b32.xlu0 %v6299, 64
      %v6375 = vpop.permute.xlu0 %6374
      %6376 = vrot.lane.b32.xlu0 %v6300, 64
      %v6377 = vpop.permute.xlu0 %6376
      %6378 = vrot.lane.b32.xlu0 %v6301, 64
      %v6379 = vpop.permute.xlu0 %6378
      %6380 = vrot.lane.b32.xlu0 %v6302, 64
      %v6381 = vpop.permute.xlu0 %6380
      %6382 = vrot.lane.b32.xlu0 %v6303, 64
      %v6383 = vpop.permute.xlu0 %6382
      %6384 = vrot.lane.b32.xlu0 %v6304, 64
      %v6385 = vpop.permute.xlu0 %6384
      %6386 = vrot.lane.b32.xlu0 %v6305, 64
      %v6387 = vpop.permute.xlu0 %6386
      %6388 = vrot.lane.b32.xlu0 %v6306, 64
      %v6389 = vpop.permute.xlu0 %6388
      %6390 = vrot.lane.b32.xlu0 %v6307, 64
      %v6391 = vpop.permute.xlu0 %6390
      %6392 = vrot.lane.b32.xlu0 %v6308, 64
      %v6393 = vpop.permute.xlu0 %6392
      %6394 = vrot.lane.b32.xlu0 %v6309, 64
      %v6395 = vpop.permute.xlu0 %6394
      %6396 = vrot.lane.b32.xlu0 %v6310, 64
      %v6397 = vpop.permute.xlu0 %6396
      %6398 = vrot.lane.b32.xlu0 %v6311, 64
      %v6399 = vpop.permute.xlu0 %6398
      %6400 = vrot.lane.b32.xlu0 %v6312, 64
      %v6401 = vpop.permute.xlu0 %6400
      %6402 = vrot.lane.b32.xlu0 %v6313, 64
      %v6403 = vpop.permute.xlu0 %6402
      %6404 = vrot.lane.b32.xlu0 %v6314, 64
      %v6405 = vpop.permute.xlu0 %6404
      %6406 = vrot.lane.b32.xlu0 %v6315, 64
      %v6407 = vpop.permute.xlu0 %6406
      %6408 = vrot.lane.b32.xlu0 %v6316, 64
      %v6409 = vpop.permute.xlu0 %6408
      %6410 = vrot.lane.b32.xlu0 %v6317, 64
      %v6411 = vpop.permute.xlu0 %6410
      %6412 = vrot.lane.b32.xlu0 %v6318, 64
      %v6413 = vpop.permute.xlu0 %6412
      %6414 = vrot.lane.b32.xlu0 %v6319, 64
      %v6415 = vpop.permute.xlu0 %6414
      %v6448 = vsub.f32 %v453, %v6353
      %v6449 = vsub.f32 %v454, %v6355
      %v6450 = vsub.f32 %v455, %v6357
      %v6451 = vsub.f32 %v456, %v6359
      %v6452 = vsub.f32 %v457, %v6361
      %v6453 = vsub.f32 %v458, %v6363
      %v6454 = vsub.f32 %v459, %v6365
      %v6455 = vsub.f32 %v460, %v6367
      %v6456 = vsub.f32 %v461, %v6369
      %v6457 = vsub.f32 %v462, %v6371
      %v6458 = vsub.f32 %v463, %v6373
      %v6459 = vsub.f32 %v464, %v6375
      %v6460 = vsub.f32 %v465, %v6377
      %v6461 = vsub.f32 %v466, %v6379
      %v6462 = vsub.f32 %v467, %v6381
      %v6463 = vsub.f32 %v468, %v6383
      %v6464 = vsub.f32 %v469, %v6385
      %v6465 = vsub.f32 %v470, %v6387
      %v6466 = vsub.f32 %v471, %v6389
      %v6467 = vsub.f32 %v472, %v6391
      %v6468 = vsub.f32 %v473, %v6393
      %v6469 = vsub.f32 %v474, %v6395
      %v6470 = vsub.f32 %v475, %v6397
      %v6471 = vsub.f32 %v476, %v6399
      %v6472 = vsub.f32 %v477, %v6401
      %v6473 = vsub.f32 %v478, %v6403
      %v6474 = vsub.f32 %v479, %v6405
      %v6475 = vsub.f32 %v480, %v6407
      %v6476 = vsub.f32 %v481, %v6409
      %v6477 = vsub.f32 %v482, %v6411
      %v6478 = vsub.f32 %v483, %v6413
      %v6479 = vsub.f32 %v484, %v6415
      %v6480 = vand.u32 2147483647, %v6448
      %v6481 = vand.u32 2147483647, %v6449
      %v6482 = vand.u32 2147483647, %v6450
      %v6483 = vand.u32 2147483647, %v6451
      %v6484 = vand.u32 2147483647, %v6452
      %v6485 = vand.u32 2147483647, %v6453
      %v6486 = vand.u32 2147483647, %v6454
      %v6487 = vand.u32 2147483647, %v6455
      %v6488 = vand.u32 2147483647, %v6456
      %v6489 = vand.u32 2147483647, %v6457
      %v6490 = vand.u32 2147483647, %v6458
      %v6491 = vand.u32 2147483647, %v6459
      %v6492 = vand.u32 2147483647, %v6460
      %v6493 = vand.u32 2147483647, %v6461
      %v6494 = vand.u32 2147483647, %v6462
      %v6495 = vand.u32 2147483647, %v6463
      %v6496 = vand.u32 2147483647, %v6464
      %v6497 = vand.u32 2147483647, %v6465
      %v6498 = vand.u32 2147483647, %v6466
      %v6499 = vand.u32 2147483647, %v6467
      %v6500 = vand.u32 2147483647, %v6468
      %v6501 = vand.u32 2147483647, %v6469
      %v6502 = vand.u32 2147483647, %v6470
      %v6503 = vand.u32 2147483647, %v6471
      %v6504 = vand.u32 2147483647, %v6472
      %v6505 = vand.u32 2147483647, %v6473
      %v6506 = vand.u32 2147483647, %v6474
      %v6507 = vand.u32 2147483647, %v6475
      %v6508 = vand.u32 2147483647, %v6476
      %v6509 = vand.u32 2147483647, %v6477
      %v6510 = vand.u32 2147483647, %v6478
      %v6511 = vand.u32 2147483647, %v6479
      %v6512 = vsel %vm4573, %v6480, 0.0
      %v6513 = vsel %vm4573, %v6481, 0.0
      %v6514 = vadd.f32 %v6512, %v6513
      %v6515 = vsel %vm4573, %v6482, 0.0
      %v6516 = vadd.f32 %v6514, %v6515
      %v6517 = vsel %vm4573, %v6483, 0.0
      %v6518 = vadd.f32 %v6516, %v6517
      %v6519 = vsel %vm4573, %v6484, 0.0
      %v6520 = vadd.f32 %v6518, %v6519
      %v6521 = vsel %vm4573, %v6485, 0.0
      %v6522 = vadd.f32 %v6520, %v6521
      %v6523 = vsel %vm4573, %v6486, 0.0
      %v6524 = vadd.f32 %v6522, %v6523
      %v6525 = vsel %vm4573, %v6487, 0.0
      %v6526 = vadd.f32 %v6524, %v6525
      %v6527 = vsel %vm4573, %v6488, 0.0
      %v6528 = vadd.f32 %v6526, %v6527
      %v6529 = vsel %vm4573, %v6489, 0.0
      %v6530 = vadd.f32 %v6528, %v6529
      %v6531 = vsel %vm4573, %v6490, 0.0
      %v6532 = vadd.f32 %v6530, %v6531
      %v6533 = vsel %vm4573, %v6491, 0.0
      %v6534 = vadd.f32 %v6532, %v6533
      %v6535 = vsel %vm4573, %v6492, 0.0
      %v6536 = vadd.f32 %v6534, %v6535
      %v6537 = vsel %vm4573, %v6493, 0.0
      %v6538 = vadd.f32 %v6536, %v6537
      %v6539 = vsel %vm4573, %v6494, 0.0
      %v6540 = vadd.f32 %v6538, %v6539
      %v6541 = vsel %vm4573, %v6495, 0.0
      %v6542 = vadd.f32 %v6540, %v6541
      %v6543 = vsel %vm4573, %v6496, 0.0
      %v6544 = vadd.f32 %v6542, %v6543
      %v6545 = vsel %vm4573, %v6497, 0.0
      %v6546 = vadd.f32 %v6544, %v6545
      %v6547 = vsel %vm4573, %v6498, 0.0
      %v6548 = vadd.f32 %v6546, %v6547
      %v6549 = vsel %vm4573, %v6499, 0.0
      %v6550 = vadd.f32 %v6548, %v6549
      %v6551 = vsel %vm4573, %v6500, 0.0
      %v6552 = vadd.f32 %v6550, %v6551
      %v6553 = vsel %vm4573, %v6501, 0.0
      %v6554 = vadd.f32 %v6552, %v6553
      %v6555 = vsel %vm4573, %v6502, 0.0
      %v6556 = vadd.f32 %v6554, %v6555
      %v6557 = vsel %vm4573, %v6503, 0.0
      %v6558 = vadd.f32 %v6556, %v6557
      %v6559 = vsel %vm4573, %v6504, 0.0
      %v6560 = vadd.f32 %v6558, %v6559
      %v6561 = vsel %vm4573, %v6505, 0.0
      %v6562 = vadd.f32 %v6560, %v6561
      %v6563 = vsel %vm4573, %v6506, 0.0
      %v6564 = vadd.f32 %v6562, %v6563
      %v6565 = vsel %vm4573, %v6507, 0.0
      %v6566 = vadd.f32 %v6564, %v6565
      %v6567 = vsel %vm4573, %v6508, 0.0
      %v6568 = vadd.f32 %v6566, %v6567
      %v6569 = vsel %vm4573, %v6509, 0.0
      %v6570 = vadd.f32 %v6568, %v6569
      %v6571 = vsel %vm4573, %v6510, 0.0
      %v6572 = vadd.f32 %v6570, %v6571
      %v6573 = vsel %vm4573, %v6511, 0.0
      %v6574 = vadd.f32 %v6572, %v6573
      %6575 = vadd.xlane.f32.xlu0 %v6574
      %v6576 = vpop.xlane.xlu0 %6575
      %v6577 = vrot.slane %v6576, 4
      %v6578 = vadd.f32 %v6576, %v6577
      %v6579 = vrot.slane %v6578, 2
      %v6580 = vadd.f32 %v6578, %v6579
      %v6581 = vrot.slane %v6580, 1
      %v6582 = vadd.f32 %v6580, %v6581
      %s6583 = vtos %v6582
      %v6584 = vrcp.pop 8192.0
      %s6585 = vtos %v6584
      %s6586 = smul.f32 %s6583, %s6585
      %v6587 = vstv %s6586
      %6588 = vst [vmem:[%s420] sm:$0xff] %v6587
      %p6589 = scmp.lt.s32.totalorder %s20, 1
      %s6590 = scalar_select %p6589, %s20, 1
      %s6591 = smul.addr %s6590, 8
      %s6592 = scalar_lea.vmem %s9, %s6591
      // Predicated region
      $region57: #{diffusion_forward_pallas.1} parent=55 // pred_check
        %p6593 = pneg %p252
      $region58: #{diffusion_forward_pallas.1} parent=55 // pred_check_branch
        %6595 = sbr.rel (%p6593) target = $region60
      $region59: #{diffusion_forward_pallas.1} parent=55 // pred_region
        _
      $region60: #{diffusion_forward_pallas.1} parent=55 // pred_fallthru
        _
    $region56: #{diffusion_forward_pallas.1} parent=5 // pred_fallthru
      _
    %p6596 = scmp.le.s32.totalorder 2, %s15
    // Predicated region
    $region61: #{diffusion_forward_pallas.1} parent=5 // pred_check
      %p6597 = pneg %p6596
    $region62: #{diffusion_forward_pallas.1} parent=5 // pred_check_branch
      %6599 = sbr.rel (%p6597) target = $region64
    $region63: #{diffusion_forward_pallas.1} parent=5 // pred_region
      %s6600 = ssub.s32 %s15, 2
      // Predicated region
      $region65: #{diffusion_forward_pallas.1} parent=63 // pred_check
        %p6601 = pneg %p258
      $region66: #{diffusion_forward_pallas.1} parent=63 // pred_check_branch
        %6603 = sbr.rel (%p6601) target = $region68
      $region67: #{diffusion_forward_pallas.1} parent=63 // pred_region
        %p6604 = scmp.lt.s32.totalorder %s21, 1
        %s6605 = scalar_select %p6604, %s21, 1
        %s6606 = smul.addr %s6605, 8
        %s6607 = scalar_lea.vmem %s9, %s6606
      $region68: #{diffusion_forward_pallas.1} parent=63 // pred_fallthru
        _
    $region64: #{diffusion_forward_pallas.1} parent=5 // pred_fallthru
      _
  $region6: #{diffusion_forward_pallas.1} parent=0 // loop_footer
    %s19 = sadd.s32 1, %s15
  $region7: #{diffusion_forward_pallas.1} parent=0 // loop_footer_branch
    %14 = sbr.rel target = $region3
  $region8: #{diffusion_forward_pallas.1} parent=0 // loop_exit
    _

</llo_original>
